<compile_context>
chip_gen: v7x
topology: tpu7x:2x2x1
jax: 0.10.0
libtpu: 0.0.40
codegen_flags: <defaults>
</compile_context>

<pallas_src>
import functools

import jax
import jax.numpy as jnp
from jax import lax
from jax.experimental import pallas as pl
from jax.experimental.pallas import tpu as pltpu


def _round_up(x, m):
    return (x + m - 1) // m * m


# ----------------------------------------------------------------------------
# Pallas kernel: nb (batch, block) tiles of KPA attention per grid step.
# ----------------------------------------------------------------------------
def _kpa_block_kernel(qa_ref, ka_ref, vt_ref, ks_ref, out_ref, *, nb, c_out):
    # qa_ref : (nb, C+1, S2p) bf16  scale*W_q-projected query; row C is 99*m_blk
    # ka_ref : (nb, C+1, K2p) bf16  W_k-projected neighborhood; row C is m_nbr
    # vt_ref : (nb, C+1, K2p) bf16  W_v-projected neighborhood; row C is ones
    #                               over the K2 valid neighbors (0 in padding)
    # ks_ref : (S2p, K2p)     f32   multiplicative ker_S (1.0 in padded region)
    # out_ref: (nb, C, S2p)   f32
    #
    # Fully unrolled static loop over the nb blocks of this grid step (gives
    # the scheduler visibility to overlap block i+1's matmul pushes with block
    # i's softmax / store epilogue).
    for i in range(nb):
        qa = qa_ref[i]                                              # [Ca, S2p]
        ka = ka_ref[i]                                              # [Ca, K2p]

        # attn[s, k] = sum_c qa[c, s] * ka[c, k]
        #            = scale*(q . k) + 99 * m_blk[s] * m_nbr[k]   (bf16 in, f32 acc)
        attn = lax.dot_general(qa, ka, (((0,), (0,)), ((), ())),
                               preferred_element_type=jnp.float32)  # [S2p, K2p]

        # ker_S * (attn - 99) == ker_S * (scale*q.k + 99*(m_blk*m_nbr - 1)),
        # i.e. exactly the module's ker_S * (attn + am).  Padded K2p columns
        # have attn == 0 and ker_S == 1, so their logit is -99 (negligible
        # weight) and they are excluded from numerator/denominator anyway.
        logits = ks_ref[...] * (attn - 99.0)

        m = jnp.max(logits, axis=1, keepdims=True)
        p = jnp.exp(logits - m).astype(jnp.bfloat16)                # [S2p, K2p]

        # Unnormalized PV matmul; row c_out of vt is all-ones over the valid
        # K2 neighbors, so row c_out of pv is the softmax denominator.
        pv = lax.dot_general(vt_ref[i], p, (((1,), (1,)), ((), ())),
                             preferred_element_type=jnp.float32)    # [C+1, S2p]

        inv = pl.reciprocal(pv[c_out:c_out + 1, :], approx=True)    # [1, S2p]
        out_ref[i] = (pv[:c_out, :] * inv).astype(out_ref.dtype)


def kpa_block_attention(qa, ka, vt, ker_s, *, nb):
    BNp, Ca, S2p = qa.shape
    _, Cv, K2p = vt.shape
    c_out = Cv - 1
    assert BNp % nb == 0
    kernel = functools.partial(_kpa_block_kernel, nb=nb, c_out=c_out)
    return pl.pallas_call(
        kernel,
        out_shape=jax.ShapeDtypeStruct((BNp, c_out, S2p), jnp.float32),
        grid_spec=pltpu.PrefetchScalarGridSpec(
            num_scalar_prefetch=0,
            grid=(BNp // nb,),
            in_specs=[
                pl.BlockSpec((nb, Ca, S2p), lambda g: (g, 0, 0)),
                pl.BlockSpec((nb, Ca, K2p), lambda g: (g, 0, 0)),
                pl.BlockSpec((nb, Cv, K2p), lambda g: (g, 0, 0)),
                # resident constant table: constant index_map -> DMA'd once,
                # never re-fetched across grid steps.
                pl.BlockSpec((S2p, K2p), lambda g: (0, 0)),
            ],
            out_specs=pl.BlockSpec((nb, c_out, S2p), lambda g: (g, 0, 0)),
        ),
        compiler_params=pltpu.CompilerParams(
            dimension_semantics=("parallel",),
            # working set ~10 MiB; stay well under v7x's 64 MiB physical VMEM.
            vmem_limit_bytes=32 * 1024 * 1024,
        ),
    )(qa, ka, vt, ker_s)


# Pure-JAX reference for the same block attention (verification only): same
# math as the kernel but in f32 HIGHEST precision with exact division.
def kpa_block_attention_ref(qa, ka, vt, ker_s, *, nb):
    del nb
    hp = lax.Precision.HIGHEST
    qa32, ka32, vt32 = (x.astype(jnp.float32) for x in (qa, ka, vt))
    attn = jnp.einsum('ncs,nck->nsk', qa32, ka32, precision=hp)
    logits = ker_s[None] * (attn - 99.0)
    p = jnp.exp(logits - jnp.max(logits, axis=-1, keepdims=True))
    num = jnp.einsum('nck,nsk->ncs', vt32[:, :-1], p, precision=hp)
    den = jnp.einsum('nk,nsk->ns', vt32[:, -1], p, precision=hp)
    return num / den[:, None, :]


# ----------------------------------------------------------------------------
# Glue: padding, blockify, unfold-equivalent neighborhood gather, _FS kernel.
# ----------------------------------------------------------------------------
def _blockify_cf(x, sc, h_sc, w_sc):
    # [b, H, W, c] -> [b, N, c, sc*sc]; s = (row-in-block)*sc + (col-in-block)
    b, H, W, c = x.shape
    x = x.reshape(b, h_sc, sc, w_sc, sc, c).transpose(0, 1, 3, 5, 2, 4)
    return x.reshape(b, h_sc * w_sc, c, sc * sc)


def _neighborhood_cf(x, sc, h_sc, w_sc):
    # [b, H, W, c] -> [b, N, c, (3sc)^2]; matches nn.Unfold(3*sc, pad=sc,
    # stride=sc) with k-index ky*3sc + kx (ky major).
    b, H, W, c = x.shape
    xp = jnp.pad(x, ((0, 0), (sc, sc), (sc, sc), (0, 0)))
    rows = []
    for dy in range(3):
        cols = []
        for dx in range(3):
            sl = xp[:, dy * sc:dy * sc + H, dx * sc:dx * sc + W, :]
            blk = sl.reshape(b, h_sc, sc, w_sc, sc, c).transpose(0, 1, 3, 2, 4, 5)
            cols.append(blk)                    # [b, hb, wb, ry, rx, c]
        rows.append(jnp.stack(cols, axis=4))    # [b, hb, wb, ry, dx, rx, c]
    nbr = jnp.stack(rows, axis=3)               # [b, hb, wb, dy, ry, dx, rx, c]
    nbr = nbr.transpose(0, 1, 2, 7, 3, 4, 5, 6) # [b, hb, wb, c, dy, ry, dx, rx]
    return nbr.reshape(b, h_sc * w_sc, c, (3 * sc) ** 2)


def _ker_s_transposed(sc, w_prelu, scp=0.02, bias=1.0):
    # _FS kernel.  Depends only on (ky, kx, row-in-block, col-in-block), i.e.
    # identical for every batch and every block -> one [S2, K2] table.
    K = 3 * sc
    a = w_prelu * scp
    crd = jnp.arange(K, dtype=jnp.float32)
    off = jnp.arange(sc, dtype=jnp.float32)
    z = jnp.abs(crd[:, None] - (sc + off[None, :])) - 2.0 * sc       # [K, sc]
    o = -jnp.where(z > 0, z, a * z) + bias                           # -prelu(.) + b
    o = jnp.where(o < 0, 0.0, o)                                     # clamp negatives
    ot = o.T                                                         # [sc, K]
    # ker[(sr, scol), (ky, kx)] = o[ky, sr] * o[kx, scol]
    ker = ot[:, None, :, None] * ot[None, :, None, :]                # [sr, scol, ky, kx]
    return ker.reshape(sc * sc, K * K)


def kpa_forward(feat_ci, feat_mi, params, *, sc, itr=0, nb=4,
                attention_fn=kpa_block_attention):
    del itr  # always the itr == 0 (recompute) path; see TODO at top of file.
    B, C, H_in, W_in = feat_ci.shape
    x_pad = sc - W_in % sc
    y_pad = sc - H_in % sc
    H, W = H_in + y_pad, W_in + x_pad
    h_sc, w_sc = H // sc, W // sc
    N = h_sc * w_sc
    S2, K2 = sc * sc, (3 * sc) ** 2
    S2p, K2p = _round_up(S2, 128), _round_up(K2, 128)

    fm = jnp.transpose(feat_mi, (0, 2, 3, 1))                        # NHWC
    fc_p = jnp.pad(jnp.transpose(feat_ci, (0, 2, 3, 1)),
                   ((0, 0), (0, y_pad), (0, x_pad), (0, 0)))
    fm_p = jnp.pad(fm, ((0, 0), (0, y_pad), (0, x_pad), (0, 0)))

    # hoisted 1x1-conv projections (once per pixel, before the ~9x duplicating
    # neighborhood gather); scale folded into W_q; stored bf16 so the gather
    # writes bf16 and the kernel's MXU operands are already bf16.
    scale = float(C) ** (-0.5)
    mask = jnp.pad(jnp.ones((1, H_in, W_in, 1), jnp.float32),
                   ((0, 0), (0, y_pad), (0, x_pad), (0, 0)))
    mask = jnp.broadcast_to(mask, (B, H, W, 1))
    q_img = jnp.einsum('bhwc,cd->bhwd', fc_p, params["wq"] * scale)
    k_img = jnp.einsum('bhwc,cd->bhwd', fc_p, params["wk"])
    v_img = jnp.einsum('bhwc,cd->bhwd', fm_p, params["wv"])
    # rank-1 padding-mask factors ride along as one extra q/k channel so the
    # q@k matmul produces 99*m_blk*m_nbr; exact in bf16 (values 0/1/99).
    q_aug = jnp.concatenate([q_img, 99.0 * mask], axis=-1).astype(jnp.bfloat16)
    k_aug = jnp.concatenate([k_img, mask], axis=-1).astype(jnp.bfloat16)
    v_img = v_img.astype(jnp.bfloat16)

    # channel-first per-block tiles (pixels on lanes); vt gets an extra
    # all-ones row so the softmax denominator falls out of the PV matmul.
    qa = _blockify_cf(q_aug, sc, h_sc, w_sc)                         # [B,N,C+1,S2]
    ka = _neighborhood_cf(k_aug, sc, h_sc, w_sc)                     # [B,N,C+1,K2]
    vt = _neighborhood_cf(v_img, sc, h_sc, w_sc)                     # [B,N,C,K2]
    vt = jnp.concatenate([vt, jnp.ones((B, N, 1, K2), jnp.bfloat16)], axis=2)

    # pad pixel axes to full 128-lane tiles, flatten (B, N), pad the grid so
    # it is even (v7x megacore balance) with >= ~8 steps where possible.
    BN = B * N
    nb = max(1, min(nb, BN // 8))
    BNp = _round_up(BN, 2 * nb)

    def _prep(x, last):
        x = jnp.pad(x, ((0, 0), (0, 0), (0, 0), (0, last - x.shape[-1])))
        x = x.reshape(BN, x.shape[2], last)
        return jnp.pad(x, ((0, BNp - BN), (0, 0), (0, 0)))

    qa = _prep(qa, S2p)                                              # [BNp,C+1,S2p]
    ka = _prep(ka, K2p)                                              # [BNp,C+1,K2p]
    vt = _prep(vt, K2p)                                              # [BNp,C+1,K2p]

    # multiplicative ker_S table; the padded rows/cols get 1.0: there attn is
    # exactly 0 so the logit is -99 (negligible weight), and the ones-row
    # denominator / zero V rows exclude padded K2p columns exactly.
    ker_s = _ker_s_transposed(sc, params["w_prelu"])                 # [S2, K2]
    ker_s = jnp.pad(ker_s, ((0, S2p - S2), (0, K2p - K2)), constant_values=1.0)

    out_blk = attention_fn(qa, ka, vt, ker_s, nb=nb)                 # [BNp,C,S2p]

    # un-blockify back to the padded image, crop, apply the residual.
    out_blk = out_blk[:BN, :, :S2].reshape(B, h_sc, w_sc, C, sc, sc)
    r = out_blk.transpose(0, 1, 4, 2, 5, 3).reshape(B, H, W, C)
    r = r[:, :H_in, :W_in, :]
    out = fm + r * params["gamma"]
    return jnp.transpose(out, (0, 3, 1, 2))                          # back to NCHW


if __name__ == "__main__":
    B, C, H_in, W_in = 2, 8, 16, 16
    SC = 15  # module: sc = 15 for 'kitti' datasets, 19 otherwise

    key = jax.random.PRNGKey(0)
    kc, km, k1, k2, k3 = jax.random.split(key, 5)
    feat_ci = jax.random.normal(kc, (B, C, H_in, W_in), dtype=jnp.float32)
    feat_mi = jax.random.normal(km, (B, C, H_in, W_in), dtype=jnp.float32)

    h_k = (3 * SC - 1) / 2.0
    params = {
        # to_qk (split into q/k halves) and to_v 1x1-conv weights, stored as
        # [C_in, C_out] so the projection is x @ W.
        "wq": jax.random.normal(k1, (C, C), jnp.float32) / jnp.sqrt(C),
        "wk": jax.random.normal(k2, (C, C), jnp.float32) / jnp.sqrt(C),
        "wv": jax.random.normal(k3, (C, C), jnp.float32) / jnp.sqrt(C),
        # module __init__ sets gamma = 0; use a nonzero value so the kernel
        # output is actually exercised by the residual.
        "gamma": jnp.float32(0.5),
        "w_prelu": jnp.float32(1.0 / h_k),
    }

    fwd = jax.jit(functools.partial(kpa_forward, sc=SC, itr=0, nb=4))
    out = jax.block_until_ready(fwd(feat_ci, feat_mi, params))

    ref_fwd = jax.jit(functools.partial(kpa_forward, sc=SC, itr=0, nb=4,
                                        attention_fn=kpa_block_attention_ref))
    ref = jax.block_until_ready(ref_fwd(feat_ci, feat_mi, params))

    assert out.shape == (B, C, H_in, W_in)
    assert bool(jnp.all(jnp.isfinite(out)))
    err = float(jnp.max(jnp.abs(out - ref)))
    assert bool(jnp.allclose(out, ref, rtol=2e-3, atol=2e-3)), err
    print("KERNEL_OK")
</pallas_src>

<mosaic_0001>
module attributes {stable_mosaic.version = 11 : i64} {
  func.func @_kpa_block_kernel(%arg0: i32, %arg1: memref<1x9x256xbf16, #tpu.memory_space<vmem>>, %arg2: memref<1x9x2048xbf16, #tpu.memory_space<vmem>>, %arg3: memref<1x9x2048xbf16, #tpu.memory_space<vmem>>, %arg4: memref<256x2048xf32, #tpu.memory_space<vmem>>, %arg5: memref<1x8x256xf32, #tpu.memory_space<vmem>>) attributes {dimension_semantics = [#tpu.dimension_semantics<parallel>], iteration_bounds = array<i64: 8>, scalar_prefetch = 0 : i64, scratch_operands = 0 : i64, tpu.core_type = #tpu.core_type<tc>, window_params = [{transform_indices = @transform_0, window_bounds = array<i64: 1, 9, 256>}, {transform_indices = @transform_1, window_bounds = array<i64: 1, 9, 2048>}, {transform_indices = @transform_2, window_bounds = array<i64: 1, 9, 2048>}, {pipeline_mode = #tpu.pipeline_mode<synchronous>, transform_indices = @transform_3, window_bounds = array<i64: 256, 2048>}, {transform_indices = @transform_4, window_bounds = array<i64: 1, 8, 256>}]} {
    %c0 = arith.constant 0 : index
    %c0_0 = arith.constant 0 : index
    %c0_1 = arith.constant 0 : index
    %0 = vector.load %arg1[%c0, %c0_0, %c0_1] : memref<1x9x256xbf16, #tpu.memory_space<vmem>>, vector<1x9x256xbf16>
    %1 = vector.shape_cast %0 : vector<1x9x256xbf16> to vector<9x256xbf16>
    %c0_2 = arith.constant 0 : index
    %c0_3 = arith.constant 0 : index
    %c0_4 = arith.constant 0 : index
    %2 = vector.load %arg2[%c0_2, %c0_3, %c0_4] : memref<1x9x2048xbf16, #tpu.memory_space<vmem>>, vector<1x9x2048xbf16>
    %3 = vector.shape_cast %2 : vector<1x9x2048xbf16> to vector<9x2048xbf16>
    %cst = arith.constant dense<0.000000e+00> : vector<256x2048xf32>
    %4 = tpu.matmul %1, %3, %cst {dimension_numbers = #tpu.dot_dimension_numbers<[0], [0], [1], [1], [0, 1, 1, 1], [], []>} : vector<9x256xbf16>, vector<9x2048xbf16>, vector<256x2048xf32> -> vector<256x2048xf32>
    %c0_5 = arith.constant 0 : index
    %c0_6 = arith.constant 0 : index
    %5 = vector.load %arg4[%c0_5, %c0_6] : memref<256x2048xf32, #tpu.memory_space<vmem>>, vector<256x2048xf32>
    %cst_7 = arith.constant 9.900000e+01 : f32
    %6 = vector.broadcast %cst_7 : f32 to vector<256x2048xf32>
    %7 = arith.subf %4, %6 : vector<256x2048xf32>
    %8 = arith.mulf %5, %7 : vector<256x2048xf32>
    %cst_8 = arith.constant dense<0xFF800000> : vector<256xf32>
    %9 = vector.multi_reduction <maximumf>, %8, %cst_8 [1] : vector<256x2048xf32> to vector<256xf32>
    %10 = vector.shape_cast %9 : vector<256xf32> to vector<256x1xf32>
    %11 = vector.broadcast %10 : vector<256x1xf32> to vector<256x2048xf32>
    %12 = arith.subf %8, %11 : vector<256x2048xf32>
    %13 = math.exp %12 : vector<256x2048xf32>
    %14 = arith.truncf %13 : vector<256x2048xf32> to vector<256x2048xbf16>
    %c0_9 = arith.constant 0 : index
    %c0_10 = arith.constant 0 : index
    %c0_11 = arith.constant 0 : index
    %15 = vector.load %arg3[%c0_9, %c0_10, %c0_11] : memref<1x9x2048xbf16, #tpu.memory_space<vmem>>, vector<1x9x2048xbf16>
    %16 = vector.shape_cast %15 : vector<1x9x2048xbf16> to vector<9x2048xbf16>
    %cst_12 = arith.constant dense<0.000000e+00> : vector<9x256xf32>
    %17 = tpu.matmul %16, %14, %cst_12 {dimension_numbers = #tpu.dot_dimension_numbers<[1], [1], [0], [0], [0, 0, 1, 0], [], []>} : vector<9x2048xbf16>, vector<256x2048xbf16>, vector<9x256xf32> -> vector<9x256xf32>
    %18 = vector.extract_strided_slice %17 {offsets = [8, 0], sizes = [1, 256], strides = [1, 1]} : vector<9x256xf32> to vector<1x256xf32>
    %19 = tpu.reciprocal %18 {approx = true} : vector<1x256xf32> -> vector<1x256xf32>
    %20 = vector.extract_strided_slice %17 {offsets = [0, 0], sizes = [8, 256], strides = [1, 1]} : vector<9x256xf32> to vector<8x256xf32>
    %21 = vector.broadcast %19 : vector<1x256xf32> to vector<8x256xf32>
    %22 = arith.mulf %20, %21 : vector<8x256xf32>
    %c0_13 = arith.constant 0 : index
    %c0_14 = arith.constant 0 : index
    %c0_15 = arith.constant 0 : index
    %23 = vector.load %arg5[%c0_13, %c0_14, %c0_15] : memref<1x8x256xf32, #tpu.memory_space<vmem>>, vector<1x8x256xf32>
    %24 = vector.shape_cast %23 : vector<1x8x256xf32> to vector<8x256xf32>
    %25 = vector.shape_cast %22 : vector<8x256xf32> to vector<1x8x256xf32>
    tpu.vector_store %arg5[%c0_13, %c0_14, %c0_15], %25 {strides = array<i32>} : memref<1x8x256xf32, #tpu.memory_space<vmem>>, vector<1x8x256xf32>,
    return
  }
  func.func @transform_0(%arg0: i32) -> (i32, i32, i32) {
    %c0_i32 = arith.constant 0 : i32
    %c0_i32_0 = arith.constant 0 : i32
    %c0_i32_1 = arith.constant 0 : i32
    return %arg0, %c0_i32, %c0_i32_0 : i32, i32, i32
  }
  func.func @transform_1(%arg0: i32) -> (i32, i32, i32) {
    %c0_i32 = arith.constant 0 : i32
    %c0_i32_0 = arith.constant 0 : i32
    %c0_i32_1 = arith.constant 0 : i32
    return %arg0, %c0_i32, %c0_i32_0 : i32, i32, i32
  }
  func.func @transform_2(%arg0: i32) -> (i32, i32, i32) {
    %c0_i32 = arith.constant 0 : i32
    %c0_i32_0 = arith.constant 0 : i32
    %c0_i32_1 = arith.constant 0 : i32
    return %arg0, %c0_i32, %c0_i32_0 : i32, i32, i32
  }
  func.func @transform_3(%arg0: i32) -> (i32, i32) {
    %c0_i32 = arith.constant 0 : i32
    %c0_i32_0 = arith.constant 0 : i32
    %c0_i32_1 = arith.constant 0 : i32
    return %c0_i32, %c0_i32_0 : i32, i32
  }
  func.func @transform_4(%arg0: i32) -> (i32, i32, i32) {
    %c0_i32 = arith.constant 0 : i32
    %c0_i32_0 = arith.constant 0 : i32
    %c0_i32_1 = arith.constant 0 : i32
    return %arg0, %c0_i32, %c0_i32_0 : i32, i32, i32
  }
}

</mosaic_0001>

<llo_original>
// kernel: kpa_forward.1
$region0: #{kpa_forward.1}
  #allocation0 [shape = 'u32[]', space=smem, size = 0x4, offset = 0x4, fixed_abs, tag = 'smem constant byte address 0x4 - core index']
  #allocation1 [shape = 'u32[144,128]{1,0:T(1,128)}', space=vmem, size = 0x12000, scoped, tag = 'internal scratch']
  %s0 = inlined_call_operand.vmem [shape: bf16[8,9,256], index: 0, kind: input, shape index: {}]
  %s1 = inlined_call_operand.vmem [shape: bf16[8,9,2048], index: 1, kind: input, shape index: {}]
  %s2 = inlined_call_operand.vmem [shape: bf16[8,9,2048], index: 2, kind: input, shape index: {}]
  %s3 = inlined_call_operand.vmem [shape: f32[256,2048], index: 3, kind: input, shape index: {}]
  %s4 = inlined_call_operand.vmem [shape: f32[8,8,256], index: 4, kind: output, shape index: {}]
  %s5 = sld [smem:[#allocation0]]
  $region49: #{kpa_forward.1} parent=0
    _
  %s7 = ssub.s32 1, %s5
  %s8 = scalar_select 0, %s7, %s5
  loop: start=0, step=1, limit=10
  $region2: #{kpa_forward.1} parent=0 // loop_pre_header
    _
  $region3: #{kpa_forward.1} parent=0 // loop_header
    %s10 = sphi 0, %s14
    %p11 = scmp.ge.s32.totalorder %s10, 10
    %s20 = sphi 0, %s22
    %s23 = sphi 0, %s20
    %s24 = sphi 0, %s23
    %s40 = sphi 0, %s24
    %s46 = sphi 0, %s48
    %s49 = sphi 0, %s46
    %s50 = sphi 0, %s49
    %s66 = sphi 0, %s50
    %s72 = sphi 0, %s74
    %s75 = sphi 0, %s72
    %s76 = sphi 0, %s75
    %s92 = sphi 0, %s76
    %s96 = sphi 0, %s96
    %s98 = sphi 0, %s96
    %s99 = sphi 0, %s98
    %s113 = sphi 0, %s99
    %s119 = sphi 0, %s121
    %s122 = sphi 0, %s119
    %s123 = sphi 0, %s122
    %s139 = sphi 0, %s123
  $region4: #{kpa_forward.1} parent=0 // loop_header_branch
    %13 = sbr.rel (%p11) target = $region8
  $region5: #{kpa_forward.1} parent=0 // loop_body
    %s15 = ssub.s32 %s10, 1
    %s16 = ssub.s32 %s10, 2
    %s17 = sadd.s32 %s10, 1
    %s18 = ssub.s32 %s10, %s17
    %p19 = scmp.eq.s32.totalorder %s18, 0
    %s21 = sadd.s32 %s20, 1
    %s22 = scalar_select %p19, %s20, %s21
    %p25 = pneg %p19
    %p26 = scmp.eq.s32.totalorder %s10, 7
    %p27 = por %p25, %p26
    %p28 = scmp.ne.s32.totalorder %s20, %s23
    %p29 = scmp.eq.s32.totalorder %s10, 0
    %p30 = por %p28, %p29
    %p31 = scmp.ne.s32.totalorder %s20, %s23
    %p32 = scmp.eq.s32.totalorder %s15, 7
    %p33 = por %p31, %p32
    %p34 = scmp.ne.s32.totalorder %s23, %s24
    %p35 = scmp.eq.s32.totalorder %s15, 0
    %p36 = por %p34, %p35
    %p37 = scmp.ne.s32.totalorder %s23, %s24
    %p38 = scmp.eq.s32.totalorder %s16, 7
    %p39 = por %p37, %p38
    %p41 = scmp.ne.s32.totalorder %s24, %s40
    %p42 = scmp.eq.s32.totalorder %s16, 0
    %p43 = por %p41, %p42
    %s44 = ssub.s32 %s10, %s17
    %p45 = scmp.eq.s32.totalorder %s44, 0
    %s47 = sadd.s32 %s46, 1
    %s48 = scalar_select %p45, %s46, %s47
    %p51 = pneg %p45
    %p52 = scmp.eq.s32.totalorder %s10, 7
    %p53 = por %p51, %p52
    %p54 = scmp.ne.s32.totalorder %s46, %s49
    %p55 = scmp.eq.s32.totalorder %s10, 0
    %p56 = por %p54, %p55
    %p57 = scmp.ne.s32.totalorder %s46, %s49
    %p58 = scmp.eq.s32.totalorder %s15, 7
    %p59 = por %p57, %p58
    %p60 = scmp.ne.s32.totalorder %s49, %s50
    %p61 = scmp.eq.s32.totalorder %s15, 0
    %p62 = por %p60, %p61
    %p63 = scmp.ne.s32.totalorder %s49, %s50
    %p64 = scmp.eq.s32.totalorder %s16, 7
    %p65 = por %p63, %p64
    %p67 = scmp.ne.s32.totalorder %s50, %s66
    %p68 = scmp.eq.s32.totalorder %s16, 0
    %p69 = por %p67, %p68
    %s70 = ssub.s32 %s10, %s17
    %p71 = scmp.eq.s32.totalorder %s70, 0
    %s73 = sadd.s32 %s72, 1
    %s74 = scalar_select %p71, %s72, %s73
    %p77 = pneg %p71
    %p78 = scmp.eq.s32.totalorder %s10, 7
    %p79 = por %p77, %p78
    %p80 = scmp.ne.s32.totalorder %s72, %s75
    %p81 = scmp.eq.s32.totalorder %s10, 0
    %p82 = por %p80, %p81
    %p83 = scmp.ne.s32.totalorder %s72, %s75
    %p84 = scmp.eq.s32.totalorder %s15, 7
    %p85 = por %p83, %p84
    %p86 = scmp.ne.s32.totalorder %s75, %s76
    %p87 = scmp.eq.s32.totalorder %s15, 0
    %p88 = por %p86, %p87
    %p89 = scmp.ne.s32.totalorder %s75, %s76
    %p90 = scmp.eq.s32.totalorder %s16, 7
    %p91 = por %p89, %p90
    %p93 = scmp.ne.s32.totalorder %s76, %s92
    %p94 = scmp.eq.s32.totalorder %s16, 0
    %p95 = por %p93, %p94
    %s97 = sadd.s32 %s96, 1
    %p100 = scmp.eq.s32.totalorder %s10, 7
    %p101 = scmp.ne.s32.totalorder %s96, %s98
    %p102 = scmp.eq.s32.totalorder %s10, 0
    %p103 = por %p101, %p102
    %p104 = scmp.ne.s32.totalorder %s96, %s98
    %p105 = scmp.eq.s32.totalorder %s15, 7
    %p106 = por %p104, %p105
    %p107 = scmp.ne.s32.totalorder %s98, %s99
    %p108 = scmp.eq.s32.totalorder %s15, 0
    %p109 = por %p107, %p108
    %p110 = scmp.ne.s32.totalorder %s98, %s99
    %p111 = scmp.eq.s32.totalorder %s16, 7
    %p112 = por %p110, %p111
    %p114 = scmp.ne.s32.totalorder %s99, %s113
    %p115 = scmp.eq.s32.totalorder %s16, 0
    %p116 = por %p114, %p115
    %s117 = ssub.s32 %s10, %s17
    %p118 = scmp.eq.s32.totalorder %s117, 0
    %s120 = sadd.s32 %s119, 1
    %s121 = scalar_select %p118, %s119, %s120
    %p124 = pneg %p118
    %p125 = scmp.eq.s32.totalorder %s10, 7
    %p126 = por %p124, %p125
    %p127 = scmp.ne.s32.totalorder %s119, %s122
    %p128 = scmp.eq.s32.totalorder %s10, 0
    %p129 = por %p127, %p128
    %p130 = scmp.ne.s32.totalorder %s119, %s122
    %p131 = scmp.eq.s32.totalorder %s15, 7
    %p132 = por %p130, %p131
    %p133 = scmp.ne.s32.totalorder %s122, %s123
    %p134 = scmp.eq.s32.totalorder %s15, 0
    %p135 = por %p133, %p134
    %p136 = scmp.ne.s32.totalorder %s122, %s123
    %p137 = scmp.eq.s32.totalorder %s16, 7
    %p138 = por %p136, %p137
    %p140 = scmp.ne.s32.totalorder %s123, %s139
    %p141 = scmp.eq.s32.totalorder %s16, 0
    %p142 = por %p140, %p141
    %p143 = scmp.le.s32.totalorder 1, %s10
    %p144 = scmp.lt.s32.totalorder %s10, 9
    %p145 = pnand %p143, %p144
    %p146 = pneg %p145
    // Predicated region
    $region9: #{kpa_forward.1} parent=5 // pred_check
      _
    $region10: #{kpa_forward.1} parent=5 // pred_check_branch
      %148 = sbr.rel (%p145) target = $region12
    $region11: #{kpa_forward.1} parent=5 // pred_region
      %s149 = ssub.s32 %s10, 1
      // Predicated region
      $region13: #{kpa_forward.1} parent=11 // pred_check
        %p150 = pneg %p109
      $region14: #{kpa_forward.1} parent=11 // pred_check_branch
        %152 = sbr.rel (%p150) target = $region16
      $region15: #{kpa_forward.1} parent=11 // pred_region
        _
      $region16: #{kpa_forward.1} parent=11 // pred_fallthru
        _
    $region12: #{kpa_forward.1} parent=5 // pred_fallthru
      _
    %p153 = scmp.lt.s32.totalorder %s10, 8
    // Predicated region
    $region17: #{kpa_forward.1} parent=5 // pred_check
      %p154 = pneg %p153
    $region18: #{kpa_forward.1} parent=5 // pred_check_branch
      %156 = sbr.rel (%p154) target = $region20
    $region19: #{kpa_forward.1} parent=5 // pred_region
      // Predicated region
      $region21: #{kpa_forward.1} parent=19 // pred_check
        %p157 = pneg %p30
      $region22: #{kpa_forward.1} parent=19 // pred_check_branch
        %159 = sbr.rel (%p157) target = $region24
      $region23: #{kpa_forward.1} parent=19 // pred_region
        %p160 = scmp.lt.s32.totalorder %s10, 7
        %s161 = scalar_select %p160, %s10, 7
        %s162 = smul.addr %s161, 4
        %s163 = smul.addr %s162, 4
        %s164 = scalar_lea.vmem %s0, %s163
      $region24: #{kpa_forward.1} parent=19 // pred_fallthru
        _
      // Predicated region
      $region25: #{kpa_forward.1} parent=19 // pred_check
        %p165 = pneg %p56
      $region26: #{kpa_forward.1} parent=19 // pred_check_branch
        %167 = sbr.rel (%p165) target = $region28
      $region27: #{kpa_forward.1} parent=19 // pred_region
        %p168 = scmp.lt.s32.totalorder %s10, 7
        %s169 = scalar_select %p168, %s10, 7
        %s170 = smul.addr %s169, 32
        %s171 = smul.addr %s170, 4
        %s172 = scalar_lea.vmem %s1, %s171
      $region28: #{kpa_forward.1} parent=19 // pred_fallthru
        _
      // Predicated region
      $region29: #{kpa_forward.1} parent=19 // pred_check
        %p173 = pneg %p82
      $region30: #{kpa_forward.1} parent=19 // pred_check_branch
        %175 = sbr.rel (%p173) target = $region32
      $region31: #{kpa_forward.1} parent=19 // pred_region
        %p176 = scmp.lt.s32.totalorder %s10, 7
        %s177 = scalar_select %p176, %s10, 7
        %s178 = smul.addr %s177, 32
        %s179 = smul.addr %s178, 4
        %s180 = scalar_lea.vmem %s2, %s179
      $region32: #{kpa_forward.1} parent=19 // pred_fallthru
        _
    $region20: #{kpa_forward.1} parent=5 // pred_fallthru
      _
    %p181 = scmp.le.s32.totalorder 1, %s10
    %p182 = scmp.lt.s32.totalorder %s10, 9
    %p183 = pnand %p181, %p182
    %p184 = pneg %p183
    // Predicated region
    $region33: #{kpa_forward.1} parent=5 // pred_check
      _
    $region34: #{kpa_forward.1} parent=5 // pred_check_branch
      %186 = sbr.rel (%p183) target = $region36
    $region35: #{kpa_forward.1} parent=5 // pred_region
      %s187 = ssub.s32 %s10, 1
      %p188 = scmp.lt.s32.totalorder %s15, 7
      %s189 = scalar_select %p188, %s15, 7
      %s190 = smul.addr %s189, 4
      %s191 = smul.addr %s190, 4
      %s192 = scalar_lea.vmem %s0, %s191
      %p193 = pneg %p36
      %p194 = pneg %p33
      %p195 = scmp.lt.s32.totalorder %s15, 7
      %s196 = scalar_select %p195, %s15, 7
      %s197 = smul.addr %s196, 32
      %s198 = smul.addr %s197, 4
      %s199 = scalar_lea.vmem %s1, %s198
      %p200 = pneg %p62
      %p201 = pneg %p59
      %p202 = scmp.lt.s32.totalorder %s15, 7
      %s203 = scalar_select %p202, %s15, 7
      %s204 = smul.addr %s203, 32
      %s205 = smul.addr %s204, 4
      %s206 = scalar_lea.vmem %s2, %s205
      %p207 = pneg %p88
      %p208 = pneg %p85
      %p209 = pneg %p109
      %p210 = pneg %p106
      %p211 = pneg %p135
      %p212 = pneg %p132
      %p213 = scmp.lt.s32.totalorder %s15, 7
      %s214 = scalar_select %p213, %s15, 7
      %s215 = smul.addr %s214, 2
      %s216 = smul.addr %s215, 8
      %s217 = scalar_lea.vmem %s4, %s216
      %p218 = scmp.lt.s32.totalorder %s15, 7
      %s219 = scalar_select %p218, %s15, 7
      %s220 = smul.addr %s219, 4
      %s221 = smul.addr %s220, 4
      %s222 = scalar_lea.vmem %s0, %s221
      %p223 = scmp.lt.s32.totalorder %s15, 7
      %s224 = scalar_select %p223, %s15, 7
      %s225 = smul.addr %s224, 32
      %s226 = smul.addr %s225, 4
      %s227 = scalar_lea.vmem %s1, %s226
      %p228 = scmp.lt.s32.totalorder %s15, 7
      %s229 = scalar_select %p228, %s15, 7
      %s230 = smul.addr %s229, 32
      %s231 = smul.addr %s230, 4
      %s232 = scalar_lea.vmem %s2, %s231
      %p233 = scmp.lt.s32.totalorder %s15, 7
      %s234 = scalar_select %p233, %s15, 7
      %s235 = smul.addr %s234, 2
      %s236 = smul.addr %s235, 8
      %s237 = scalar_lea.vmem %s4, %s236
      %v239 = vld [vmem:[%s222] sm:$0xff]
      %v240 = vld [vmem:[%s222 + $0x8] sm:$0x11]
      %v241 = vld [vmem:[%s227] sm:$0xff]
      %v242 = vld [vmem:[%s227 + $0x8] sm:$0xff]
      %v243 = vld [vmem:[%s227 + $0x10] sm:$0xff]
      %v244 = vld [vmem:[%s227 + $0x18] sm:$0xff]
      %v245 = vld [vmem:[%s227 + $0x20] sm:$0xff]
      %v246 = vld [vmem:[%s227 + $0x28] sm:$0xff]
      %v247 = vld [vmem:[%s227 + $0x30] sm:$0xff]
      %v248 = vld [vmem:[%s227 + $0x38] sm:$0xff]
      %v249 = vld [vmem:[%s227 + $0x40] sm:$0x11]
      %v250 = vld [vmem:[%s227 + $0x48] sm:$0x11]
      %v251 = vld [vmem:[%s227 + $0x50] sm:$0x11]
      %v252 = vld [vmem:[%s227 + $0x58] sm:$0x11]
      %v253 = vld [vmem:[%s227 + $0x60] sm:$0x11]
      %v254 = vld [vmem:[%s227 + $0x68] sm:$0x11]
      %v255 = vld [vmem:[%s227 + $0x70] sm:$0x11]
      %v256 = vld [vmem:[%s227 + $0x78] sm:$0x11]
      %v259 = vunpack.c.l.b16 %v239
      %v260 = vunpack.c.h.b16 %v239
      %v261 = vunpack.c.l.b16 %v240
      %v262 = vunpack.c.h.b16 %v240
      %v263 = vpack.c.b16 %v261, %v259
      %v264 = vpack.c.b16 %v262, %v260
      %267 = vxpose.xlu0.c.b16.start [1/8] %v263, 128
      %268 = vxpose.xlu0.c.b16.cont [2/8] 0, 128
      %269 = vxpose.xlu0.c.b16.cont [3/8] 0, 128
      %270 = vxpose.xlu0.c.b16.cont [4/8] 0, 128
      %271 = vxpose.xlu0.c.b16.cont [5/8] 0, 128
      %272 = vxpose.xlu0.c.b16.cont [6/8] 0, 128
      %273 = vxpose.xlu0.c.b16.cont [7/8] 0, 128
      %274 = vxpose.xlu0.c.b16.end [8/8] 0, 128
      %v275 = vpop.trf.xlu0
      %v276 = vpop.trf.xlu0
      %v277 = vpop.trf.xlu0
      %v278 = vpop.trf.xlu0
      %v279 = vpop.trf.xlu0
      %v280 = vpop.trf.xlu0
      %v281 = vpop.trf.xlu0
      %v282 = vpop.trf.xlu0
      %283 = vxpose.xlu0.c.b16.start [1/8] %v264, 128
      %284 = vxpose.xlu0.c.b16.cont [2/8] 0, 128
      %285 = vxpose.xlu0.c.b16.cont [3/8] 0, 128
      %286 = vxpose.xlu0.c.b16.cont [4/8] 0, 128
      %287 = vxpose.xlu0.c.b16.cont [5/8] 0, 128
      %288 = vxpose.xlu0.c.b16.cont [6/8] 0, 128
      %289 = vxpose.xlu0.c.b16.cont [7/8] 0, 128
      %290 = vxpose.xlu0.c.b16.end [8/8] 0, 128
      %v291 = vpop.trf.xlu0
      %v292 = vpop.trf.xlu0
      %v293 = vpop.trf.xlu0
      %v294 = vpop.trf.xlu0
      %v295 = vpop.trf.xlu0
      %v296 = vpop.trf.xlu0
      %v297 = vpop.trf.xlu0
      %v298 = vpop.trf.xlu0
      %v315 = vunpack.c.l.b16 %v241
      %v316 = vunpack.c.h.b16 %v241
      %v317 = vunpack.c.l.b16 %v242
      %v318 = vunpack.c.h.b16 %v242
      %v319 = vunpack.c.l.b16 %v243
      %v320 = vunpack.c.h.b16 %v243
      %v321 = vunpack.c.l.b16 %v244
      %v322 = vunpack.c.h.b16 %v244
      %v323 = vunpack.c.l.b16 %v245
      %v324 = vunpack.c.h.b16 %v245
      %v325 = vunpack.c.l.b16 %v246
      %v326 = vunpack.c.h.b16 %v246
      %v327 = vunpack.c.l.b16 %v247
      %v328 = vunpack.c.h.b16 %v247
      %v329 = vunpack.c.l.b16 %v248
      %v330 = vunpack.c.h.b16 %v248
      %v331 = vunpack.c.l.b16 %v249
      %v332 = vunpack.c.h.b16 %v249
      %v333 = vunpack.c.l.b16 %v250
      %v334 = vunpack.c.h.b16 %v250
      %v335 = vunpack.c.l.b16 %v251
      %v336 = vunpack.c.h.b16 %v251
      %v337 = vunpack.c.l.b16 %v252
      %v338 = vunpack.c.h.b16 %v252
      %v339 = vunpack.c.l.b16 %v253
      %v340 = vunpack.c.h.b16 %v253
      %v341 = vunpack.c.l.b16 %v254
      %v342 = vunpack.c.h.b16 %v254
      %v343 = vunpack.c.l.b16 %v255
      %v344 = vunpack.c.h.b16 %v255
      %v345 = vunpack.c.l.b16 %v256
      %v346 = vunpack.c.h.b16 %v256
      %v347 = vpack.c.b16 %v331, %v315
      %v348 = vpack.c.b16 %v332, %v316
      %v349 = vpack.c.b16 %v333, %v317
      %v350 = vpack.c.b16 %v334, %v318
      %v351 = vpack.c.b16 %v335, %v319
      %v352 = vpack.c.b16 %v336, %v320
      %v353 = vpack.c.b16 %v337, %v321
      %v354 = vpack.c.b16 %v338, %v322
      %v355 = vpack.c.b16 %v339, %v323
      %v356 = vpack.c.b16 %v340, %v324
      %v357 = vpack.c.b16 %v341, %v325
      %v358 = vpack.c.b16 %v342, %v326
      %v359 = vpack.c.b16 %v343, %v327
      %v360 = vpack.c.b16 %v344, %v328
      %v361 = vpack.c.b16 %v345, %v329
      %v362 = vpack.c.b16 %v346, %v330
      %vm363 = vcmask 72704
      %v365 = vsel %vm363, %v275, 0
      %v368 = vsel %vm363, %v276, 0
      %v371 = vsel %vm363, %v277, 0
      %v374 = vsel %vm363, %v278, 0
      %v377 = vsel %vm363, %v279, 0
      %v380 = vsel %vm363, %v280, 0
      %v383 = vsel %vm363, %v281, 0
      %v386 = vsel %vm363, %v282, 0
      %v389 = vsel %vm363, %v291, 0
      %v392 = vsel %vm363, %v292, 0
      %v395 = vsel %vm363, %v293, 0
      %v398 = vsel %vm363, %v294, 0
      %v401 = vsel %vm363, %v295, 0
      %v404 = vsel %vm363, %v296, 0
      %v407 = vsel %vm363, %v297, 0
      %v410 = vsel %vm363, %v298, 0
      %vm412 = vcmask 1043456
      %vm413 = vcmask 1044480
      %v414 = vsel %vm412, 4294967295, 65535
      %v415 = vsel %vm413, %v414, 0
      %v417 = vand.u32 %v347, %v415
      %v420 = vand.u32 %v348, %v415
      %v423 = vand.u32 %v349, %v415
      %v426 = vand.u32 %v350, %v415
      %v429 = vand.u32 %v351, %v415
      %v432 = vand.u32 %v352, %v415
      %v435 = vand.u32 %v353, %v415
      %v438 = vand.u32 %v354, %v415
      %v441 = vand.u32 %v355, %v415
      %v444 = vand.u32 %v356, %v415
      %v447 = vand.u32 %v357, %v415
      %v450 = vand.u32 %v358, %v415
      %v453 = vand.u32 %v359, %v415
      %v456 = vand.u32 %v360, %v415
      %v459 = vand.u32 %v361, %v415
      %v462 = vand.u32 %v362, %v415
      %464 = vmatprep.subr.bf16.mxu0 %v420
      %465 = vmatpush1.bf16.msra.mxu0 %v417
      %466 = vmatprep.subr.bf16.mxu0 0
      %467 = vmatpush1.bf16.msra.mxu0 0
      %468 = vmatprep.subr.bf16.mxu0 0
      %469 = vmatpush1.bf16.msra.mxu0 0
      %470 = vmatprep.subr.bf16.mxu0 0
      %471 = vmatpush1.bf16.msra.mxu0 0
      %472 = vmatprep.subr.bf16.mxu0 0
      %473 = vmatpush1.bf16.msra.mxu0 0
      %474 = vmatprep.subr.bf16.mxu0 0
      %475 = vmatpush1.bf16.msra.mxu0 0
      %476 = vmatprep.subr.bf16.mxu0 0
      %477 = vmatpush1.bf16.msra.mxu0 0
      %478 = vmatprep.subr.bf16.mxu0 0
      %479 = vmatpush1.bf16.msra.mxu0 0
      %480 = vmatprep.subr.bf16.mxu0 0
      %481 = vmatpush1.bf16.msra.mxu0 0
      %482 = vmatprep.subr.bf16.mxu0 0
      %483 = vmatpush1.bf16.msra.mxu0 0
      %484 = vmatprep.subr.bf16.mxu0 0
      %485 = vmatpush1.bf16.msra.mxu0 0
      %486 = vmatprep.subr.bf16.mxu0 0
      %487 = vmatpush1.bf16.msra.mxu0 0
      %488 = vmatprep.subr.bf16.mxu0 0
      %489 = vmatpush1.bf16.msra.mxu0 0
      %490 = vmatprep.subr.bf16.mxu0 0
      %491 = vmatpush1.bf16.msra.mxu0 0
      %492 = vmatprep.subr.bf16.mxu0 0
      %493 = vmatpush1.bf16.msra.mxu0 0
      %494 = vmatprep.subr.bf16.mxu0 0
      %495 = vmatpush1.bf16.msra.mxu0 0
      %496 = vmatprep.mubr.bf16.mxu0 0
      %497 = vmatmul.mubr.bf16.gmra.mrb[0].mxu0 %v365
      %v498 = vpop.f32.mrb[0].mxu0
      %v499 = vadd.f32 0.0, %v498
      %v500 = vpop.f32.mrb[0].mxu0
      %v501 = vadd.f32 0.0, %v500
      %v502 = vpop.f32.mrb[0].mxu0
      %v503 = vadd.f32 0.0, %v502
      %v504 = vpop.f32.mrb[0].mxu0
      %v505 = vadd.f32 0.0, %v504
      %506 = vmatprep.mubr.bf16.mxu0 0
      %507 = vmatmul.mubr.bf16.gmra.mrb[0].mxu0 %v368
      %v508 = vpop.f32.mrb[0].mxu0
      %v509 = vadd.f32 0.0, %v508
      %v510 = vpop.f32.mrb[0].mxu0
      %v511 = vadd.f32 0.0, %v510
      %v512 = vpop.f32.mrb[0].mxu0
      %v513 = vadd.f32 0.0, %v512
      %v514 = vpop.f32.mrb[0].mxu0
      %v515 = vadd.f32 0.0, %v514
      %516 = vmatprep.mubr.bf16.mxu0 0
      %517 = vmatmul.mubr.bf16.gmra.mrb[0].mxu0 %v371
      %v518 = vpop.f32.mrb[0].mxu0
      %v519 = vadd.f32 0.0, %v518
      %v520 = vpop.f32.mrb[0].mxu0
      %v521 = vadd.f32 0.0, %v520
      %v522 = vpop.f32.mrb[0].mxu0
      %v523 = vadd.f32 0.0, %v522
      %v524 = vpop.f32.mrb[0].mxu0
      %v525 = vadd.f32 0.0, %v524
      %526 = vmatprep.mubr.bf16.mxu0 0
      %527 = vmatmul.mubr.bf16.gmra.mrb[0].mxu0 %v374
      %v528 = vpop.f32.mrb[0].mxu0
      %v529 = vadd.f32 0.0, %v528
      %v530 = vpop.f32.mrb[0].mxu0
      %v531 = vadd.f32 0.0, %v530
      %v532 = vpop.f32.mrb[0].mxu0
      %v533 = vadd.f32 0.0, %v532
      %v534 = vpop.f32.mrb[0].mxu0
      %v535 = vadd.f32 0.0, %v534
      %536 = vmatprep.mubr.bf16.mxu0 0
      %537 = vmatmul.mubr.bf16.gmra.mrb[0].mxu0 %v377
      %v538 = vpop.f32.mrb[0].mxu0
      %v539 = vadd.f32 0.0, %v538
      %v540 = vpop.f32.mrb[0].mxu0
      %v541 = vadd.f32 0.0, %v540
      %v542 = vpop.f32.mrb[0].mxu0
      %v543 = vadd.f32 0.0, %v542
      %v544 = vpop.f32.mrb[0].mxu0
      %v545 = vadd.f32 0.0, %v544
      %546 = vmatprep.mubr.bf16.mxu0 0
      %547 = vmatmul.mubr.bf16.gmra.mrb[0].mxu0 %v380
      %v548 = vpop.f32.mrb[0].mxu0
      %v549 = vadd.f32 0.0, %v548
      %v550 = vpop.f32.mrb[0].mxu0
      %v551 = vadd.f32 0.0, %v550
      %v552 = vpop.f32.mrb[0].mxu0
      %v553 = vadd.f32 0.0, %v552
      %v554 = vpop.f32.mrb[0].mxu0
      %v555 = vadd.f32 0.0, %v554
      %556 = vmatprep.mubr.bf16.mxu0 0
      %557 = vmatmul.mubr.bf16.gmra.mrb[0].mxu0 %v383
      %v558 = vpop.f32.mrb[0].mxu0
      %v559 = vadd.f32 0.0, %v558
      %v560 = vpop.f32.mrb[0].mxu0
      %v561 = vadd.f32 0.0, %v560
      %v562 = vpop.f32.mrb[0].mxu0
      %v563 = vadd.f32 0.0, %v562
      %v564 = vpop.f32.mrb[0].mxu0
      %v565 = vadd.f32 0.0, %v564
      %566 = vmatprep.mubr.bf16.mxu0 0
      %567 = vmatmul.mubr.bf16.gmra.mrb[0].mxu0 %v386
      %v568 = vpop.f32.mrb[0].mxu0
      %v569 = vadd.f32 0.0, %v568
      %v570 = vpop.f32.mrb[0].mxu0
      %v571 = vadd.f32 0.0, %v570
      %v572 = vpop.f32.mrb[0].mxu0
      %v573 = vadd.f32 0.0, %v572
      %v574 = vpop.f32.mrb[0].mxu0
      %v575 = vadd.f32 0.0, %v574
      %576 = vmatprep.mubr.bf16.mxu0 0
      %577 = vmatmul.mubr.bf16.gmra.mrb[0].mxu0 %v389
      %v578 = vpop.f32.mrb[0].mxu0
      %v579 = vadd.f32 0.0, %v578
      %v580 = vpop.f32.mrb[0].mxu0
      %v581 = vadd.f32 0.0, %v580
      %v582 = vpop.f32.mrb[0].mxu0
      %v583 = vadd.f32 0.0, %v582
      %v584 = vpop.f32.mrb[0].mxu0
      %v585 = vadd.f32 0.0, %v584
      %586 = vmatprep.mubr.bf16.mxu0 0
      %587 = vmatmul.mubr.bf16.gmra.mrb[0].mxu0 %v392
      %v588 = vpop.f32.mrb[0].mxu0
      %v589 = vadd.f32 0.0, %v588
      %v590 = vpop.f32.mrb[0].mxu0
      %v591 = vadd.f32 0.0, %v590
      %v592 = vpop.f32.mrb[0].mxu0
      %v593 = vadd.f32 0.0, %v592
      %v594 = vpop.f32.mrb[0].mxu0
      %v595 = vadd.f32 0.0, %v594
      %596 = vmatprep.mubr.bf16.mxu0 0
      %597 = vmatmul.mubr.bf16.gmra.mrb[0].mxu0 %v395
      %v598 = vpop.f32.mrb[0].mxu0
      %v599 = vadd.f32 0.0, %v598
      %v600 = vpop.f32.mrb[0].mxu0
      %v601 = vadd.f32 0.0, %v600
      %v602 = vpop.f32.mrb[0].mxu0
      %v603 = vadd.f32 0.0, %v602
      %v604 = vpop.f32.mrb[0].mxu0
      %v605 = vadd.f32 0.0, %v604
      %606 = vmatprep.mubr.bf16.mxu0 0
      %607 = vmatmul.mubr.bf16.gmra.mrb[0].mxu0 %v398
      %v608 = vpop.f32.mrb[0].mxu0
      %v609 = vadd.f32 0.0, %v608
      %v610 = vpop.f32.mrb[0].mxu0
      %v611 = vadd.f32 0.0, %v610
      %v612 = vpop.f32.mrb[0].mxu0
      %v613 = vadd.f32 0.0, %v612
      %v614 = vpop.f32.mrb[0].mxu0
      %v615 = vadd.f32 0.0, %v614
      %616 = vmatprep.mubr.bf16.mxu0 0
      %617 = vmatmul.mubr.bf16.gmra.mrb[0].mxu0 %v401
      %v618 = vpop.f32.mrb[0].mxu0
      %v619 = vadd.f32 0.0, %v618
      %v620 = vpop.f32.mrb[0].mxu0
      %v621 = vadd.f32 0.0, %v620
      %v622 = vpop.f32.mrb[0].mxu0
      %v623 = vadd.f32 0.0, %v622
      %v624 = vpop.f32.mrb[0].mxu0
      %v625 = vadd.f32 0.0, %v624
      %626 = vmatprep.mubr.bf16.mxu0 0
      %627 = vmatmul.mubr.bf16.gmra.mrb[0].mxu0 %v404
      %v628 = vpop.f32.mrb[0].mxu0
      %v629 = vadd.f32 0.0, %v628
      %v630 = vpop.f32.mrb[0].mxu0
      %v631 = vadd.f32 0.0, %v630
      %v632 = vpop.f32.mrb[0].mxu0
      %v633 = vadd.f32 0.0, %v632
      %v634 = vpop.f32.mrb[0].mxu0
      %v635 = vadd.f32 0.0, %v634
      %636 = vmatprep.mubr.bf16.mxu0 0
      %637 = vmatmul.mubr.bf16.gmra.mrb[0].mxu0 %v407
      %v638 = vpop.f32.mrb[0].mxu0
      %v639 = vadd.f32 0.0, %v638
      %v640 = vpop.f32.mrb[0].mxu0
      %v641 = vadd.f32 0.0, %v640
      %v642 = vpop.f32.mrb[0].mxu0
      %v643 = vadd.f32 0.0, %v642
      %v644 = vpop.f32.mrb[0].mxu0
      %v645 = vadd.f32 0.0, %v644
      %646 = vmatprep.mubr.bf16.mxu0 0
      %647 = vmatmul.mubr.bf16.gmra.mrb[0].mxu0 %v410
      %v648 = vpop.f32.mrb[0].mxu0
      %v649 = vadd.f32 0.0, %v648
      %v650 = vpop.f32.mrb[0].mxu0
      %v651 = vadd.f32 0.0, %v650
      %v652 = vpop.f32.mrb[0].mxu0
      %v653 = vadd.f32 0.0, %v652
      %v654 = vpop.f32.mrb[0].mxu0
      %v655 = vadd.f32 0.0, %v654
      %656 = vdwg.mxu0
      %657 = vmatprep.subr.bf16.mxu0 %v426
      %658 = vmatpush1.bf16.msra.mxu0 %v423
      %659 = vmatprep.subr.bf16.mxu0 0
      %660 = vmatpush1.bf16.msra.mxu0 0
      %661 = vmatprep.subr.bf16.mxu0 0
      %662 = vmatpush1.bf16.msra.mxu0 0
      %663 = vmatprep.subr.bf16.mxu0 0
      %664 = vmatpush1.bf16.msra.mxu0 0
      %665 = vmatprep.subr.bf16.mxu0 0
      %666 = vmatpush1.bf16.msra.mxu0 0
      %667 = vmatprep.subr.bf16.mxu0 0
      %668 = vmatpush1.bf16.msra.mxu0 0
      %669 = vmatprep.subr.bf16.mxu0 0
      %670 = vmatpush1.bf16.msra.mxu0 0
      %671 = vmatprep.subr.bf16.mxu0 0
      %672 = vmatpush1.bf16.msra.mxu0 0
      %673 = vmatprep.subr.bf16.mxu0 0
      %674 = vmatpush1.bf16.msra.mxu0 0
      %675 = vmatprep.subr.bf16.mxu0 0
      %676 = vmatpush1.bf16.msra.mxu0 0
      %677 = vmatprep.subr.bf16.mxu0 0
      %678 = vmatpush1.bf16.msra.mxu0 0
      %679 = vmatprep.subr.bf16.mxu0 0
      %680 = vmatpush1.bf16.msra.mxu0 0
      %681 = vmatprep.subr.bf16.mxu0 0
      %682 = vmatpush1.bf16.msra.mxu0 0
      %683 = vmatprep.subr.bf16.mxu0 0
      %684 = vmatpush1.bf16.msra.mxu0 0
      %685 = vmatprep.subr.bf16.mxu0 0
      %686 = vmatpush1.bf16.msra.mxu0 0
      %687 = vmatprep.subr.bf16.mxu0 0
      %688 = vmatpush1.bf16.msra.mxu0 0
      %689 = vmatprep.mubr.bf16.mxu0 0
      %690 = vmatmul.mubr.bf16.gmra.mrb[0].mxu0 %v365
      %v691 = vpop.f32.mrb[0].mxu0
      %v692 = vadd.f32 0.0, %v691
      %v693 = vpop.f32.mrb[0].mxu0
      %v694 = vadd.f32 0.0, %v693
      %v695 = vpop.f32.mrb[0].mxu0
      %v696 = vadd.f32 0.0, %v695
      %v697 = vpop.f32.mrb[0].mxu0
      %v698 = vadd.f32 0.0, %v697
      %699 = vmatprep.mubr.bf16.mxu0 0
      %700 = vmatmul.mubr.bf16.gmra.mrb[0].mxu0 %v368
      %v701 = vpop.f32.mrb[0].mxu0
      %v702 = vadd.f32 0.0, %v701
      %v703 = vpop.f32.mrb[0].mxu0
      %v704 = vadd.f32 0.0, %v703
      %v705 = vpop.f32.mrb[0].mxu0
      %v706 = vadd.f32 0.0, %v705
      %v707 = vpop.f32.mrb[0].mxu0
      %v708 = vadd.f32 0.0, %v707
      %709 = vmatprep.mubr.bf16.mxu0 0
      %710 = vmatmul.mubr.bf16.gmra.mrb[0].mxu0 %v371
      %v711 = vpop.f32.mrb[0].mxu0
      %v712 = vadd.f32 0.0, %v711
      %v713 = vpop.f32.mrb[0].mxu0
      %v714 = vadd.f32 0.0, %v713
      %v715 = vpop.f32.mrb[0].mxu0
      %v716 = vadd.f32 0.0, %v715
      %v717 = vpop.f32.mrb[0].mxu0
      %v718 = vadd.f32 0.0, %v717
      %719 = vmatprep.mubr.bf16.mxu0 0
      %720 = vmatmul.mubr.bf16.gmra.mrb[0].mxu0 %v374
      %v721 = vpop.f32.mrb[0].mxu0
      %v722 = vadd.f32 0.0, %v721
      %v723 = vpop.f32.mrb[0].mxu0
      %v724 = vadd.f32 0.0, %v723
      %v725 = vpop.f32.mrb[0].mxu0
      %v726 = vadd.f32 0.0, %v725
      %v727 = vpop.f32.mrb[0].mxu0
      %v728 = vadd.f32 0.0, %v727
      %729 = vmatprep.mubr.bf16.mxu0 0
      %730 = vmatmul.mubr.bf16.gmra.mrb[0].mxu0 %v377
      %v731 = vpop.f32.mrb[0].mxu0
      %v732 = vadd.f32 0.0, %v731
      %v733 = vpop.f32.mrb[0].mxu0
      %v734 = vadd.f32 0.0, %v733
      %v735 = vpop.f32.mrb[0].mxu0
      %v736 = vadd.f32 0.0, %v735
      %v737 = vpop.f32.mrb[0].mxu0
      %v738 = vadd.f32 0.0, %v737
      %739 = vmatprep.mubr.bf16.mxu0 0
      %740 = vmatmul.mubr.bf16.gmra.mrb[0].mxu0 %v380
      %v741 = vpop.f32.mrb[0].mxu0
      %v742 = vadd.f32 0.0, %v741
      %v743 = vpop.f32.mrb[0].mxu0
      %v744 = vadd.f32 0.0, %v743
      %v745 = vpop.f32.mrb[0].mxu0
      %v746 = vadd.f32 0.0, %v745
      %v747 = vpop.f32.mrb[0].mxu0
      %v748 = vadd.f32 0.0, %v747
      %749 = vmatprep.mubr.bf16.mxu0 0
      %750 = vmatmul.mubr.bf16.gmra.mrb[0].mxu0 %v383
      %v751 = vpop.f32.mrb[0].mxu0
      %v752 = vadd.f32 0.0, %v751
      %v753 = vpop.f32.mrb[0].mxu0
      %v754 = vadd.f32 0.0, %v753
      %v755 = vpop.f32.mrb[0].mxu0
      %v756 = vadd.f32 0.0, %v755
      %v757 = vpop.f32.mrb[0].mxu0
      %v758 = vadd.f32 0.0, %v757
      %759 = vmatprep.mubr.bf16.mxu0 0
      %760 = vmatmul.mubr.bf16.gmra.mrb[0].mxu0 %v386
      %v761 = vpop.f32.mrb[0].mxu0
      %v762 = vadd.f32 0.0, %v761
      %v763 = vpop.f32.mrb[0].mxu0
      %v764 = vadd.f32 0.0, %v763
      %v765 = vpop.f32.mrb[0].mxu0
      %v766 = vadd.f32 0.0, %v765
      %v767 = vpop.f32.mrb[0].mxu0
      %v768 = vadd.f32 0.0, %v767
      %769 = vmatprep.mubr.bf16.mxu0 0
      %770 = vmatmul.mubr.bf16.gmra.mrb[0].mxu0 %v389
      %v771 = vpop.f32.mrb[0].mxu0
      %v772 = vadd.f32 0.0, %v771
      %v773 = vpop.f32.mrb[0].mxu0
      %v774 = vadd.f32 0.0, %v773
      %v775 = vpop.f32.mrb[0].mxu0
      %v776 = vadd.f32 0.0, %v775
      %v777 = vpop.f32.mrb[0].mxu0
      %v778 = vadd.f32 0.0, %v777
      %779 = vmatprep.mubr.bf16.mxu0 0
      %780 = vmatmul.mubr.bf16.gmra.mrb[0].mxu0 %v392
      %v781 = vpop.f32.mrb[0].mxu0
      %v782 = vadd.f32 0.0, %v781
      %v783 = vpop.f32.mrb[0].mxu0
      %v784 = vadd.f32 0.0, %v783
      %v785 = vpop.f32.mrb[0].mxu0
      %v786 = vadd.f32 0.0, %v785
      %v787 = vpop.f32.mrb[0].mxu0
      %v788 = vadd.f32 0.0, %v787
      %789 = vmatprep.mubr.bf16.mxu0 0
      %790 = vmatmul.mubr.bf16.gmra.mrb[0].mxu0 %v395
      %v791 = vpop.f32.mrb[0].mxu0
      %v792 = vadd.f32 0.0, %v791
      %v793 = vpop.f32.mrb[0].mxu0
      %v794 = vadd.f32 0.0, %v793
      %v795 = vpop.f32.mrb[0].mxu0
      %v796 = vadd.f32 0.0, %v795
      %v797 = vpop.f32.mrb[0].mxu0
      %v798 = vadd.f32 0.0, %v797
      %799 = vmatprep.mubr.bf16.mxu0 0
      %800 = vmatmul.mubr.bf16.gmra.mrb[0].mxu0 %v398
      %v801 = vpop.f32.mrb[0].mxu0
      %v802 = vadd.f32 0.0, %v801
      %v803 = vpop.f32.mrb[0].mxu0
      %v804 = vadd.f32 0.0, %v803
      %v805 = vpop.f32.mrb[0].mxu0
      %v806 = vadd.f32 0.0, %v805
      %v807 = vpop.f32.mrb[0].mxu0
      %v808 = vadd.f32 0.0, %v807
      %809 = vmatprep.mubr.bf16.mxu0 0
      %810 = vmatmul.mubr.bf16.gmra.mrb[0].mxu0 %v401
      %v811 = vpop.f32.mrb[0].mxu0
      %v812 = vadd.f32 0.0, %v811
      %v813 = vpop.f32.mrb[0].mxu0
      %v814 = vadd.f32 0.0, %v813
      %v815 = vpop.f32.mrb[0].mxu0
      %v816 = vadd.f32 0.0, %v815
      %v817 = vpop.f32.mrb[0].mxu0
      %v818 = vadd.f32 0.0, %v817
      %819 = vmatprep.mubr.bf16.mxu0 0
      %820 = vmatmul.mubr.bf16.gmra.mrb[0].mxu0 %v404
      %v821 = vpop.f32.mrb[0].mxu0
      %v822 = vadd.f32 0.0, %v821
      %v823 = vpop.f32.mrb[0].mxu0
      %v824 = vadd.f32 0.0, %v823
      %v825 = vpop.f32.mrb[0].mxu0
      %v826 = vadd.f32 0.0, %v825
      %v827 = vpop.f32.mrb[0].mxu0
      %v828 = vadd.f32 0.0, %v827
      %829 = vmatprep.mubr.bf16.mxu0 0
      %830 = vmatmul.mubr.bf16.gmra.mrb[0].mxu0 %v407
      %v831 = vpop.f32.mrb[0].mxu0
      %v832 = vadd.f32 0.0, %v831
      %v833 = vpop.f32.mrb[0].mxu0
      %v834 = vadd.f32 0.0, %v833
      %v835 = vpop.f32.mrb[0].mxu0
      %v836 = vadd.f32 0.0, %v835
      %v837 = vpop.f32.mrb[0].mxu0
      %v838 = vadd.f32 0.0, %v837
      %839 = vmatprep.mubr.bf16.mxu0 0
      %840 = vmatmul.mubr.bf16.gmra.mrb[0].mxu0 %v410
      %v841 = vpop.f32.mrb[0].mxu0
      %v842 = vadd.f32 0.0, %v841
      %v843 = vpop.f32.mrb[0].mxu0
      %v844 = vadd.f32 0.0, %v843
      %v845 = vpop.f32.mrb[0].mxu0
      %v846 = vadd.f32 0.0, %v845
      %v847 = vpop.f32.mrb[0].mxu0
      %v848 = vadd.f32 0.0, %v847
      %849 = vdwg.mxu0
      %850 = vmatprep.subr.bf16.mxu0 %v432
      %851 = vmatpush1.bf16.msra.mxu0 %v429
      %852 = vmatprep.subr.bf16.mxu0 0
      %853 = vmatpush1.bf16.msra.mxu0 0
      %854 = vmatprep.subr.bf16.mxu0 0
      %855 = vmatpush1.bf16.msra.mxu0 0
      %856 = vmatprep.subr.bf16.mxu0 0
      %857 = vmatpush1.bf16.msra.mxu0 0
      %858 = vmatprep.subr.bf16.mxu0 0
      %859 = vmatpush1.bf16.msra.mxu0 0
      %860 = vmatprep.subr.bf16.mxu0 0
      %861 = vmatpush1.bf16.msra.mxu0 0
      %862 = vmatprep.subr.bf16.mxu0 0
      %863 = vmatpush1.bf16.msra.mxu0 0
      %864 = vmatprep.subr.bf16.mxu0 0
      %865 = vmatpush1.bf16.msra.mxu0 0
      %866 = vmatprep.subr.bf16.mxu0 0
      %867 = vmatpush1.bf16.msra.mxu0 0
      %868 = vmatprep.subr.bf16.mxu0 0
      %869 = vmatpush1.bf16.msra.mxu0 0
      %870 = vmatprep.subr.bf16.mxu0 0
      %871 = vmatpush1.bf16.msra.mxu0 0
      %872 = vmatprep.subr.bf16.mxu0 0
      %873 = vmatpush1.bf16.msra.mxu0 0
      %874 = vmatprep.subr.bf16.mxu0 0
      %875 = vmatpush1.bf16.msra.mxu0 0
      %876 = vmatprep.subr.bf16.mxu0 0
      %877 = vmatpush1.bf16.msra.mxu0 0
      %878 = vmatprep.subr.bf16.mxu0 0
      %879 = vmatpush1.bf16.msra.mxu0 0
      %880 = vmatprep.subr.bf16.mxu0 0
      %881 = vmatpush1.bf16.msra.mxu0 0
      %882 = vmatprep.mubr.bf16.mxu0 0
      %883 = vmatmul.mubr.bf16.gmra.mrb[0].mxu0 %v365
      %v884 = vpop.f32.mrb[0].mxu0
      %v885 = vadd.f32 0.0, %v884
      %v886 = vpop.f32.mrb[0].mxu0
      %v887 = vadd.f32 0.0, %v886
      %v888 = vpop.f32.mrb[0].mxu0
      %v889 = vadd.f32 0.0, %v888
      %v890 = vpop.f32.mrb[0].mxu0
      %v891 = vadd.f32 0.0, %v890
      %892 = vmatprep.mubr.bf16.mxu0 0
      %893 = vmatmul.mubr.bf16.gmra.mrb[0].mxu0 %v368
      %v894 = vpop.f32.mrb[0].mxu0
      %v895 = vadd.f32 0.0, %v894
      %v896 = vpop.f32.mrb[0].mxu0
      %v897 = vadd.f32 0.0, %v896
      %v898 = vpop.f32.mrb[0].mxu0
      %v899 = vadd.f32 0.0, %v898
      %v900 = vpop.f32.mrb[0].mxu0
      %v901 = vadd.f32 0.0, %v900
      %902 = vmatprep.mubr.bf16.mxu0 0
      %903 = vmatmul.mubr.bf16.gmra.mrb[0].mxu0 %v371
      %v904 = vpop.f32.mrb[0].mxu0
      %v905 = vadd.f32 0.0, %v904
      %v906 = vpop.f32.mrb[0].mxu0
      %v907 = vadd.f32 0.0, %v906
      %v908 = vpop.f32.mrb[0].mxu0
      %v909 = vadd.f32 0.0, %v908
      %v910 = vpop.f32.mrb[0].mxu0
      %v911 = vadd.f32 0.0, %v910
      %912 = vmatprep.mubr.bf16.mxu0 0
      %913 = vmatmul.mubr.bf16.gmra.mrb[0].mxu0 %v374
      %v914 = vpop.f32.mrb[0].mxu0
      %v915 = vadd.f32 0.0, %v914
      %v916 = vpop.f32.mrb[0].mxu0
      %v917 = vadd.f32 0.0, %v916
      %v918 = vpop.f32.mrb[0].mxu0
      %v919 = vadd.f32 0.0, %v918
      %v920 = vpop.f32.mrb[0].mxu0
      %v921 = vadd.f32 0.0, %v920
      %922 = vmatprep.mubr.bf16.mxu0 0
      %923 = vmatmul.mubr.bf16.gmra.mrb[0].mxu0 %v377
      %v924 = vpop.f32.mrb[0].mxu0
      %v925 = vadd.f32 0.0, %v924
      %v926 = vpop.f32.mrb[0].mxu0
      %v927 = vadd.f32 0.0, %v926
      %v928 = vpop.f32.mrb[0].mxu0
      %v929 = vadd.f32 0.0, %v928
      %v930 = vpop.f32.mrb[0].mxu0
      %v931 = vadd.f32 0.0, %v930
      %932 = vmatprep.mubr.bf16.mxu0 0
      %933 = vmatmul.mubr.bf16.gmra.mrb[0].mxu0 %v380
      %v934 = vpop.f32.mrb[0].mxu0
      %v935 = vadd.f32 0.0, %v934
      %v936 = vpop.f32.mrb[0].mxu0
      %v937 = vadd.f32 0.0, %v936
      %v938 = vpop.f32.mrb[0].mxu0
      %v939 = vadd.f32 0.0, %v938
      %v940 = vpop.f32.mrb[0].mxu0
      %v941 = vadd.f32 0.0, %v940
      %942 = vmatprep.mubr.bf16.mxu0 0
      %943 = vmatmul.mubr.bf16.gmra.mrb[0].mxu0 %v383
      %v944 = vpop.f32.mrb[0].mxu0
      %v945 = vadd.f32 0.0, %v944
      %v946 = vpop.f32.mrb[0].mxu0
      %v947 = vadd.f32 0.0, %v946
      %v948 = vpop.f32.mrb[0].mxu0
      %v949 = vadd.f32 0.0, %v948
      %v950 = vpop.f32.mrb[0].mxu0
      %v951 = vadd.f32 0.0, %v950
      %952 = vmatprep.mubr.bf16.mxu0 0
      %953 = vmatmul.mubr.bf16.gmra.mrb[0].mxu0 %v386
      %v954 = vpop.f32.mrb[0].mxu0
      %v955 = vadd.f32 0.0, %v954
      %v956 = vpop.f32.mrb[0].mxu0
      %v957 = vadd.f32 0.0, %v956
      %v958 = vpop.f32.mrb[0].mxu0
      %v959 = vadd.f32 0.0, %v958
      %v960 = vpop.f32.mrb[0].mxu0
      %v961 = vadd.f32 0.0, %v960
      %962 = vmatprep.mubr.bf16.mxu0 0
      %963 = vmatmul.mubr.bf16.gmra.mrb[0].mxu0 %v389
      %v964 = vpop.f32.mrb[0].mxu0
      %v965 = vadd.f32 0.0, %v964
      %v966 = vpop.f32.mrb[0].mxu0
      %v967 = vadd.f32 0.0, %v966
      %v968 = vpop.f32.mrb[0].mxu0
      %v969 = vadd.f32 0.0, %v968
      %v970 = vpop.f32.mrb[0].mxu0
      %v971 = vadd.f32 0.0, %v970
      %972 = vmatprep.mubr.bf16.mxu0 0
      %973 = vmatmul.mubr.bf16.gmra.mrb[0].mxu0 %v392
      %v974 = vpop.f32.mrb[0].mxu0
      %v975 = vadd.f32 0.0, %v974
      %v976 = vpop.f32.mrb[0].mxu0
      %v977 = vadd.f32 0.0, %v976
      %v978 = vpop.f32.mrb[0].mxu0
      %v979 = vadd.f32 0.0, %v978
      %v980 = vpop.f32.mrb[0].mxu0
      %v981 = vadd.f32 0.0, %v980
      %982 = vmatprep.mubr.bf16.mxu0 0
      %983 = vmatmul.mubr.bf16.gmra.mrb[0].mxu0 %v395
      %v984 = vpop.f32.mrb[0].mxu0
      %v985 = vadd.f32 0.0, %v984
      %v986 = vpop.f32.mrb[0].mxu0
      %v987 = vadd.f32 0.0, %v986
      %v988 = vpop.f32.mrb[0].mxu0
      %v989 = vadd.f32 0.0, %v988
      %v990 = vpop.f32.mrb[0].mxu0
      %v991 = vadd.f32 0.0, %v990
      %992 = vmatprep.mubr.bf16.mxu0 0
      %993 = vmatmul.mubr.bf16.gmra.mrb[0].mxu0 %v398
      %v994 = vpop.f32.mrb[0].mxu0
      %v995 = vadd.f32 0.0, %v994
      %v996 = vpop.f32.mrb[0].mxu0
      %v997 = vadd.f32 0.0, %v996
      %v998 = vpop.f32.mrb[0].mxu0
      %v999 = vadd.f32 0.0, %v998
      %v1000 = vpop.f32.mrb[0].mxu0
      %v1001 = vadd.f32 0.0, %v1000
      %1002 = vmatprep.mubr.bf16.mxu0 0
      %1003 = vmatmul.mubr.bf16.gmra.mrb[0].mxu0 %v401
      %v1004 = vpop.f32.mrb[0].mxu0
      %v1005 = vadd.f32 0.0, %v1004
      %v1006 = vpop.f32.mrb[0].mxu0
      %v1007 = vadd.f32 0.0, %v1006
      %v1008 = vpop.f32.mrb[0].mxu0
      %v1009 = vadd.f32 0.0, %v1008
      %v1010 = vpop.f32.mrb[0].mxu0
      %v1011 = vadd.f32 0.0, %v1010
      %1012 = vmatprep.mubr.bf16.mxu0 0
      %1013 = vmatmul.mubr.bf16.gmra.mrb[0].mxu0 %v404
      %v1014 = vpop.f32.mrb[0].mxu0
      %v1015 = vadd.f32 0.0, %v1014
      %v1016 = vpop.f32.mrb[0].mxu0
      %v1017 = vadd.f32 0.0, %v1016
      %v1018 = vpop.f32.mrb[0].mxu0
      %v1019 = vadd.f32 0.0, %v1018
      %v1020 = vpop.f32.mrb[0].mxu0
      %v1021 = vadd.f32 0.0, %v1020
      %1022 = vmatprep.mubr.bf16.mxu0 0
      %1023 = vmatmul.mubr.bf16.gmra.mrb[0].mxu0 %v407
      %v1024 = vpop.f32.mrb[0].mxu0
      %v1025 = vadd.f32 0.0, %v1024
      %v1026 = vpop.f32.mrb[0].mxu0
      %v1027 = vadd.f32 0.0, %v1026
      %v1028 = vpop.f32.mrb[0].mxu0
      %v1029 = vadd.f32 0.0, %v1028
      %v1030 = vpop.f32.mrb[0].mxu0
      %v1031 = vadd.f32 0.0, %v1030
      %1032 = vmatprep.mubr.bf16.mxu0 0
      %1033 = vmatmul.mubr.bf16.gmra.mrb[0].mxu0 %v410
      %v1034 = vpop.f32.mrb[0].mxu0
      %v1035 = vadd.f32 0.0, %v1034
      %v1036 = vpop.f32.mrb[0].mxu0
      %v1037 = vadd.f32 0.0, %v1036
      %v1038 = vpop.f32.mrb[0].mxu0
      %v1039 = vadd.f32 0.0, %v1038
      %v1040 = vpop.f32.mrb[0].mxu0
      %v1041 = vadd.f32 0.0, %v1040
      %1042 = vdwg.mxu0
      %1043 = vmatprep.subr.bf16.mxu0 %v438
      %1044 = vmatpush1.bf16.msra.mxu0 %v435
      %1045 = vmatprep.subr.bf16.mxu0 0
      %1046 = vmatpush1.bf16.msra.mxu0 0
      %1047 = vmatprep.subr.bf16.mxu0 0
      %1048 = vmatpush1.bf16.msra.mxu0 0
      %1049 = vmatprep.subr.bf16.mxu0 0
      %1050 = vmatpush1.bf16.msra.mxu0 0
      %1051 = vmatprep.subr.bf16.mxu0 0
      %1052 = vmatpush1.bf16.msra.mxu0 0
      %1053 = vmatprep.subr.bf16.mxu0 0
      %1054 = vmatpush1.bf16.msra.mxu0 0
      %1055 = vmatprep.subr.bf16.mxu0 0
      %1056 = vmatpush1.bf16.msra.mxu0 0
      %1057 = vmatprep.subr.bf16.mxu0 0
      %1058 = vmatpush1.bf16.msra.mxu0 0
      %1059 = vmatprep.subr.bf16.mxu0 0
      %1060 = vmatpush1.bf16.msra.mxu0 0
      %1061 = vmatprep.subr.bf16.mxu0 0
      %1062 = vmatpush1.bf16.msra.mxu0 0
      %1063 = vmatprep.subr.bf16.mxu0 0
      %1064 = vmatpush1.bf16.msra.mxu0 0
      %1065 = vmatprep.subr.bf16.mxu0 0
      %1066 = vmatpush1.bf16.msra.mxu0 0
      %1067 = vmatprep.subr.bf16.mxu0 0
      %1068 = vmatpush1.bf16.msra.mxu0 0
      %1069 = vmatprep.subr.bf16.mxu0 0
      %1070 = vmatpush1.bf16.msra.mxu0 0
      %1071 = vmatprep.subr.bf16.mxu0 0
      %1072 = vmatpush1.bf16.msra.mxu0 0
      %1073 = vmatprep.subr.bf16.mxu0 0
      %1074 = vmatpush1.bf16.msra.mxu0 0
      %1075 = vmatprep.mubr.bf16.mxu0 0
      %1076 = vmatmul.mubr.bf16.gmra.mrb[0].mxu0 %v365
      %v1077 = vpop.f32.mrb[0].mxu0
      %v1078 = vadd.f32 0.0, %v1077
      %v1079 = vpop.f32.mrb[0].mxu0
      %v1080 = vadd.f32 0.0, %v1079
      %v1081 = vpop.f32.mrb[0].mxu0
      %v1082 = vadd.f32 0.0, %v1081
      %v1083 = vpop.f32.mrb[0].mxu0
      %v1084 = vadd.f32 0.0, %v1083
      %1085 = vmatprep.mubr.bf16.mxu0 0
      %1086 = vmatmul.mubr.bf16.gmra.mrb[0].mxu0 %v368
      %v1087 = vpop.f32.mrb[0].mxu0
      %v1088 = vadd.f32 0.0, %v1087
      %v1089 = vpop.f32.mrb[0].mxu0
      %v1090 = vadd.f32 0.0, %v1089
      %v1091 = vpop.f32.mrb[0].mxu0
      %v1092 = vadd.f32 0.0, %v1091
      %v1093 = vpop.f32.mrb[0].mxu0
      %v1094 = vadd.f32 0.0, %v1093
      %1095 = vmatprep.mubr.bf16.mxu0 0
      %1096 = vmatmul.mubr.bf16.gmra.mrb[0].mxu0 %v371
      %v1097 = vpop.f32.mrb[0].mxu0
      %v1098 = vadd.f32 0.0, %v1097
      %v1099 = vpop.f32.mrb[0].mxu0
      %v1100 = vadd.f32 0.0, %v1099
      %v1101 = vpop.f32.mrb[0].mxu0
      %v1102 = vadd.f32 0.0, %v1101
      %v1103 = vpop.f32.mrb[0].mxu0
      %v1104 = vadd.f32 0.0, %v1103
      %1105 = vmatprep.mubr.bf16.mxu0 0
      %1106 = vmatmul.mubr.bf16.gmra.mrb[0].mxu0 %v374
      %v1107 = vpop.f32.mrb[0].mxu0
      %v1108 = vadd.f32 0.0, %v1107
      %v1109 = vpop.f32.mrb[0].mxu0
      %v1110 = vadd.f32 0.0, %v1109
      %v1111 = vpop.f32.mrb[0].mxu0
      %v1112 = vadd.f32 0.0, %v1111
      %v1113 = vpop.f32.mrb[0].mxu0
      %v1114 = vadd.f32 0.0, %v1113
      %1115 = vmatprep.mubr.bf16.mxu0 0
      %1116 = vmatmul.mubr.bf16.gmra.mrb[0].mxu0 %v377
      %v1117 = vpop.f32.mrb[0].mxu0
      %v1118 = vadd.f32 0.0, %v1117
      %v1119 = vpop.f32.mrb[0].mxu0
      %v1120 = vadd.f32 0.0, %v1119
      %v1121 = vpop.f32.mrb[0].mxu0
      %v1122 = vadd.f32 0.0, %v1121
      %v1123 = vpop.f32.mrb[0].mxu0
      %v1124 = vadd.f32 0.0, %v1123
      %1125 = vmatprep.mubr.bf16.mxu0 0
      %1126 = vmatmul.mubr.bf16.gmra.mrb[0].mxu0 %v380
      %v1127 = vpop.f32.mrb[0].mxu0
      %v1128 = vadd.f32 0.0, %v1127
      %v1129 = vpop.f32.mrb[0].mxu0
      %v1130 = vadd.f32 0.0, %v1129
      %v1131 = vpop.f32.mrb[0].mxu0
      %v1132 = vadd.f32 0.0, %v1131
      %v1133 = vpop.f32.mrb[0].mxu0
      %v1134 = vadd.f32 0.0, %v1133
      %1135 = vmatprep.mubr.bf16.mxu0 0
      %1136 = vmatmul.mubr.bf16.gmra.mrb[0].mxu0 %v383
      %v1137 = vpop.f32.mrb[0].mxu0
      %v1138 = vadd.f32 0.0, %v1137
      %v1139 = vpop.f32.mrb[0].mxu0
      %v1140 = vadd.f32 0.0, %v1139
      %v1141 = vpop.f32.mrb[0].mxu0
      %v1142 = vadd.f32 0.0, %v1141
      %v1143 = vpop.f32.mrb[0].mxu0
      %v1144 = vadd.f32 0.0, %v1143
      %1145 = vmatprep.mubr.bf16.mxu0 0
      %1146 = vmatmul.mubr.bf16.gmra.mrb[0].mxu0 %v386
      %v1147 = vpop.f32.mrb[0].mxu0
      %v1148 = vadd.f32 0.0, %v1147
      %v1149 = vpop.f32.mrb[0].mxu0
      %v1150 = vadd.f32 0.0, %v1149
      %v1151 = vpop.f32.mrb[0].mxu0
      %v1152 = vadd.f32 0.0, %v1151
      %v1153 = vpop.f32.mrb[0].mxu0
      %v1154 = vadd.f32 0.0, %v1153
      %1155 = vmatprep.mubr.bf16.mxu0 0
      %1156 = vmatmul.mubr.bf16.gmra.mrb[0].mxu0 %v389
      %v1157 = vpop.f32.mrb[0].mxu0
      %v1158 = vadd.f32 0.0, %v1157
      %v1159 = vpop.f32.mrb[0].mxu0
      %v1160 = vadd.f32 0.0, %v1159
      %v1161 = vpop.f32.mrb[0].mxu0
      %v1162 = vadd.f32 0.0, %v1161
      %v1163 = vpop.f32.mrb[0].mxu0
      %v1164 = vadd.f32 0.0, %v1163
      %1165 = vmatprep.mubr.bf16.mxu0 0
      %1166 = vmatmul.mubr.bf16.gmra.mrb[0].mxu0 %v392
      %v1167 = vpop.f32.mrb[0].mxu0
      %v1168 = vadd.f32 0.0, %v1167
      %v1169 = vpop.f32.mrb[0].mxu0
      %v1170 = vadd.f32 0.0, %v1169
      %v1171 = vpop.f32.mrb[0].mxu0
      %v1172 = vadd.f32 0.0, %v1171
      %v1173 = vpop.f32.mrb[0].mxu0
      %v1174 = vadd.f32 0.0, %v1173
      %1175 = vmatprep.mubr.bf16.mxu0 0
      %1176 = vmatmul.mubr.bf16.gmra.mrb[0].mxu0 %v395
      %v1177 = vpop.f32.mrb[0].mxu0
      %v1178 = vadd.f32 0.0, %v1177
      %v1179 = vpop.f32.mrb[0].mxu0
      %v1180 = vadd.f32 0.0, %v1179
      %v1181 = vpop.f32.mrb[0].mxu0
      %v1182 = vadd.f32 0.0, %v1181
      %v1183 = vpop.f32.mrb[0].mxu0
      %v1184 = vadd.f32 0.0, %v1183
      %1185 = vmatprep.mubr.bf16.mxu0 0
      %1186 = vmatmul.mubr.bf16.gmra.mrb[0].mxu0 %v398
      %v1187 = vpop.f32.mrb[0].mxu0
      %v1188 = vadd.f32 0.0, %v1187
      %v1189 = vpop.f32.mrb[0].mxu0
      %v1190 = vadd.f32 0.0, %v1189
      %v1191 = vpop.f32.mrb[0].mxu0
      %v1192 = vadd.f32 0.0, %v1191
      %v1193 = vpop.f32.mrb[0].mxu0
      %v1194 = vadd.f32 0.0, %v1193
      %1195 = vmatprep.mubr.bf16.mxu0 0
      %1196 = vmatmul.mubr.bf16.gmra.mrb[0].mxu0 %v401
      %v1197 = vpop.f32.mrb[0].mxu0
      %v1198 = vadd.f32 0.0, %v1197
      %v1199 = vpop.f32.mrb[0].mxu0
      %v1200 = vadd.f32 0.0, %v1199
      %v1201 = vpop.f32.mrb[0].mxu0
      %v1202 = vadd.f32 0.0, %v1201
      %v1203 = vpop.f32.mrb[0].mxu0
      %v1204 = vadd.f32 0.0, %v1203
      %1205 = vmatprep.mubr.bf16.mxu0 0
      %1206 = vmatmul.mubr.bf16.gmra.mrb[0].mxu0 %v404
      %v1207 = vpop.f32.mrb[0].mxu0
      %v1208 = vadd.f32 0.0, %v1207
      %v1209 = vpop.f32.mrb[0].mxu0
      %v1210 = vadd.f32 0.0, %v1209
      %v1211 = vpop.f32.mrb[0].mxu0
      %v1212 = vadd.f32 0.0, %v1211
      %v1213 = vpop.f32.mrb[0].mxu0
      %v1214 = vadd.f32 0.0, %v1213
      %1215 = vmatprep.mubr.bf16.mxu0 0
      %1216 = vmatmul.mubr.bf16.gmra.mrb[0].mxu0 %v407
      %v1217 = vpop.f32.mrb[0].mxu0
      %v1218 = vadd.f32 0.0, %v1217
      %v1219 = vpop.f32.mrb[0].mxu0
      %v1220 = vadd.f32 0.0, %v1219
      %v1221 = vpop.f32.mrb[0].mxu0
      %v1222 = vadd.f32 0.0, %v1221
      %v1223 = vpop.f32.mrb[0].mxu0
      %v1224 = vadd.f32 0.0, %v1223
      %1225 = vmatprep.mubr.bf16.mxu0 0
      %1226 = vmatmul.mubr.bf16.gmra.mrb[0].mxu0 %v410
      %v1227 = vpop.f32.mrb[0].mxu0
      %v1228 = vadd.f32 0.0, %v1227
      %v1229 = vpop.f32.mrb[0].mxu0
      %v1230 = vadd.f32 0.0, %v1229
      %v1231 = vpop.f32.mrb[0].mxu0
      %v1232 = vadd.f32 0.0, %v1231
      %v1233 = vpop.f32.mrb[0].mxu0
      %v1234 = vadd.f32 0.0, %v1233
      %1235 = vdwg.mxu0
      %1236 = vmatprep.subr.bf16.mxu0 %v444
      %1237 = vmatpush1.bf16.msra.mxu0 %v441
      %1238 = vmatprep.subr.bf16.mxu0 0
      %1239 = vmatpush1.bf16.msra.mxu0 0
      %1240 = vmatprep.subr.bf16.mxu0 0
      %1241 = vmatpush1.bf16.msra.mxu0 0
      %1242 = vmatprep.subr.bf16.mxu0 0
      %1243 = vmatpush1.bf16.msra.mxu0 0
      %1244 = vmatprep.subr.bf16.mxu0 0
      %1245 = vmatpush1.bf16.msra.mxu0 0
      %1246 = vmatprep.subr.bf16.mxu0 0
      %1247 = vmatpush1.bf16.msra.mxu0 0
      %1248 = vmatprep.subr.bf16.mxu0 0
      %1249 = vmatpush1.bf16.msra.mxu0 0
      %1250 = vmatprep.subr.bf16.mxu0 0
      %1251 = vmatpush1.bf16.msra.mxu0 0
      %1252 = vmatprep.subr.bf16.mxu0 0
      %1253 = vmatpush1.bf16.msra.mxu0 0
      %1254 = vmatprep.subr.bf16.mxu0 0
      %1255 = vmatpush1.bf16.msra.mxu0 0
      %1256 = vmatprep.subr.bf16.mxu0 0
      %1257 = vmatpush1.bf16.msra.mxu0 0
      %1258 = vmatprep.subr.bf16.mxu0 0
      %1259 = vmatpush1.bf16.msra.mxu0 0
      %1260 = vmatprep.subr.bf16.mxu0 0
      %1261 = vmatpush1.bf16.msra.mxu0 0
      %1262 = vmatprep.subr.bf16.mxu0 0
      %1263 = vmatpush1.bf16.msra.mxu0 0
      %1264 = vmatprep.subr.bf16.mxu0 0
      %1265 = vmatpush1.bf16.msra.mxu0 0
      %1266 = vmatprep.subr.bf16.mxu0 0
      %1267 = vmatpush1.bf16.msra.mxu0 0
      %1268 = vmatprep.mubr.bf16.mxu0 0
      %1269 = vmatmul.mubr.bf16.gmra.mrb[0].mxu0 %v365
      %v1270 = vpop.f32.mrb[0].mxu0
      %v1271 = vadd.f32 0.0, %v1270
      %v1272 = vpop.f32.mrb[0].mxu0
      %v1273 = vadd.f32 0.0, %v1272
      %v1274 = vpop.f32.mrb[0].mxu0
      %v1275 = vadd.f32 0.0, %v1274
      %v1276 = vpop.f32.mrb[0].mxu0
      %v1277 = vadd.f32 0.0, %v1276
      %1278 = vmatprep.mubr.bf16.mxu0 0
      %1279 = vmatmul.mubr.bf16.gmra.mrb[0].mxu0 %v368
      %v1280 = vpop.f32.mrb[0].mxu0
      %v1281 = vadd.f32 0.0, %v1280
      %v1282 = vpop.f32.mrb[0].mxu0
      %v1283 = vadd.f32 0.0, %v1282
      %v1284 = vpop.f32.mrb[0].mxu0
      %v1285 = vadd.f32 0.0, %v1284
      %v1286 = vpop.f32.mrb[0].mxu0
      %v1287 = vadd.f32 0.0, %v1286
      %1288 = vmatprep.mubr.bf16.mxu0 0
      %1289 = vmatmul.mubr.bf16.gmra.mrb[0].mxu0 %v371
      %v1290 = vpop.f32.mrb[0].mxu0
      %v1291 = vadd.f32 0.0, %v1290
      %v1292 = vpop.f32.mrb[0].mxu0
      %v1293 = vadd.f32 0.0, %v1292
      %v1294 = vpop.f32.mrb[0].mxu0
      %v1295 = vadd.f32 0.0, %v1294
      %v1296 = vpop.f32.mrb[0].mxu0
      %v1297 = vadd.f32 0.0, %v1296
      %1298 = vmatprep.mubr.bf16.mxu0 0
      %1299 = vmatmul.mubr.bf16.gmra.mrb[0].mxu0 %v374
      %v1300 = vpop.f32.mrb[0].mxu0
      %v1301 = vadd.f32 0.0, %v1300
      %v1302 = vpop.f32.mrb[0].mxu0
      %v1303 = vadd.f32 0.0, %v1302
      %v1304 = vpop.f32.mrb[0].mxu0
      %v1305 = vadd.f32 0.0, %v1304
      %v1306 = vpop.f32.mrb[0].mxu0
      %v1307 = vadd.f32 0.0, %v1306
      %1308 = vmatprep.mubr.bf16.mxu0 0
      %1309 = vmatmul.mubr.bf16.gmra.mrb[0].mxu0 %v377
      %v1310 = vpop.f32.mrb[0].mxu0
      %v1311 = vadd.f32 0.0, %v1310
      %v1312 = vpop.f32.mrb[0].mxu0
      %v1313 = vadd.f32 0.0, %v1312
      %v1314 = vpop.f32.mrb[0].mxu0
      %v1315 = vadd.f32 0.0, %v1314
      %v1316 = vpop.f32.mrb[0].mxu0
      %v1317 = vadd.f32 0.0, %v1316
      %1318 = vmatprep.mubr.bf16.mxu0 0
      %1319 = vmatmul.mubr.bf16.gmra.mrb[0].mxu0 %v380
      %v1320 = vpop.f32.mrb[0].mxu0
      %v1321 = vadd.f32 0.0, %v1320
      %v1322 = vpop.f32.mrb[0].mxu0
      %v1323 = vadd.f32 0.0, %v1322
      %v1324 = vpop.f32.mrb[0].mxu0
      %v1325 = vadd.f32 0.0, %v1324
      %v1326 = vpop.f32.mrb[0].mxu0
      %v1327 = vadd.f32 0.0, %v1326
      %1328 = vmatprep.mubr.bf16.mxu0 0
      %1329 = vmatmul.mubr.bf16.gmra.mrb[0].mxu0 %v383
      %v1330 = vpop.f32.mrb[0].mxu0
      %v1331 = vadd.f32 0.0, %v1330
      %v1332 = vpop.f32.mrb[0].mxu0
      %v1333 = vadd.f32 0.0, %v1332
      %v1334 = vpop.f32.mrb[0].mxu0
      %v1335 = vadd.f32 0.0, %v1334
      %v1336 = vpop.f32.mrb[0].mxu0
      %v1337 = vadd.f32 0.0, %v1336
      %1338 = vmatprep.mubr.bf16.mxu0 0
      %1339 = vmatmul.mubr.bf16.gmra.mrb[0].mxu0 %v386
      %v1340 = vpop.f32.mrb[0].mxu0
      %v1341 = vadd.f32 0.0, %v1340
      %v1342 = vpop.f32.mrb[0].mxu0
      %v1343 = vadd.f32 0.0, %v1342
      %v1344 = vpop.f32.mrb[0].mxu0
      %v1345 = vadd.f32 0.0, %v1344
      %v1346 = vpop.f32.mrb[0].mxu0
      %v1347 = vadd.f32 0.0, %v1346
      %1348 = vmatprep.mubr.bf16.mxu0 0
      %1349 = vmatmul.mubr.bf16.gmra.mrb[0].mxu0 %v389
      %v1350 = vpop.f32.mrb[0].mxu0
      %v1351 = vadd.f32 0.0, %v1350
      %v1352 = vpop.f32.mrb[0].mxu0
      %v1353 = vadd.f32 0.0, %v1352
      %v1354 = vpop.f32.mrb[0].mxu0
      %v1355 = vadd.f32 0.0, %v1354
      %v1356 = vpop.f32.mrb[0].mxu0
      %v1357 = vadd.f32 0.0, %v1356
      %1358 = vmatprep.mubr.bf16.mxu0 0
      %1359 = vmatmul.mubr.bf16.gmra.mrb[0].mxu0 %v392
      %v1360 = vpop.f32.mrb[0].mxu0
      %v1361 = vadd.f32 0.0, %v1360
      %v1362 = vpop.f32.mrb[0].mxu0
      %v1363 = vadd.f32 0.0, %v1362
      %v1364 = vpop.f32.mrb[0].mxu0
      %v1365 = vadd.f32 0.0, %v1364
      %v1366 = vpop.f32.mrb[0].mxu0
      %v1367 = vadd.f32 0.0, %v1366
      %1368 = vmatprep.mubr.bf16.mxu0 0
      %1369 = vmatmul.mubr.bf16.gmra.mrb[0].mxu0 %v395
      %v1370 = vpop.f32.mrb[0].mxu0
      %v1371 = vadd.f32 0.0, %v1370
      %v1372 = vpop.f32.mrb[0].mxu0
      %v1373 = vadd.f32 0.0, %v1372
      %v1374 = vpop.f32.mrb[0].mxu0
      %v1375 = vadd.f32 0.0, %v1374
      %v1376 = vpop.f32.mrb[0].mxu0
      %v1377 = vadd.f32 0.0, %v1376
      %1378 = vmatprep.mubr.bf16.mxu0 0
      %1379 = vmatmul.mubr.bf16.gmra.mrb[0].mxu0 %v398
      %v1380 = vpop.f32.mrb[0].mxu0
      %v1381 = vadd.f32 0.0, %v1380
      %v1382 = vpop.f32.mrb[0].mxu0
      %v1383 = vadd.f32 0.0, %v1382
      %v1384 = vpop.f32.mrb[0].mxu0
      %v1385 = vadd.f32 0.0, %v1384
      %v1386 = vpop.f32.mrb[0].mxu0
      %v1387 = vadd.f32 0.0, %v1386
      %1388 = vmatprep.mubr.bf16.mxu0 0
      %1389 = vmatmul.mubr.bf16.gmra.mrb[0].mxu0 %v401
      %v1390 = vpop.f32.mrb[0].mxu0
      %v1391 = vadd.f32 0.0, %v1390
      %v1392 = vpop.f32.mrb[0].mxu0
      %v1393 = vadd.f32 0.0, %v1392
      %v1394 = vpop.f32.mrb[0].mxu0
      %v1395 = vadd.f32 0.0, %v1394
      %v1396 = vpop.f32.mrb[0].mxu0
      %v1397 = vadd.f32 0.0, %v1396
      %1398 = vmatprep.mubr.bf16.mxu0 0
      %1399 = vmatmul.mubr.bf16.gmra.mrb[0].mxu0 %v404
      %v1400 = vpop.f32.mrb[0].mxu0
      %v1401 = vadd.f32 0.0, %v1400
      %v1402 = vpop.f32.mrb[0].mxu0
      %v1403 = vadd.f32 0.0, %v1402
      %v1404 = vpop.f32.mrb[0].mxu0
      %v1405 = vadd.f32 0.0, %v1404
      %v1406 = vpop.f32.mrb[0].mxu0
      %v1407 = vadd.f32 0.0, %v1406
      %1408 = vmatprep.mubr.bf16.mxu0 0
      %1409 = vmatmul.mubr.bf16.gmra.mrb[0].mxu0 %v407
      %v1410 = vpop.f32.mrb[0].mxu0
      %v1411 = vadd.f32 0.0, %v1410
      %v1412 = vpop.f32.mrb[0].mxu0
      %v1413 = vadd.f32 0.0, %v1412
      %v1414 = vpop.f32.mrb[0].mxu0
      %v1415 = vadd.f32 0.0, %v1414
      %v1416 = vpop.f32.mrb[0].mxu0
      %v1417 = vadd.f32 0.0, %v1416
      %1418 = vmatprep.mubr.bf16.mxu0 0
      %1419 = vmatmul.mubr.bf16.gmra.mrb[0].mxu0 %v410
      %v1420 = vpop.f32.mrb[0].mxu0
      %v1421 = vadd.f32 0.0, %v1420
      %v1422 = vpop.f32.mrb[0].mxu0
      %v1423 = vadd.f32 0.0, %v1422
      %v1424 = vpop.f32.mrb[0].mxu0
      %v1425 = vadd.f32 0.0, %v1424
      %v1426 = vpop.f32.mrb[0].mxu0
      %v1427 = vadd.f32 0.0, %v1426
      %1428 = vdwg.mxu0
      %1429 = vmatprep.subr.bf16.mxu0 %v450
      %1430 = vmatpush1.bf16.msra.mxu0 %v447
      %1431 = vmatprep.subr.bf16.mxu0 0
      %1432 = vmatpush1.bf16.msra.mxu0 0
      %1433 = vmatprep.subr.bf16.mxu0 0
      %1434 = vmatpush1.bf16.msra.mxu0 0
      %1435 = vmatprep.subr.bf16.mxu0 0
      %1436 = vmatpush1.bf16.msra.mxu0 0
      %1437 = vmatprep.subr.bf16.mxu0 0
      %1438 = vmatpush1.bf16.msra.mxu0 0
      %1439 = vmatprep.subr.bf16.mxu0 0
      %1440 = vmatpush1.bf16.msra.mxu0 0
      %1441 = vmatprep.subr.bf16.mxu0 0
      %1442 = vmatpush1.bf16.msra.mxu0 0
      %1443 = vmatprep.subr.bf16.mxu0 0
      %1444 = vmatpush1.bf16.msra.mxu0 0
      %1445 = vmatprep.subr.bf16.mxu0 0
      %1446 = vmatpush1.bf16.msra.mxu0 0
      %1447 = vmatprep.subr.bf16.mxu0 0
      %1448 = vmatpush1.bf16.msra.mxu0 0
      %1449 = vmatprep.subr.bf16.mxu0 0
      %1450 = vmatpush1.bf16.msra.mxu0 0
      %1451 = vmatprep.subr.bf16.mxu0 0
      %1452 = vmatpush1.bf16.msra.mxu0 0
      %1453 = vmatprep.subr.bf16.mxu0 0
      %1454 = vmatpush1.bf16.msra.mxu0 0
      %1455 = vmatprep.subr.bf16.mxu0 0
      %1456 = vmatpush1.bf16.msra.mxu0 0
      %1457 = vmatprep.subr.bf16.mxu0 0
      %1458 = vmatpush1.bf16.msra.mxu0 0
      %1459 = vmatprep.subr.bf16.mxu0 0
      %1460 = vmatpush1.bf16.msra.mxu0 0
      %1461 = vmatprep.mubr.bf16.mxu0 0
      %1462 = vmatmul.mubr.bf16.gmra.mrb[0].mxu0 %v365
      %v1463 = vpop.f32.mrb[0].mxu0
      %v1464 = vadd.f32 0.0, %v1463
      %v1465 = vpop.f32.mrb[0].mxu0
      %v1466 = vadd.f32 0.0, %v1465
      %v1467 = vpop.f32.mrb[0].mxu0
      %v1468 = vadd.f32 0.0, %v1467
      %v1469 = vpop.f32.mrb[0].mxu0
      %v1470 = vadd.f32 0.0, %v1469
      %1471 = vmatprep.mubr.bf16.mxu0 0
      %1472 = vmatmul.mubr.bf16.gmra.mrb[0].mxu0 %v368
      %v1473 = vpop.f32.mrb[0].mxu0
      %v1474 = vadd.f32 0.0, %v1473
      %v1475 = vpop.f32.mrb[0].mxu0
      %v1476 = vadd.f32 0.0, %v1475
      %v1477 = vpop.f32.mrb[0].mxu0
      %v1478 = vadd.f32 0.0, %v1477
      %v1479 = vpop.f32.mrb[0].mxu0
      %v1480 = vadd.f32 0.0, %v1479
      %1481 = vmatprep.mubr.bf16.mxu0 0
      %1482 = vmatmul.mubr.bf16.gmra.mrb[0].mxu0 %v371
      %v1483 = vpop.f32.mrb[0].mxu0
      %v1484 = vadd.f32 0.0, %v1483
      %v1485 = vpop.f32.mrb[0].mxu0
      %v1486 = vadd.f32 0.0, %v1485
      %v1487 = vpop.f32.mrb[0].mxu0
      %v1488 = vadd.f32 0.0, %v1487
      %v1489 = vpop.f32.mrb[0].mxu0
      %v1490 = vadd.f32 0.0, %v1489
      %1491 = vmatprep.mubr.bf16.mxu0 0
      %1492 = vmatmul.mubr.bf16.gmra.mrb[0].mxu0 %v374
      %v1493 = vpop.f32.mrb[0].mxu0
      %v1494 = vadd.f32 0.0, %v1493
      %v1495 = vpop.f32.mrb[0].mxu0
      %v1496 = vadd.f32 0.0, %v1495
      %v1497 = vpop.f32.mrb[0].mxu0
      %v1498 = vadd.f32 0.0, %v1497
      %v1499 = vpop.f32.mrb[0].mxu0
      %v1500 = vadd.f32 0.0, %v1499
      %1501 = vmatprep.mubr.bf16.mxu0 0
      %1502 = vmatmul.mubr.bf16.gmra.mrb[0].mxu0 %v377
      %v1503 = vpop.f32.mrb[0].mxu0
      %v1504 = vadd.f32 0.0, %v1503
      %v1505 = vpop.f32.mrb[0].mxu0
      %v1506 = vadd.f32 0.0, %v1505
      %v1507 = vpop.f32.mrb[0].mxu0
      %v1508 = vadd.f32 0.0, %v1507
      %v1509 = vpop.f32.mrb[0].mxu0
      %v1510 = vadd.f32 0.0, %v1509
      %1511 = vmatprep.mubr.bf16.mxu0 0
      %1512 = vmatmul.mubr.bf16.gmra.mrb[0].mxu0 %v380
      %v1513 = vpop.f32.mrb[0].mxu0
      %v1514 = vadd.f32 0.0, %v1513
      %v1515 = vpop.f32.mrb[0].mxu0
      %v1516 = vadd.f32 0.0, %v1515
      %v1517 = vpop.f32.mrb[0].mxu0
      %v1518 = vadd.f32 0.0, %v1517
      %v1519 = vpop.f32.mrb[0].mxu0
      %v1520 = vadd.f32 0.0, %v1519
      %1521 = vmatprep.mubr.bf16.mxu0 0
      %1522 = vmatmul.mubr.bf16.gmra.mrb[0].mxu0 %v383
      %v1523 = vpop.f32.mrb[0].mxu0
      %v1524 = vadd.f32 0.0, %v1523
      %v1525 = vpop.f32.mrb[0].mxu0
      %v1526 = vadd.f32 0.0, %v1525
      %v1527 = vpop.f32.mrb[0].mxu0
      %v1528 = vadd.f32 0.0, %v1527
      %v1529 = vpop.f32.mrb[0].mxu0
      %v1530 = vadd.f32 0.0, %v1529
      %1531 = vmatprep.mubr.bf16.mxu0 0
      %1532 = vmatmul.mubr.bf16.gmra.mrb[0].mxu0 %v386
      %v1533 = vpop.f32.mrb[0].mxu0
      %v1534 = vadd.f32 0.0, %v1533
      %v1535 = vpop.f32.mrb[0].mxu0
      %v1536 = vadd.f32 0.0, %v1535
      %v1537 = vpop.f32.mrb[0].mxu0
      %v1538 = vadd.f32 0.0, %v1537
      %v1539 = vpop.f32.mrb[0].mxu0
      %v1540 = vadd.f32 0.0, %v1539
      %1541 = vmatprep.mubr.bf16.mxu0 0
      %1542 = vmatmul.mubr.bf16.gmra.mrb[0].mxu0 %v389
      %v1543 = vpop.f32.mrb[0].mxu0
      %v1544 = vadd.f32 0.0, %v1543
      %v1545 = vpop.f32.mrb[0].mxu0
      %v1546 = vadd.f32 0.0, %v1545
      %v1547 = vpop.f32.mrb[0].mxu0
      %v1548 = vadd.f32 0.0, %v1547
      %v1549 = vpop.f32.mrb[0].mxu0
      %v1550 = vadd.f32 0.0, %v1549
      %1551 = vmatprep.mubr.bf16.mxu0 0
      %1552 = vmatmul.mubr.bf16.gmra.mrb[0].mxu0 %v392
      %v1553 = vpop.f32.mrb[0].mxu0
      %v1554 = vadd.f32 0.0, %v1553
      %v1555 = vpop.f32.mrb[0].mxu0
      %v1556 = vadd.f32 0.0, %v1555
      %v1557 = vpop.f32.mrb[0].mxu0
      %v1558 = vadd.f32 0.0, %v1557
      %v1559 = vpop.f32.mrb[0].mxu0
      %v1560 = vadd.f32 0.0, %v1559
      %1561 = vmatprep.mubr.bf16.mxu0 0
      %1562 = vmatmul.mubr.bf16.gmra.mrb[0].mxu0 %v395
      %v1563 = vpop.f32.mrb[0].mxu0
      %v1564 = vadd.f32 0.0, %v1563
      %v1565 = vpop.f32.mrb[0].mxu0
      %v1566 = vadd.f32 0.0, %v1565
      %v1567 = vpop.f32.mrb[0].mxu0
      %v1568 = vadd.f32 0.0, %v1567
      %v1569 = vpop.f32.mrb[0].mxu0
      %v1570 = vadd.f32 0.0, %v1569
      %1571 = vmatprep.mubr.bf16.mxu0 0
      %1572 = vmatmul.mubr.bf16.gmra.mrb[0].mxu0 %v398
      %v1573 = vpop.f32.mrb[0].mxu0
      %v1574 = vadd.f32 0.0, %v1573
      %v1575 = vpop.f32.mrb[0].mxu0
      %v1576 = vadd.f32 0.0, %v1575
      %v1577 = vpop.f32.mrb[0].mxu0
      %v1578 = vadd.f32 0.0, %v1577
      %v1579 = vpop.f32.mrb[0].mxu0
      %v1580 = vadd.f32 0.0, %v1579
      %1581 = vmatprep.mubr.bf16.mxu0 0
      %1582 = vmatmul.mubr.bf16.gmra.mrb[0].mxu0 %v401
      %v1583 = vpop.f32.mrb[0].mxu0
      %v1584 = vadd.f32 0.0, %v1583
      %v1585 = vpop.f32.mrb[0].mxu0
      %v1586 = vadd.f32 0.0, %v1585
      %v1587 = vpop.f32.mrb[0].mxu0
      %v1588 = vadd.f32 0.0, %v1587
      %v1589 = vpop.f32.mrb[0].mxu0
      %v1590 = vadd.f32 0.0, %v1589
      %1591 = vmatprep.mubr.bf16.mxu0 0
      %1592 = vmatmul.mubr.bf16.gmra.mrb[0].mxu0 %v404
      %v1593 = vpop.f32.mrb[0].mxu0
      %v1594 = vadd.f32 0.0, %v1593
      %v1595 = vpop.f32.mrb[0].mxu0
      %v1596 = vadd.f32 0.0, %v1595
      %v1597 = vpop.f32.mrb[0].mxu0
      %v1598 = vadd.f32 0.0, %v1597
      %v1599 = vpop.f32.mrb[0].mxu0
      %v1600 = vadd.f32 0.0, %v1599
      %1601 = vmatprep.mubr.bf16.mxu0 0
      %1602 = vmatmul.mubr.bf16.gmra.mrb[0].mxu0 %v407
      %v1603 = vpop.f32.mrb[0].mxu0
      %v1604 = vadd.f32 0.0, %v1603
      %v1605 = vpop.f32.mrb[0].mxu0
      %v1606 = vadd.f32 0.0, %v1605
      %v1607 = vpop.f32.mrb[0].mxu0
      %v1608 = vadd.f32 0.0, %v1607
      %v1609 = vpop.f32.mrb[0].mxu0
      %v1610 = vadd.f32 0.0, %v1609
      %1611 = vmatprep.mubr.bf16.mxu0 0
      %1612 = vmatmul.mubr.bf16.gmra.mrb[0].mxu0 %v410
      %v1613 = vpop.f32.mrb[0].mxu0
      %v1614 = vadd.f32 0.0, %v1613
      %v1615 = vpop.f32.mrb[0].mxu0
      %v1616 = vadd.f32 0.0, %v1615
      %v1617 = vpop.f32.mrb[0].mxu0
      %v1618 = vadd.f32 0.0, %v1617
      %v1619 = vpop.f32.mrb[0].mxu0
      %v1620 = vadd.f32 0.0, %v1619
      %1621 = vdwg.mxu0
      %1622 = vmatprep.subr.bf16.mxu0 %v456
      %1623 = vmatpush1.bf16.msra.mxu0 %v453
      %1624 = vmatprep.subr.bf16.mxu0 0
      %1625 = vmatpush1.bf16.msra.mxu0 0
      %1626 = vmatprep.subr.bf16.mxu0 0
      %1627 = vmatpush1.bf16.msra.mxu0 0
      %1628 = vmatprep.subr.bf16.mxu0 0
      %1629 = vmatpush1.bf16.msra.mxu0 0
      %1630 = vmatprep.subr.bf16.mxu0 0
      %1631 = vmatpush1.bf16.msra.mxu0 0
      %1632 = vmatprep.subr.bf16.mxu0 0
      %1633 = vmatpush1.bf16.msra.mxu0 0
      %1634 = vmatprep.subr.bf16.mxu0 0
      %1635 = vmatpush1.bf16.msra.mxu0 0
      %1636 = vmatprep.subr.bf16.mxu0 0
      %1637 = vmatpush1.bf16.msra.mxu0 0
      %1638 = vmatprep.subr.bf16.mxu0 0
      %1639 = vmatpush1.bf16.msra.mxu0 0
      %1640 = vmatprep.subr.bf16.mxu0 0
      %1641 = vmatpush1.bf16.msra.mxu0 0
      %1642 = vmatprep.subr.bf16.mxu0 0
      %1643 = vmatpush1.bf16.msra.mxu0 0
      %1644 = vmatprep.subr.bf16.mxu0 0
      %1645 = vmatpush1.bf16.msra.mxu0 0
      %1646 = vmatprep.subr.bf16.mxu0 0
      %1647 = vmatpush1.bf16.msra.mxu0 0
      %1648 = vmatprep.subr.bf16.mxu0 0
      %1649 = vmatpush1.bf16.msra.mxu0 0
      %1650 = vmatprep.subr.bf16.mxu0 0
      %1651 = vmatpush1.bf16.msra.mxu0 0
      %1652 = vmatprep.subr.bf16.mxu0 0
      %1653 = vmatpush1.bf16.msra.mxu0 0
      %1654 = vmatprep.mubr.bf16.mxu0 0
      %1655 = vmatmul.mubr.bf16.gmra.mrb[0].mxu0 %v365
      %v1656 = vpop.f32.mrb[0].mxu0
      %v1657 = vadd.f32 0.0, %v1656
      %v1658 = vpop.f32.mrb[0].mxu0
      %v1659 = vadd.f32 0.0, %v1658
      %v1660 = vpop.f32.mrb[0].mxu0
      %v1661 = vadd.f32 0.0, %v1660
      %v1662 = vpop.f32.mrb[0].mxu0
      %v1663 = vadd.f32 0.0, %v1662
      %1664 = vmatprep.mubr.bf16.mxu0 0
      %1665 = vmatmul.mubr.bf16.gmra.mrb[0].mxu0 %v368
      %v1666 = vpop.f32.mrb[0].mxu0
      %v1667 = vadd.f32 0.0, %v1666
      %v1668 = vpop.f32.mrb[0].mxu0
      %v1669 = vadd.f32 0.0, %v1668
      %v1670 = vpop.f32.mrb[0].mxu0
      %v1671 = vadd.f32 0.0, %v1670
      %v1672 = vpop.f32.mrb[0].mxu0
      %v1673 = vadd.f32 0.0, %v1672
      %1674 = vmatprep.mubr.bf16.mxu0 0
      %1675 = vmatmul.mubr.bf16.gmra.mrb[0].mxu0 %v371
      %v1676 = vpop.f32.mrb[0].mxu0
      %v1677 = vadd.f32 0.0, %v1676
      %v1678 = vpop.f32.mrb[0].mxu0
      %v1679 = vadd.f32 0.0, %v1678
      %v1680 = vpop.f32.mrb[0].mxu0
      %v1681 = vadd.f32 0.0, %v1680
      %v1682 = vpop.f32.mrb[0].mxu0
      %v1683 = vadd.f32 0.0, %v1682
      %1684 = vmatprep.mubr.bf16.mxu0 0
      %1685 = vmatmul.mubr.bf16.gmra.mrb[0].mxu0 %v374
      %v1686 = vpop.f32.mrb[0].mxu0
      %v1687 = vadd.f32 0.0, %v1686
      %v1688 = vpop.f32.mrb[0].mxu0
      %v1689 = vadd.f32 0.0, %v1688
      %v1690 = vpop.f32.mrb[0].mxu0
      %v1691 = vadd.f32 0.0, %v1690
      %v1692 = vpop.f32.mrb[0].mxu0
      %v1693 = vadd.f32 0.0, %v1692
      %1694 = vmatprep.mubr.bf16.mxu0 0
      %1695 = vmatmul.mubr.bf16.gmra.mrb[0].mxu0 %v377
      %v1696 = vpop.f32.mrb[0].mxu0
      %v1697 = vadd.f32 0.0, %v1696
      %v1698 = vpop.f32.mrb[0].mxu0
      %v1699 = vadd.f32 0.0, %v1698
      %v1700 = vpop.f32.mrb[0].mxu0
      %v1701 = vadd.f32 0.0, %v1700
      %v1702 = vpop.f32.mrb[0].mxu0
      %v1703 = vadd.f32 0.0, %v1702
      %1704 = vmatprep.mubr.bf16.mxu0 0
      %1705 = vmatmul.mubr.bf16.gmra.mrb[0].mxu0 %v380
      %v1706 = vpop.f32.mrb[0].mxu0
      %v1707 = vadd.f32 0.0, %v1706
      %v1708 = vpop.f32.mrb[0].mxu0
      %v1709 = vadd.f32 0.0, %v1708
      %v1710 = vpop.f32.mrb[0].mxu0
      %v1711 = vadd.f32 0.0, %v1710
      %v1712 = vpop.f32.mrb[0].mxu0
      %v1713 = vadd.f32 0.0, %v1712
      %1714 = vmatprep.mubr.bf16.mxu0 0
      %1715 = vmatmul.mubr.bf16.gmra.mrb[0].mxu0 %v383
      %v1716 = vpop.f32.mrb[0].mxu0
      %v1717 = vadd.f32 0.0, %v1716
      %v1718 = vpop.f32.mrb[0].mxu0
      %v1719 = vadd.f32 0.0, %v1718
      %v1720 = vpop.f32.mrb[0].mxu0
      %v1721 = vadd.f32 0.0, %v1720
      %v1722 = vpop.f32.mrb[0].mxu0
      %v1723 = vadd.f32 0.0, %v1722
      %1724 = vmatprep.mubr.bf16.mxu0 0
      %1725 = vmatmul.mubr.bf16.gmra.mrb[0].mxu0 %v386
      %v1726 = vpop.f32.mrb[0].mxu0
      %v1727 = vadd.f32 0.0, %v1726
      %v1728 = vpop.f32.mrb[0].mxu0
      %v1729 = vadd.f32 0.0, %v1728
      %v1730 = vpop.f32.mrb[0].mxu0
      %v1731 = vadd.f32 0.0, %v1730
      %v1732 = vpop.f32.mrb[0].mxu0
      %v1733 = vadd.f32 0.0, %v1732
      %1734 = vmatprep.mubr.bf16.mxu0 0
      %1735 = vmatmul.mubr.bf16.gmra.mrb[0].mxu0 %v389
      %v1736 = vpop.f32.mrb[0].mxu0
      %v1737 = vadd.f32 0.0, %v1736
      %v1738 = vpop.f32.mrb[0].mxu0
      %v1739 = vadd.f32 0.0, %v1738
      %v1740 = vpop.f32.mrb[0].mxu0
      %v1741 = vadd.f32 0.0, %v1740
      %v1742 = vpop.f32.mrb[0].mxu0
      %v1743 = vadd.f32 0.0, %v1742
      %1744 = vmatprep.mubr.bf16.mxu0 0
      %1745 = vmatmul.mubr.bf16.gmra.mrb[0].mxu0 %v392
      %v1746 = vpop.f32.mrb[0].mxu0
      %v1747 = vadd.f32 0.0, %v1746
      %v1748 = vpop.f32.mrb[0].mxu0
      %v1749 = vadd.f32 0.0, %v1748
      %v1750 = vpop.f32.mrb[0].mxu0
      %v1751 = vadd.f32 0.0, %v1750
      %v1752 = vpop.f32.mrb[0].mxu0
      %v1753 = vadd.f32 0.0, %v1752
      %1754 = vmatprep.mubr.bf16.mxu0 0
      %1755 = vmatmul.mubr.bf16.gmra.mrb[0].mxu0 %v395
      %v1756 = vpop.f32.mrb[0].mxu0
      %v1757 = vadd.f32 0.0, %v1756
      %v1758 = vpop.f32.mrb[0].mxu0
      %v1759 = vadd.f32 0.0, %v1758
      %v1760 = vpop.f32.mrb[0].mxu0
      %v1761 = vadd.f32 0.0, %v1760
      %v1762 = vpop.f32.mrb[0].mxu0
      %v1763 = vadd.f32 0.0, %v1762
      %1764 = vmatprep.mubr.bf16.mxu0 0
      %1765 = vmatmul.mubr.bf16.gmra.mrb[0].mxu0 %v398
      %v1766 = vpop.f32.mrb[0].mxu0
      %v1767 = vadd.f32 0.0, %v1766
      %v1768 = vpop.f32.mrb[0].mxu0
      %v1769 = vadd.f32 0.0, %v1768
      %v1770 = vpop.f32.mrb[0].mxu0
      %v1771 = vadd.f32 0.0, %v1770
      %v1772 = vpop.f32.mrb[0].mxu0
      %v1773 = vadd.f32 0.0, %v1772
      %1774 = vmatprep.mubr.bf16.mxu0 0
      %1775 = vmatmul.mubr.bf16.gmra.mrb[0].mxu0 %v401
      %v1776 = vpop.f32.mrb[0].mxu0
      %v1777 = vadd.f32 0.0, %v1776
      %v1778 = vpop.f32.mrb[0].mxu0
      %v1779 = vadd.f32 0.0, %v1778
      %v1780 = vpop.f32.mrb[0].mxu0
      %v1781 = vadd.f32 0.0, %v1780
      %v1782 = vpop.f32.mrb[0].mxu0
      %v1783 = vadd.f32 0.0, %v1782
      %1784 = vmatprep.mubr.bf16.mxu0 0
      %1785 = vmatmul.mubr.bf16.gmra.mrb[0].mxu0 %v404
      %v1786 = vpop.f32.mrb[0].mxu0
      %v1787 = vadd.f32 0.0, %v1786
      %v1788 = vpop.f32.mrb[0].mxu0
      %v1789 = vadd.f32 0.0, %v1788
      %v1790 = vpop.f32.mrb[0].mxu0
      %v1791 = vadd.f32 0.0, %v1790
      %v1792 = vpop.f32.mrb[0].mxu0
      %v1793 = vadd.f32 0.0, %v1792
      %1794 = vmatprep.mubr.bf16.mxu0 0
      %1795 = vmatmul.mubr.bf16.gmra.mrb[0].mxu0 %v407
      %v1796 = vpop.f32.mrb[0].mxu0
      %v1797 = vadd.f32 0.0, %v1796
      %v1798 = vpop.f32.mrb[0].mxu0
      %v1799 = vadd.f32 0.0, %v1798
      %v1800 = vpop.f32.mrb[0].mxu0
      %v1801 = vadd.f32 0.0, %v1800
      %v1802 = vpop.f32.mrb[0].mxu0
      %v1803 = vadd.f32 0.0, %v1802
      %1804 = vmatprep.mubr.bf16.mxu0 0
      %1805 = vmatmul.mubr.bf16.gmra.mrb[0].mxu0 %v410
      %v1806 = vpop.f32.mrb[0].mxu0
      %v1807 = vadd.f32 0.0, %v1806
      %v1808 = vpop.f32.mrb[0].mxu0
      %v1809 = vadd.f32 0.0, %v1808
      %v1810 = vpop.f32.mrb[0].mxu0
      %v1811 = vadd.f32 0.0, %v1810
      %v1812 = vpop.f32.mrb[0].mxu0
      %v1813 = vadd.f32 0.0, %v1812
      %1814 = vdwg.mxu0
      %1815 = vmatprep.subr.bf16.mxu0 %v462
      %1816 = vmatpush1.bf16.msra.mxu0 %v459
      %1817 = vmatprep.subr.bf16.mxu0 0
      %1818 = vmatpush1.bf16.msra.mxu0 0
      %1819 = vmatprep.subr.bf16.mxu0 0
      %1820 = vmatpush1.bf16.msra.mxu0 0
      %1821 = vmatprep.subr.bf16.mxu0 0
      %1822 = vmatpush1.bf16.msra.mxu0 0
      %1823 = vmatprep.subr.bf16.mxu0 0
      %1824 = vmatpush1.bf16.msra.mxu0 0
      %1825 = vmatprep.subr.bf16.mxu0 0
      %1826 = vmatpush1.bf16.msra.mxu0 0
      %1827 = vmatprep.subr.bf16.mxu0 0
      %1828 = vmatpush1.bf16.msra.mxu0 0
      %1829 = vmatprep.subr.bf16.mxu0 0
      %1830 = vmatpush1.bf16.msra.mxu0 0
      %1831 = vmatprep.subr.bf16.mxu0 0
      %1832 = vmatpush1.bf16.msra.mxu0 0
      %1833 = vmatprep.subr.bf16.mxu0 0
      %1834 = vmatpush1.bf16.msra.mxu0 0
      %1835 = vmatprep.subr.bf16.mxu0 0
      %1836 = vmatpush1.bf16.msra.mxu0 0
      %1837 = vmatprep.subr.bf16.mxu0 0
      %1838 = vmatpush1.bf16.msra.mxu0 0
      %1839 = vmatprep.subr.bf16.mxu0 0
      %1840 = vmatpush1.bf16.msra.mxu0 0
      %1841 = vmatprep.subr.bf16.mxu0 0
      %1842 = vmatpush1.bf16.msra.mxu0 0
      %1843 = vmatprep.subr.bf16.mxu0 0
      %1844 = vmatpush1.bf16.msra.mxu0 0
      %1845 = vmatprep.subr.bf16.mxu0 0
      %1846 = vmatpush1.bf16.msra.mxu0 0
      %1847 = vmatprep.mubr.bf16.mxu0 0
      %1848 = vmatmul.mubr.bf16.gmra.mrb[0].mxu0 %v365
      %v1849 = vpop.f32.mrb[0].mxu0
      %v1850 = vadd.f32 0.0, %v1849
      %v1851 = vpop.f32.mrb[0].mxu0
      %v1852 = vadd.f32 0.0, %v1851
      %v1853 = vpop.f32.mrb[0].mxu0
      %v1854 = vadd.f32 0.0, %v1853
      %v1855 = vpop.f32.mrb[0].mxu0
      %v1856 = vadd.f32 0.0, %v1855
      %1857 = vmatprep.mubr.bf16.mxu0 0
      %1858 = vmatmul.mubr.bf16.gmra.mrb[0].mxu0 %v368
      %v1859 = vpop.f32.mrb[0].mxu0
      %v1860 = vadd.f32 0.0, %v1859
      %v1861 = vpop.f32.mrb[0].mxu0
      %v1862 = vadd.f32 0.0, %v1861
      %v1863 = vpop.f32.mrb[0].mxu0
      %v1864 = vadd.f32 0.0, %v1863
      %v1865 = vpop.f32.mrb[0].mxu0
      %v1866 = vadd.f32 0.0, %v1865
      %1867 = vmatprep.mubr.bf16.mxu0 0
      %1868 = vmatmul.mubr.bf16.gmra.mrb[0].mxu0 %v371
      %v1869 = vpop.f32.mrb[0].mxu0
      %v1870 = vadd.f32 0.0, %v1869
      %v1871 = vpop.f32.mrb[0].mxu0
      %v1872 = vadd.f32 0.0, %v1871
      %v1873 = vpop.f32.mrb[0].mxu0
      %v1874 = vadd.f32 0.0, %v1873
      %v1875 = vpop.f32.mrb[0].mxu0
      %v1876 = vadd.f32 0.0, %v1875
      %1877 = vmatprep.mubr.bf16.mxu0 0
      %1878 = vmatmul.mubr.bf16.gmra.mrb[0].mxu0 %v374
      %v1879 = vpop.f32.mrb[0].mxu0
      %v1880 = vadd.f32 0.0, %v1879
      %v1881 = vpop.f32.mrb[0].mxu0
      %v1882 = vadd.f32 0.0, %v1881
      %v1883 = vpop.f32.mrb[0].mxu0
      %v1884 = vadd.f32 0.0, %v1883
      %v1885 = vpop.f32.mrb[0].mxu0
      %v1886 = vadd.f32 0.0, %v1885
      %1887 = vmatprep.mubr.bf16.mxu0 0
      %1888 = vmatmul.mubr.bf16.gmra.mrb[0].mxu0 %v377
      %v1889 = vpop.f32.mrb[0].mxu0
      %v1890 = vadd.f32 0.0, %v1889
      %v1891 = vpop.f32.mrb[0].mxu0
      %v1892 = vadd.f32 0.0, %v1891
      %v1893 = vpop.f32.mrb[0].mxu0
      %v1894 = vadd.f32 0.0, %v1893
      %v1895 = vpop.f32.mrb[0].mxu0
      %v1896 = vadd.f32 0.0, %v1895
      %1897 = vmatprep.mubr.bf16.mxu0 0
      %1898 = vmatmul.mubr.bf16.gmra.mrb[0].mxu0 %v380
      %v1899 = vpop.f32.mrb[0].mxu0
      %v1900 = vadd.f32 0.0, %v1899
      %v1901 = vpop.f32.mrb[0].mxu0
      %v1902 = vadd.f32 0.0, %v1901
      %v1903 = vpop.f32.mrb[0].mxu0
      %v1904 = vadd.f32 0.0, %v1903
      %v1905 = vpop.f32.mrb[0].mxu0
      %v1906 = vadd.f32 0.0, %v1905
      %1907 = vmatprep.mubr.bf16.mxu0 0
      %1908 = vmatmul.mubr.bf16.gmra.mrb[0].mxu0 %v383
      %v1909 = vpop.f32.mrb[0].mxu0
      %v1910 = vadd.f32 0.0, %v1909
      %v1911 = vpop.f32.mrb[0].mxu0
      %v1912 = vadd.f32 0.0, %v1911
      %v1913 = vpop.f32.mrb[0].mxu0
      %v1914 = vadd.f32 0.0, %v1913
      %v1915 = vpop.f32.mrb[0].mxu0
      %v1916 = vadd.f32 0.0, %v1915
      %1917 = vmatprep.mubr.bf16.mxu0 0
      %1918 = vmatmul.mubr.bf16.gmra.mrb[0].mxu0 %v386
      %v1919 = vpop.f32.mrb[0].mxu0
      %v1920 = vadd.f32 0.0, %v1919
      %v1921 = vpop.f32.mrb[0].mxu0
      %v1922 = vadd.f32 0.0, %v1921
      %v1923 = vpop.f32.mrb[0].mxu0
      %v1924 = vadd.f32 0.0, %v1923
      %v1925 = vpop.f32.mrb[0].mxu0
      %v1926 = vadd.f32 0.0, %v1925
      %1927 = vmatprep.mubr.bf16.mxu0 0
      %1928 = vmatmul.mubr.bf16.gmra.mrb[0].mxu0 %v389
      %v1929 = vpop.f32.mrb[0].mxu0
      %v1930 = vadd.f32 0.0, %v1929
      %v1931 = vpop.f32.mrb[0].mxu0
      %v1932 = vadd.f32 0.0, %v1931
      %v1933 = vpop.f32.mrb[0].mxu0
      %v1934 = vadd.f32 0.0, %v1933
      %v1935 = vpop.f32.mrb[0].mxu0
      %v1936 = vadd.f32 0.0, %v1935
      %1937 = vmatprep.mubr.bf16.mxu0 0
      %1938 = vmatmul.mubr.bf16.gmra.mrb[0].mxu0 %v392
      %v1939 = vpop.f32.mrb[0].mxu0
      %v1940 = vadd.f32 0.0, %v1939
      %v1941 = vpop.f32.mrb[0].mxu0
      %v1942 = vadd.f32 0.0, %v1941
      %v1943 = vpop.f32.mrb[0].mxu0
      %v1944 = vadd.f32 0.0, %v1943
      %v1945 = vpop.f32.mrb[0].mxu0
      %v1946 = vadd.f32 0.0, %v1945
      %1947 = vmatprep.mubr.bf16.mxu0 0
      %1948 = vmatmul.mubr.bf16.gmra.mrb[0].mxu0 %v395
      %v1949 = vpop.f32.mrb[0].mxu0
      %v1950 = vadd.f32 0.0, %v1949
      %v1951 = vpop.f32.mrb[0].mxu0
      %v1952 = vadd.f32 0.0, %v1951
      %v1953 = vpop.f32.mrb[0].mxu0
      %v1954 = vadd.f32 0.0, %v1953
      %v1955 = vpop.f32.mrb[0].mxu0
      %v1956 = vadd.f32 0.0, %v1955
      %1957 = vmatprep.mubr.bf16.mxu0 0
      %1958 = vmatmul.mubr.bf16.gmra.mrb[0].mxu0 %v398
      %v1959 = vpop.f32.mrb[0].mxu0
      %v1960 = vadd.f32 0.0, %v1959
      %v1961 = vpop.f32.mrb[0].mxu0
      %v1962 = vadd.f32 0.0, %v1961
      %v1963 = vpop.f32.mrb[0].mxu0
      %v1964 = vadd.f32 0.0, %v1963
      %v1965 = vpop.f32.mrb[0].mxu0
      %v1966 = vadd.f32 0.0, %v1965
      %1967 = vmatprep.mubr.bf16.mxu0 0
      %1968 = vmatmul.mubr.bf16.gmra.mrb[0].mxu0 %v401
      %v1969 = vpop.f32.mrb[0].mxu0
      %v1970 = vadd.f32 0.0, %v1969
      %v1971 = vpop.f32.mrb[0].mxu0
      %v1972 = vadd.f32 0.0, %v1971
      %v1973 = vpop.f32.mrb[0].mxu0
      %v1974 = vadd.f32 0.0, %v1973
      %v1975 = vpop.f32.mrb[0].mxu0
      %v1976 = vadd.f32 0.0, %v1975
      %1977 = vmatprep.mubr.bf16.mxu0 0
      %1978 = vmatmul.mubr.bf16.gmra.mrb[0].mxu0 %v404
      %v1979 = vpop.f32.mrb[0].mxu0
      %v1980 = vadd.f32 0.0, %v1979
      %v1981 = vpop.f32.mrb[0].mxu0
      %v1982 = vadd.f32 0.0, %v1981
      %v1983 = vpop.f32.mrb[0].mxu0
      %v1984 = vadd.f32 0.0, %v1983
      %v1985 = vpop.f32.mrb[0].mxu0
      %v1986 = vadd.f32 0.0, %v1985
      %1987 = vmatprep.mubr.bf16.mxu0 0
      %1988 = vmatmul.mubr.bf16.gmra.mrb[0].mxu0 %v407
      %v1989 = vpop.f32.mrb[0].mxu0
      %v1990 = vadd.f32 0.0, %v1989
      %v1991 = vpop.f32.mrb[0].mxu0
      %v1992 = vadd.f32 0.0, %v1991
      %v1993 = vpop.f32.mrb[0].mxu0
      %v1994 = vadd.f32 0.0, %v1993
      %v1995 = vpop.f32.mrb[0].mxu0
      %v1996 = vadd.f32 0.0, %v1995
      %1997 = vmatprep.mubr.bf16.mxu0 0
      %1998 = vmatmul.mubr.bf16.gmra.mrb[0].mxu0 %v410
      %v1999 = vpop.f32.mrb[0].mxu0
      %v2000 = vadd.f32 0.0, %v1999
      %v2001 = vpop.f32.mrb[0].mxu0
      %v2002 = vadd.f32 0.0, %v2001
      %v2003 = vpop.f32.mrb[0].mxu0
      %v2004 = vadd.f32 0.0, %v2003
      %v2005 = vpop.f32.mrb[0].mxu0
      %v2006 = vadd.f32 0.0, %v2005
      %2007 = vdwg.mxu0
      %v2008 = vld [vmem:[%s3] sm:$0xff]
      %v2009 = vld [vmem:[%s3 + $0x8] sm:$0xff]
      %v2010 = vld [vmem:[%s3 + $0x10] sm:$0xff]
      %v2011 = vld [vmem:[%s3 + $0x18] sm:$0xff]
      %v2012 = vld [vmem:[%s3 + $0x20] sm:$0xff]
      %v2013 = vld [vmem:[%s3 + $0x28] sm:$0xff]
      %v2014 = vld [vmem:[%s3 + $0x30] sm:$0xff]
      %v2015 = vld [vmem:[%s3 + $0x38] sm:$0xff]
      %v2016 = vld [vmem:[%s3 + $0x40] sm:$0xff]
      %v2017 = vld [vmem:[%s3 + $0x48] sm:$0xff]
      %v2018 = vld [vmem:[%s3 + $0x50] sm:$0xff]
      %v2019 = vld [vmem:[%s3 + $0x58] sm:$0xff]
      %v2020 = vld [vmem:[%s3 + $0x60] sm:$0xff]
      %v2021 = vld [vmem:[%s3 + $0x68] sm:$0xff]
      %v2022 = vld [vmem:[%s3 + $0x70] sm:$0xff]
      %v2023 = vld [vmem:[%s3 + $0x78] sm:$0xff]
      %v2024 = vld [vmem:[%s3 + $0x80] sm:$0xff]
      %v2025 = vld [vmem:[%s3 + $0x88] sm:$0xff]
      %v2026 = vld [vmem:[%s3 + $0x90] sm:$0xff]
      %v2027 = vld [vmem:[%s3 + $0x98] sm:$0xff]
      %v2028 = vld [vmem:[%s3 + $0xa0] sm:$0xff]
      %v2029 = vld [vmem:[%s3 + $0xa8] sm:$0xff]
      %v2030 = vld [vmem:[%s3 + $0xb0] sm:$0xff]
      %v2031 = vld [vmem:[%s3 + $0xb8] sm:$0xff]
      %v2032 = vld [vmem:[%s3 + $0xc0] sm:$0xff]
      %v2033 = vld [vmem:[%s3 + $0xc8] sm:$0xff]
      %v2034 = vld [vmem:[%s3 + $0xd0] sm:$0xff]
      %v2035 = vld [vmem:[%s3 + $0xd8] sm:$0xff]
      %v2036 = vld [vmem:[%s3 + $0xe0] sm:$0xff]
      %v2037 = vld [vmem:[%s3 + $0xe8] sm:$0xff]
      %v2038 = vld [vmem:[%s3 + $0xf0] sm:$0xff]
      %v2039 = vld [vmem:[%s3 + $0xf8] sm:$0xff]
      %v2040 = vld [vmem:[%s3 + $0x100] sm:$0xff]
      %v2041 = vld [vmem:[%s3 + $0x108] sm:$0xff]
      %v2042 = vld [vmem:[%s3 + $0x110] sm:$0xff]
      %v2043 = vld [vmem:[%s3 + $0x118] sm:$0xff]
      %v2044 = vld [vmem:[%s3 + $0x120] sm:$0xff]
      %v2045 = vld [vmem:[%s3 + $0x128] sm:$0xff]
      %v2046 = vld [vmem:[%s3 + $0x130] sm:$0xff]
      %v2047 = vld [vmem:[%s3 + $0x138] sm:$0xff]
      %v2048 = vld [vmem:[%s3 + $0x140] sm:$0xff]
      %v2049 = vld [vmem:[%s3 + $0x148] sm:$0xff]
      %v2050 = vld [vmem:[%s3 + $0x150] sm:$0xff]
      %v2051 = vld [vmem:[%s3 + $0x158] sm:$0xff]
      %v2052 = vld [vmem:[%s3 + $0x160] sm:$0xff]
      %v2053 = vld [vmem:[%s3 + $0x168] sm:$0xff]
      %v2054 = vld [vmem:[%s3 + $0x170] sm:$0xff]
      %v2055 = vld [vmem:[%s3 + $0x178] sm:$0xff]
      %v2056 = vld [vmem:[%s3 + $0x180] sm:$0xff]
      %v2057 = vld [vmem:[%s3 + $0x188] sm:$0xff]
      %v2058 = vld [vmem:[%s3 + $0x190] sm:$0xff]
      %v2059 = vld [vmem:[%s3 + $0x198] sm:$0xff]
      %v2060 = vld [vmem:[%s3 + $0x1a0] sm:$0xff]
      %v2061 = vld [vmem:[%s3 + $0x1a8] sm:$0xff]
      %v2062 = vld [vmem:[%s3 + $0x1b0] sm:$0xff]
      %v2063 = vld [vmem:[%s3 + $0x1b8] sm:$0xff]
      %v2064 = vld [vmem:[%s3 + $0x1c0] sm:$0xff]
      %v2065 = vld [vmem:[%s3 + $0x1c8] sm:$0xff]
      %v2066 = vld [vmem:[%s3 + $0x1d0] sm:$0xff]
      %v2067 = vld [vmem:[%s3 + $0x1d8] sm:$0xff]
      %v2068 = vld [vmem:[%s3 + $0x1e0] sm:$0xff]
      %v2069 = vld [vmem:[%s3 + $0x1e8] sm:$0xff]
      %v2070 = vld [vmem:[%s3 + $0x1f0] sm:$0xff]
      %v2071 = vld [vmem:[%s3 + $0x1f8] sm:$0xff]
      %v2072 = vld [vmem:[%s3 + $0x200] sm:$0xff]
      %v2073 = vld [vmem:[%s3 + $0x208] sm:$0xff]
      %v2074 = vld [vmem:[%s3 + $0x210] sm:$0xff]
      %v2075 = vld [vmem:[%s3 + $0x218] sm:$0xff]
      %v2076 = vld [vmem:[%s3 + $0x220] sm:$0xff]
      %v2077 = vld [vmem:[%s3 + $0x228] sm:$0xff]
      %v2078 = vld [vmem:[%s3 + $0x230] sm:$0xff]
      %v2079 = vld [vmem:[%s3 + $0x238] sm:$0xff]
      %v2080 = vld [vmem:[%s3 + $0x240] sm:$0xff]
      %v2081 = vld [vmem:[%s3 + $0x248] sm:$0xff]
      %v2082 = vld [vmem:[%s3 + $0x250] sm:$0xff]
      %v2083 = vld [vmem:[%s3 + $0x258] sm:$0xff]
      %v2084 = vld [vmem:[%s3 + $0x260] sm:$0xff]
      %v2085 = vld [vmem:[%s3 + $0x268] sm:$0xff]
      %v2086 = vld [vmem:[%s3 + $0x270] sm:$0xff]
      %v2087 = vld [vmem:[%s3 + $0x278] sm:$0xff]
      %v2088 = vld [vmem:[%s3 + $0x280] sm:$0xff]
      %v2089 = vld [vmem:[%s3 + $0x288] sm:$0xff]
      %v2090 = vld [vmem:[%s3 + $0x290] sm:$0xff]
      %v2091 = vld [vmem:[%s3 + $0x298] sm:$0xff]
      %v2092 = vld [vmem:[%s3 + $0x2a0] sm:$0xff]
      %v2093 = vld [vmem:[%s3 + $0x2a8] sm:$0xff]
      %v2094 = vld [vmem:[%s3 + $0x2b0] sm:$0xff]
      %v2095 = vld [vmem:[%s3 + $0x2b8] sm:$0xff]
      %v2096 = vld [vmem:[%s3 + $0x2c0] sm:$0xff]
      %v2097 = vld [vmem:[%s3 + $0x2c8] sm:$0xff]
      %v2098 = vld [vmem:[%s3 + $0x2d0] sm:$0xff]
      %v2099 = vld [vmem:[%s3 + $0x2d8] sm:$0xff]
      %v2100 = vld [vmem:[%s3 + $0x2e0] sm:$0xff]
      %v2101 = vld [vmem:[%s3 + $0x2e8] sm:$0xff]
      %v2102 = vld [vmem:[%s3 + $0x2f0] sm:$0xff]
      %v2103 = vld [vmem:[%s3 + $0x2f8] sm:$0xff]
      %v2104 = vld [vmem:[%s3 + $0x300] sm:$0xff]
      %v2105 = vld [vmem:[%s3 + $0x308] sm:$0xff]
      %v2106 = vld [vmem:[%s3 + $0x310] sm:$0xff]
      %v2107 = vld [vmem:[%s3 + $0x318] sm:$0xff]
      %v2108 = vld [vmem:[%s3 + $0x320] sm:$0xff]
      %v2109 = vld [vmem:[%s3 + $0x328] sm:$0xff]
      %v2110 = vld [vmem:[%s3 + $0x330] sm:$0xff]
      %v2111 = vld [vmem:[%s3 + $0x338] sm:$0xff]
      %v2112 = vld [vmem:[%s3 + $0x340] sm:$0xff]
      %v2113 = vld [vmem:[%s3 + $0x348] sm:$0xff]
      %v2114 = vld [vmem:[%s3 + $0x350] sm:$0xff]
      %v2115 = vld [vmem:[%s3 + $0x358] sm:$0xff]
      %v2116 = vld [vmem:[%s3 + $0x360] sm:$0xff]
      %v2117 = vld [vmem:[%s3 + $0x368] sm:$0xff]
      %v2118 = vld [vmem:[%s3 + $0x370] sm:$0xff]
      %v2119 = vld [vmem:[%s3 + $0x378] sm:$0xff]
      %v2120 = vld [vmem:[%s3 + $0x380] sm:$0xff]
      %v2121 = vld [vmem:[%s3 + $0x388] sm:$0xff]
      %v2122 = vld [vmem:[%s3 + $0x390] sm:$0xff]
      %v2123 = vld [vmem:[%s3 + $0x398] sm:$0xff]
      %v2124 = vld [vmem:[%s3 + $0x3a0] sm:$0xff]
      %v2125 = vld [vmem:[%s3 + $0x3a8] sm:$0xff]
      %v2126 = vld [vmem:[%s3 + $0x3b0] sm:$0xff]
      %v2127 = vld [vmem:[%s3 + $0x3b8] sm:$0xff]
      %v2128 = vld [vmem:[%s3 + $0x3c0] sm:$0xff]
      %v2129 = vld [vmem:[%s3 + $0x3c8] sm:$0xff]
      %v2130 = vld [vmem:[%s3 + $0x3d0] sm:$0xff]
      %v2131 = vld [vmem:[%s3 + $0x3d8] sm:$0xff]
      %v2132 = vld [vmem:[%s3 + $0x3e0] sm:$0xff]
      %v2133 = vld [vmem:[%s3 + $0x3e8] sm:$0xff]
      %v2134 = vld [vmem:[%s3 + $0x3f0] sm:$0xff]
      %v2135 = vld [vmem:[%s3 + $0x3f8] sm:$0xff]
      %v2136 = vld [vmem:[%s3 + $0x400] sm:$0xff]
      %v2137 = vld [vmem:[%s3 + $0x408] sm:$0xff]
      %v2138 = vld [vmem:[%s3 + $0x410] sm:$0xff]
      %v2139 = vld [vmem:[%s3 + $0x418] sm:$0xff]
      %v2140 = vld [vmem:[%s3 + $0x420] sm:$0xff]
      %v2141 = vld [vmem:[%s3 + $0x428] sm:$0xff]
      %v2142 = vld [vmem:[%s3 + $0x430] sm:$0xff]
      %v2143 = vld [vmem:[%s3 + $0x438] sm:$0xff]
      %v2144 = vld [vmem:[%s3 + $0x440] sm:$0xff]
      %v2145 = vld [vmem:[%s3 + $0x448] sm:$0xff]
      %v2146 = vld [vmem:[%s3 + $0x450] sm:$0xff]
      %v2147 = vld [vmem:[%s3 + $0x458] sm:$0xff]
      %v2148 = vld [vmem:[%s3 + $0x460] sm:$0xff]
      %v2149 = vld [vmem:[%s3 + $0x468] sm:$0xff]
      %v2150 = vld [vmem:[%s3 + $0x470] sm:$0xff]
      %v2151 = vld [vmem:[%s3 + $0x478] sm:$0xff]
      %v2152 = vld [vmem:[%s3 + $0x480] sm:$0xff]
      %v2153 = vld [vmem:[%s3 + $0x488] sm:$0xff]
      %v2154 = vld [vmem:[%s3 + $0x490] sm:$0xff]
      %v2155 = vld [vmem:[%s3 + $0x498] sm:$0xff]
      %v2156 = vld [vmem:[%s3 + $0x4a0] sm:$0xff]
      %v2157 = vld [vmem:[%s3 + $0x4a8] sm:$0xff]
      %v2158 = vld [vmem:[%s3 + $0x4b0] sm:$0xff]
      %v2159 = vld [vmem:[%s3 + $0x4b8] sm:$0xff]
      %v2160 = vld [vmem:[%s3 + $0x4c0] sm:$0xff]
      %v2161 = vld [vmem:[%s3 + $0x4c8] sm:$0xff]
      %v2162 = vld [vmem:[%s3 + $0x4d0] sm:$0xff]
      %v2163 = vld [vmem:[%s3 + $0x4d8] sm:$0xff]
      %v2164 = vld [vmem:[%s3 + $0x4e0] sm:$0xff]
      %v2165 = vld [vmem:[%s3 + $0x4e8] sm:$0xff]
      %v2166 = vld [vmem:[%s3 + $0x4f0] sm:$0xff]
      %v2167 = vld [vmem:[%s3 + $0x4f8] sm:$0xff]
      %v2168 = vld [vmem:[%s3 + $0x500] sm:$0xff]
      %v2169 = vld [vmem:[%s3 + $0x508] sm:$0xff]
      %v2170 = vld [vmem:[%s3 + $0x510] sm:$0xff]
      %v2171 = vld [vmem:[%s3 + $0x518] sm:$0xff]
      %v2172 = vld [vmem:[%s3 + $0x520] sm:$0xff]
      %v2173 = vld [vmem:[%s3 + $0x528] sm:$0xff]
      %v2174 = vld [vmem:[%s3 + $0x530] sm:$0xff]
      %v2175 = vld [vmem:[%s3 + $0x538] sm:$0xff]
      %v2176 = vld [vmem:[%s3 + $0x540] sm:$0xff]
      %v2177 = vld [vmem:[%s3 + $0x548] sm:$0xff]
      %v2178 = vld [vmem:[%s3 + $0x550] sm:$0xff]
      %v2179 = vld [vmem:[%s3 + $0x558] sm:$0xff]
      %v2180 = vld [vmem:[%s3 + $0x560] sm:$0xff]
      %v2181 = vld [vmem:[%s3 + $0x568] sm:$0xff]
      %v2182 = vld [vmem:[%s3 + $0x570] sm:$0xff]
      %v2183 = vld [vmem:[%s3 + $0x578] sm:$0xff]
      %v2184 = vld [vmem:[%s3 + $0x580] sm:$0xff]
      %v2185 = vld [vmem:[%s3 + $0x588] sm:$0xff]
      %v2186 = vld [vmem:[%s3 + $0x590] sm:$0xff]
      %v2187 = vld [vmem:[%s3 + $0x598] sm:$0xff]
      %v2188 = vld [vmem:[%s3 + $0x5a0] sm:$0xff]
      %v2189 = vld [vmem:[%s3 + $0x5a8] sm:$0xff]
      %v2190 = vld [vmem:[%s3 + $0x5b0] sm:$0xff]
      %v2191 = vld [vmem:[%s3 + $0x5b8] sm:$0xff]
      %v2192 = vld [vmem:[%s3 + $0x5c0] sm:$0xff]
      %v2193 = vld [vmem:[%s3 + $0x5c8] sm:$0xff]
      %v2194 = vld [vmem:[%s3 + $0x5d0] sm:$0xff]
      %v2195 = vld [vmem:[%s3 + $0x5d8] sm:$0xff]
      %v2196 = vld [vmem:[%s3 + $0x5e0] sm:$0xff]
      %v2197 = vld [vmem:[%s3 + $0x5e8] sm:$0xff]
      %v2198 = vld [vmem:[%s3 + $0x5f0] sm:$0xff]
      %v2199 = vld [vmem:[%s3 + $0x5f8] sm:$0xff]
      %v2200 = vld [vmem:[%s3 + $0x600] sm:$0xff]
      %v2201 = vld [vmem:[%s3 + $0x608] sm:$0xff]
      %v2202 = vld [vmem:[%s3 + $0x610] sm:$0xff]
      %v2203 = vld [vmem:[%s3 + $0x618] sm:$0xff]
      %v2204 = vld [vmem:[%s3 + $0x620] sm:$0xff]
      %v2205 = vld [vmem:[%s3 + $0x628] sm:$0xff]
      %v2206 = vld [vmem:[%s3 + $0x630] sm:$0xff]
      %v2207 = vld [vmem:[%s3 + $0x638] sm:$0xff]
      %v2208 = vld [vmem:[%s3 + $0x640] sm:$0xff]
      %v2209 = vld [vmem:[%s3 + $0x648] sm:$0xff]
      %v2210 = vld [vmem:[%s3 + $0x650] sm:$0xff]
      %v2211 = vld [vmem:[%s3 + $0x658] sm:$0xff]
      %v2212 = vld [vmem:[%s3 + $0x660] sm:$0xff]
      %v2213 = vld [vmem:[%s3 + $0x668] sm:$0xff]
      %v2214 = vld [vmem:[%s3 + $0x670] sm:$0xff]
      %v2215 = vld [vmem:[%s3 + $0x678] sm:$0xff]
      %v2216 = vld [vmem:[%s3 + $0x680] sm:$0xff]
      %v2217 = vld [vmem:[%s3 + $0x688] sm:$0xff]
      %v2218 = vld [vmem:[%s3 + $0x690] sm:$0xff]
      %v2219 = vld [vmem:[%s3 + $0x698] sm:$0xff]
      %v2220 = vld [vmem:[%s3 + $0x6a0] sm:$0xff]
      %v2221 = vld [vmem:[%s3 + $0x6a8] sm:$0xff]
      %v2222 = vld [vmem:[%s3 + $0x6b0] sm:$0xff]
      %v2223 = vld [vmem:[%s3 + $0x6b8] sm:$0xff]
      %v2224 = vld [vmem:[%s3 + $0x6c0] sm:$0xff]
      %v2225 = vld [vmem:[%s3 + $0x6c8] sm:$0xff]
      %v2226 = vld [vmem:[%s3 + $0x6d0] sm:$0xff]
      %v2227 = vld [vmem:[%s3 + $0x6d8] sm:$0xff]
      %v2228 = vld [vmem:[%s3 + $0x6e0] sm:$0xff]
      %v2229 = vld [vmem:[%s3 + $0x6e8] sm:$0xff]
      %v2230 = vld [vmem:[%s3 + $0x6f0] sm:$0xff]
      %v2231 = vld [vmem:[%s3 + $0x6f8] sm:$0xff]
      %v2232 = vld [vmem:[%s3 + $0x700] sm:$0xff]
      %v2233 = vld [vmem:[%s3 + $0x708] sm:$0xff]
      %v2234 = vld [vmem:[%s3 + $0x710] sm:$0xff]
      %v2235 = vld [vmem:[%s3 + $0x718] sm:$0xff]
      %v2236 = vld [vmem:[%s3 + $0x720] sm:$0xff]
      %v2237 = vld [vmem:[%s3 + $0x728] sm:$0xff]
      %v2238 = vld [vmem:[%s3 + $0x730] sm:$0xff]
      %v2239 = vld [vmem:[%s3 + $0x738] sm:$0xff]
      %v2240 = vld [vmem:[%s3 + $0x740] sm:$0xff]
      %v2241 = vld [vmem:[%s3 + $0x748] sm:$0xff]
      %v2242 = vld [vmem:[%s3 + $0x750] sm:$0xff]
      %v2243 = vld [vmem:[%s3 + $0x758] sm:$0xff]
      %v2244 = vld [vmem:[%s3 + $0x760] sm:$0xff]
      %v2245 = vld [vmem:[%s3 + $0x768] sm:$0xff]
      %v2246 = vld [vmem:[%s3 + $0x770] sm:$0xff]
      %v2247 = vld [vmem:[%s3 + $0x778] sm:$0xff]
      %v2248 = vld [vmem:[%s3 + $0x780] sm:$0xff]
      %v2249 = vld [vmem:[%s3 + $0x788] sm:$0xff]
      %v2250 = vld [vmem:[%s3 + $0x790] sm:$0xff]
      %v2251 = vld [vmem:[%s3 + $0x798] sm:$0xff]
      %v2252 = vld [vmem:[%s3 + $0x7a0] sm:$0xff]
      %v2253 = vld [vmem:[%s3 + $0x7a8] sm:$0xff]
      %v2254 = vld [vmem:[%s3 + $0x7b0] sm:$0xff]
      %v2255 = vld [vmem:[%s3 + $0x7b8] sm:$0xff]
      %v2256 = vld [vmem:[%s3 + $0x7c0] sm:$0xff]
      %v2257 = vld [vmem:[%s3 + $0x7c8] sm:$0xff]
      %v2258 = vld [vmem:[%s3 + $0x7d0] sm:$0xff]
      %v2259 = vld [vmem:[%s3 + $0x7d8] sm:$0xff]
      %v2260 = vld [vmem:[%s3 + $0x7e0] sm:$0xff]
      %v2261 = vld [vmem:[%s3 + $0x7e8] sm:$0xff]
      %v2262 = vld [vmem:[%s3 + $0x7f0] sm:$0xff]
      %v2263 = vld [vmem:[%s3 + $0x7f8] sm:$0xff]
      %v2264 = vld [vmem:[%s3 + $0x800] sm:$0xff]
      %v2265 = vld [vmem:[%s3 + $0x808] sm:$0xff]
      %v2266 = vld [vmem:[%s3 + $0x810] sm:$0xff]
      %v2267 = vld [vmem:[%s3 + $0x818] sm:$0xff]
      %v2268 = vld [vmem:[%s3 + $0x820] sm:$0xff]
      %v2269 = vld [vmem:[%s3 + $0x828] sm:$0xff]
      %v2270 = vld [vmem:[%s3 + $0x830] sm:$0xff]
      %v2271 = vld [vmem:[%s3 + $0x838] sm:$0xff]
      %v2272 = vld [vmem:[%s3 + $0x840] sm:$0xff]
      %v2273 = vld [vmem:[%s3 + $0x848] sm:$0xff]
      %v2274 = vld [vmem:[%s3 + $0x850] sm:$0xff]
      %v2275 = vld [vmem:[%s3 + $0x858] sm:$0xff]
      %v2276 = vld [vmem:[%s3 + $0x860] sm:$0xff]
      %v2277 = vld [vmem:[%s3 + $0x868] sm:$0xff]
      %v2278 = vld [vmem:[%s3 + $0x870] sm:$0xff]
      %v2279 = vld [vmem:[%s3 + $0x878] sm:$0xff]
      %v2280 = vld [vmem:[%s3 + $0x880] sm:$0xff]
      %v2281 = vld [vmem:[%s3 + $0x888] sm:$0xff]
      %v2282 = vld [vmem:[%s3 + $0x890] sm:$0xff]
      %v2283 = vld [vmem:[%s3 + $0x898] sm:$0xff]
      %v2284 = vld [vmem:[%s3 + $0x8a0] sm:$0xff]
      %v2285 = vld [vmem:[%s3 + $0x8a8] sm:$0xff]
      %v2286 = vld [vmem:[%s3 + $0x8b0] sm:$0xff]
      %v2287 = vld [vmem:[%s3 + $0x8b8] sm:$0xff]
      %v2288 = vld [vmem:[%s3 + $0x8c0] sm:$0xff]
      %v2289 = vld [vmem:[%s3 + $0x8c8] sm:$0xff]
      %v2290 = vld [vmem:[%s3 + $0x8d0] sm:$0xff]
      %v2291 = vld [vmem:[%s3 + $0x8d8] sm:$0xff]
      %v2292 = vld [vmem:[%s3 + $0x8e0] sm:$0xff]
      %v2293 = vld [vmem:[%s3 + $0x8e8] sm:$0xff]
      %v2294 = vld [vmem:[%s3 + $0x8f0] sm:$0xff]
      %v2295 = vld [vmem:[%s3 + $0x8f8] sm:$0xff]
      %v2296 = vld [vmem:[%s3 + $0x900] sm:$0xff]
      %v2297 = vld [vmem:[%s3 + $0x908] sm:$0xff]
      %v2298 = vld [vmem:[%s3 + $0x910] sm:$0xff]
      %v2299 = vld [vmem:[%s3 + $0x918] sm:$0xff]
      %v2300 = vld [vmem:[%s3 + $0x920] sm:$0xff]
      %v2301 = vld [vmem:[%s3 + $0x928] sm:$0xff]
      %v2302 = vld [vmem:[%s3 + $0x930] sm:$0xff]
      %v2303 = vld [vmem:[%s3 + $0x938] sm:$0xff]
      %v2304 = vld [vmem:[%s3 + $0x940] sm:$0xff]
      %v2305 = vld [vmem:[%s3 + $0x948] sm:$0xff]
      %v2306 = vld [vmem:[%s3 + $0x950] sm:$0xff]
      %v2307 = vld [vmem:[%s3 + $0x958] sm:$0xff]
      %v2308 = vld [vmem:[%s3 + $0x960] sm:$0xff]
      %v2309 = vld [vmem:[%s3 + $0x968] sm:$0xff]
      %v2310 = vld [vmem:[%s3 + $0x970] sm:$0xff]
      %v2311 = vld [vmem:[%s3 + $0x978] sm:$0xff]
      %v2312 = vld [vmem:[%s3 + $0x980] sm:$0xff]
      %v2313 = vld [vmem:[%s3 + $0x988] sm:$0xff]
      %v2314 = vld [vmem:[%s3 + $0x990] sm:$0xff]
      %v2315 = vld [vmem:[%s3 + $0x998] sm:$0xff]
      %v2316 = vld [vmem:[%s3 + $0x9a0] sm:$0xff]
      %v2317 = vld [vmem:[%s3 + $0x9a8] sm:$0xff]
      %v2318 = vld [vmem:[%s3 + $0x9b0] sm:$0xff]
      %v2319 = vld [vmem:[%s3 + $0x9b8] sm:$0xff]
      %v2320 = vld [vmem:[%s3 + $0x9c0] sm:$0xff]
      %v2321 = vld [vmem:[%s3 + $0x9c8] sm:$0xff]
      %v2322 = vld [vmem:[%s3 + $0x9d0] sm:$0xff]
      %v2323 = vld [vmem:[%s3 + $0x9d8] sm:$0xff]
      %v2324 = vld [vmem:[%s3 + $0x9e0] sm:$0xff]
      %v2325 = vld [vmem:[%s3 + $0x9e8] sm:$0xff]
      %v2326 = vld [vmem:[%s3 + $0x9f0] sm:$0xff]
      %v2327 = vld [vmem:[%s3 + $0x9f8] sm:$0xff]
      %v2328 = vld [vmem:[%s3 + $0xa00] sm:$0xff]
      %v2329 = vld [vmem:[%s3 + $0xa08] sm:$0xff]
      %v2330 = vld [vmem:[%s3 + $0xa10] sm:$0xff]
      %v2331 = vld [vmem:[%s3 + $0xa18] sm:$0xff]
      %v2332 = vld [vmem:[%s3 + $0xa20] sm:$0xff]
      %v2333 = vld [vmem:[%s3 + $0xa28] sm:$0xff]
      %v2334 = vld [vmem:[%s3 + $0xa30] sm:$0xff]
      %v2335 = vld [vmem:[%s3 + $0xa38] sm:$0xff]
      %v2336 = vld [vmem:[%s3 + $0xa40] sm:$0xff]
      %v2337 = vld [vmem:[%s3 + $0xa48] sm:$0xff]
      %v2338 = vld [vmem:[%s3 + $0xa50] sm:$0xff]
      %v2339 = vld [vmem:[%s3 + $0xa58] sm:$0xff]
      %v2340 = vld [vmem:[%s3 + $0xa60] sm:$0xff]
      %v2341 = vld [vmem:[%s3 + $0xa68] sm:$0xff]
      %v2342 = vld [vmem:[%s3 + $0xa70] sm:$0xff]
      %v2343 = vld [vmem:[%s3 + $0xa78] sm:$0xff]
      %v2344 = vld [vmem:[%s3 + $0xa80] sm:$0xff]
      %v2345 = vld [vmem:[%s3 + $0xa88] sm:$0xff]
      %v2346 = vld [vmem:[%s3 + $0xa90] sm:$0xff]
      %v2347 = vld [vmem:[%s3 + $0xa98] sm:$0xff]
      %v2348 = vld [vmem:[%s3 + $0xaa0] sm:$0xff]
      %v2349 = vld [vmem:[%s3 + $0xaa8] sm:$0xff]
      %v2350 = vld [vmem:[%s3 + $0xab0] sm:$0xff]
      %v2351 = vld [vmem:[%s3 + $0xab8] sm:$0xff]
      %v2352 = vld [vmem:[%s3 + $0xac0] sm:$0xff]
      %v2353 = vld [vmem:[%s3 + $0xac8] sm:$0xff]
      %v2354 = vld [vmem:[%s3 + $0xad0] sm:$0xff]
      %v2355 = vld [vmem:[%s3 + $0xad8] sm:$0xff]
      %v2356 = vld [vmem:[%s3 + $0xae0] sm:$0xff]
      %v2357 = vld [vmem:[%s3 + $0xae8] sm:$0xff]
      %v2358 = vld [vmem:[%s3 + $0xaf0] sm:$0xff]
      %v2359 = vld [vmem:[%s3 + $0xaf8] sm:$0xff]
      %v2360 = vld [vmem:[%s3 + $0xb00] sm:$0xff]
      %v2361 = vld [vmem:[%s3 + $0xb08] sm:$0xff]
      %v2362 = vld [vmem:[%s3 + $0xb10] sm:$0xff]
      %v2363 = vld [vmem:[%s3 + $0xb18] sm:$0xff]
      %v2364 = vld [vmem:[%s3 + $0xb20] sm:$0xff]
      %v2365 = vld [vmem:[%s3 + $0xb28] sm:$0xff]
      %v2366 = vld [vmem:[%s3 + $0xb30] sm:$0xff]
      %v2367 = vld [vmem:[%s3 + $0xb38] sm:$0xff]
      %v2368 = vld [vmem:[%s3 + $0xb40] sm:$0xff]
      %v2369 = vld [vmem:[%s3 + $0xb48] sm:$0xff]
      %v2370 = vld [vmem:[%s3 + $0xb50] sm:$0xff]
      %v2371 = vld [vmem:[%s3 + $0xb58] sm:$0xff]
      %v2372 = vld [vmem:[%s3 + $0xb60] sm:$0xff]
      %v2373 = vld [vmem:[%s3 + $0xb68] sm:$0xff]
      %v2374 = vld [vmem:[%s3 + $0xb70] sm:$0xff]
      %v2375 = vld [vmem:[%s3 + $0xb78] sm:$0xff]
      %v2376 = vld [vmem:[%s3 + $0xb80] sm:$0xff]
      %v2377 = vld [vmem:[%s3 + $0xb88] sm:$0xff]
      %v2378 = vld [vmem:[%s3 + $0xb90] sm:$0xff]
      %v2379 = vld [vmem:[%s3 + $0xb98] sm:$0xff]
      %v2380 = vld [vmem:[%s3 + $0xba0] sm:$0xff]
      %v2381 = vld [vmem:[%s3 + $0xba8] sm:$0xff]
      %v2382 = vld [vmem:[%s3 + $0xbb0] sm:$0xff]
      %v2383 = vld [vmem:[%s3 + $0xbb8] sm:$0xff]
      %v2384 = vld [vmem:[%s3 + $0xbc0] sm:$0xff]
      %v2385 = vld [vmem:[%s3 + $0xbc8] sm:$0xff]
      %v2386 = vld [vmem:[%s3 + $0xbd0] sm:$0xff]
      %v2387 = vld [vmem:[%s3 + $0xbd8] sm:$0xff]
      %v2388 = vld [vmem:[%s3 + $0xbe0] sm:$0xff]
      %v2389 = vld [vmem:[%s3 + $0xbe8] sm:$0xff]
      %v2390 = vld [vmem:[%s3 + $0xbf0] sm:$0xff]
      %v2391 = vld [vmem:[%s3 + $0xbf8] sm:$0xff]
      %v2392 = vld [vmem:[%s3 + $0xc00] sm:$0xff]
      %v2393 = vld [vmem:[%s3 + $0xc08] sm:$0xff]
      %v2394 = vld [vmem:[%s3 + $0xc10] sm:$0xff]
      %v2395 = vld [vmem:[%s3 + $0xc18] sm:$0xff]
      %v2396 = vld [vmem:[%s3 + $0xc20] sm:$0xff]
      %v2397 = vld [vmem:[%s3 + $0xc28] sm:$0xff]
      %v2398 = vld [vmem:[%s3 + $0xc30] sm:$0xff]
      %v2399 = vld [vmem:[%s3 + $0xc38] sm:$0xff]
      %v2400 = vld [vmem:[%s3 + $0xc40] sm:$0xff]
      %v2401 = vld [vmem:[%s3 + $0xc48] sm:$0xff]
      %v2402 = vld [vmem:[%s3 + $0xc50] sm:$0xff]
      %v2403 = vld [vmem:[%s3 + $0xc58] sm:$0xff]
      %v2404 = vld [vmem:[%s3 + $0xc60] sm:$0xff]
      %v2405 = vld [vmem:[%s3 + $0xc68] sm:$0xff]
      %v2406 = vld [vmem:[%s3 + $0xc70] sm:$0xff]
      %v2407 = vld [vmem:[%s3 + $0xc78] sm:$0xff]
      %v2408 = vld [vmem:[%s3 + $0xc80] sm:$0xff]
      %v2409 = vld [vmem:[%s3 + $0xc88] sm:$0xff]
      %v2410 = vld [vmem:[%s3 + $0xc90] sm:$0xff]
      %v2411 = vld [vmem:[%s3 + $0xc98] sm:$0xff]
      %v2412 = vld [vmem:[%s3 + $0xca0] sm:$0xff]
      %v2413 = vld [vmem:[%s3 + $0xca8] sm:$0xff]
      %v2414 = vld [vmem:[%s3 + $0xcb0] sm:$0xff]
      %v2415 = vld [vmem:[%s3 + $0xcb8] sm:$0xff]
      %v2416 = vld [vmem:[%s3 + $0xcc0] sm:$0xff]
      %v2417 = vld [vmem:[%s3 + $0xcc8] sm:$0xff]
      %v2418 = vld [vmem:[%s3 + $0xcd0] sm:$0xff]
      %v2419 = vld [vmem:[%s3 + $0xcd8] sm:$0xff]
      %v2420 = vld [vmem:[%s3 + $0xce0] sm:$0xff]
      %v2421 = vld [vmem:[%s3 + $0xce8] sm:$0xff]
      %v2422 = vld [vmem:[%s3 + $0xcf0] sm:$0xff]
      %v2423 = vld [vmem:[%s3 + $0xcf8] sm:$0xff]
      %v2424 = vld [vmem:[%s3 + $0xd00] sm:$0xff]
      %v2425 = vld [vmem:[%s3 + $0xd08] sm:$0xff]
      %v2426 = vld [vmem:[%s3 + $0xd10] sm:$0xff]
      %v2427 = vld [vmem:[%s3 + $0xd18] sm:$0xff]
      %v2428 = vld [vmem:[%s3 + $0xd20] sm:$0xff]
      %v2429 = vld [vmem:[%s3 + $0xd28] sm:$0xff]
      %v2430 = vld [vmem:[%s3 + $0xd30] sm:$0xff]
      %v2431 = vld [vmem:[%s3 + $0xd38] sm:$0xff]
      %v2432 = vld [vmem:[%s3 + $0xd40] sm:$0xff]
      %v2433 = vld [vmem:[%s3 + $0xd48] sm:$0xff]
      %v2434 = vld [vmem:[%s3 + $0xd50] sm:$0xff]
      %v2435 = vld [vmem:[%s3 + $0xd58] sm:$0xff]
      %v2436 = vld [vmem:[%s3 + $0xd60] sm:$0xff]
      %v2437 = vld [vmem:[%s3 + $0xd68] sm:$0xff]
      %v2438 = vld [vmem:[%s3 + $0xd70] sm:$0xff]
      %v2439 = vld [vmem:[%s3 + $0xd78] sm:$0xff]
      %v2440 = vld [vmem:[%s3 + $0xd80] sm:$0xff]
      %v2441 = vld [vmem:[%s3 + $0xd88] sm:$0xff]
      %v2442 = vld [vmem:[%s3 + $0xd90] sm:$0xff]
      %v2443 = vld [vmem:[%s3 + $0xd98] sm:$0xff]
      %v2444 = vld [vmem:[%s3 + $0xda0] sm:$0xff]
      %v2445 = vld [vmem:[%s3 + $0xda8] sm:$0xff]
      %v2446 = vld [vmem:[%s3 + $0xdb0] sm:$0xff]
      %v2447 = vld [vmem:[%s3 + $0xdb8] sm:$0xff]
      %v2448 = vld [vmem:[%s3 + $0xdc0] sm:$0xff]
      %v2449 = vld [vmem:[%s3 + $0xdc8] sm:$0xff]
      %v2450 = vld [vmem:[%s3 + $0xdd0] sm:$0xff]
      %v2451 = vld [vmem:[%s3 + $0xdd8] sm:$0xff]
      %v2452 = vld [vmem:[%s3 + $0xde0] sm:$0xff]
      %v2453 = vld [vmem:[%s3 + $0xde8] sm:$0xff]
      %v2454 = vld [vmem:[%s3 + $0xdf0] sm:$0xff]
      %v2455 = vld [vmem:[%s3 + $0xdf8] sm:$0xff]
      %v2456 = vld [vmem:[%s3 + $0xe00] sm:$0xff]
      %v2457 = vld [vmem:[%s3 + $0xe08] sm:$0xff]
      %v2458 = vld [vmem:[%s3 + $0xe10] sm:$0xff]
      %v2459 = vld [vmem:[%s3 + $0xe18] sm:$0xff]
      %v2460 = vld [vmem:[%s3 + $0xe20] sm:$0xff]
      %v2461 = vld [vmem:[%s3 + $0xe28] sm:$0xff]
      %v2462 = vld [vmem:[%s3 + $0xe30] sm:$0xff]
      %v2463 = vld [vmem:[%s3 + $0xe38] sm:$0xff]
      %v2464 = vld [vmem:[%s3 + $0xe40] sm:$0xff]
      %v2465 = vld [vmem:[%s3 + $0xe48] sm:$0xff]
      %v2466 = vld [vmem:[%s3 + $0xe50] sm:$0xff]
      %v2467 = vld [vmem:[%s3 + $0xe58] sm:$0xff]
      %v2468 = vld [vmem:[%s3 + $0xe60] sm:$0xff]
      %v2469 = vld [vmem:[%s3 + $0xe68] sm:$0xff]
      %v2470 = vld [vmem:[%s3 + $0xe70] sm:$0xff]
      %v2471 = vld [vmem:[%s3 + $0xe78] sm:$0xff]
      %v2472 = vld [vmem:[%s3 + $0xe80] sm:$0xff]
      %v2473 = vld [vmem:[%s3 + $0xe88] sm:$0xff]
      %v2474 = vld [vmem:[%s3 + $0xe90] sm:$0xff]
      %v2475 = vld [vmem:[%s3 + $0xe98] sm:$0xff]
      %v2476 = vld [vmem:[%s3 + $0xea0] sm:$0xff]
      %v2477 = vld [vmem:[%s3 + $0xea8] sm:$0xff]
      %v2478 = vld [vmem:[%s3 + $0xeb0] sm:$0xff]
      %v2479 = vld [vmem:[%s3 + $0xeb8] sm:$0xff]
      %v2480 = vld [vmem:[%s3 + $0xec0] sm:$0xff]
      %v2481 = vld [vmem:[%s3 + $0xec8] sm:$0xff]
      %v2482 = vld [vmem:[%s3 + $0xed0] sm:$0xff]
      %v2483 = vld [vmem:[%s3 + $0xed8] sm:$0xff]
      %v2484 = vld [vmem:[%s3 + $0xee0] sm:$0xff]
      %v2485 = vld [vmem:[%s3 + $0xee8] sm:$0xff]
      %v2486 = vld [vmem:[%s3 + $0xef0] sm:$0xff]
      %v2487 = vld [vmem:[%s3 + $0xef8] sm:$0xff]
      %v2488 = vld [vmem:[%s3 + $0xf00] sm:$0xff]
      %v2489 = vld [vmem:[%s3 + $0xf08] sm:$0xff]
      %v2490 = vld [vmem:[%s3 + $0xf10] sm:$0xff]
      %v2491 = vld [vmem:[%s3 + $0xf18] sm:$0xff]
      %v2492 = vld [vmem:[%s3 + $0xf20] sm:$0xff]
      %v2493 = vld [vmem:[%s3 + $0xf28] sm:$0xff]
      %v2494 = vld [vmem:[%s3 + $0xf30] sm:$0xff]
      %v2495 = vld [vmem:[%s3 + $0xf38] sm:$0xff]
      %v2496 = vld [vmem:[%s3 + $0xf40] sm:$0xff]
      %v2497 = vld [vmem:[%s3 + $0xf48] sm:$0xff]
      %v2498 = vld [vmem:[%s3 + $0xf50] sm:$0xff]
      %v2499 = vld [vmem:[%s3 + $0xf58] sm:$0xff]
      %v2500 = vld [vmem:[%s3 + $0xf60] sm:$0xff]
      %v2501 = vld [vmem:[%s3 + $0xf68] sm:$0xff]
      %v2502 = vld [vmem:[%s3 + $0xf70] sm:$0xff]
      %v2503 = vld [vmem:[%s3 + $0xf78] sm:$0xff]
      %v2504 = vld [vmem:[%s3 + $0xf80] sm:$0xff]
      %v2505 = vld [vmem:[%s3 + $0xf88] sm:$0xff]
      %v2506 = vld [vmem:[%s3 + $0xf90] sm:$0xff]
      %v2507 = vld [vmem:[%s3 + $0xf98] sm:$0xff]
      %v2508 = vld [vmem:[%s3 + $0xfa0] sm:$0xff]
      %v2509 = vld [vmem:[%s3 + $0xfa8] sm:$0xff]
      %v2510 = vld [vmem:[%s3 + $0xfb0] sm:$0xff]
      %v2511 = vld [vmem:[%s3 + $0xfb8] sm:$0xff]
      %v2512 = vld [vmem:[%s3 + $0xfc0] sm:$0xff]
      %v2513 = vld [vmem:[%s3 + $0xfc8] sm:$0xff]
      %v2514 = vld [vmem:[%s3 + $0xfd0] sm:$0xff]
      %v2515 = vld [vmem:[%s3 + $0xfd8] sm:$0xff]
      %v2516 = vld [vmem:[%s3 + $0xfe0] sm:$0xff]
      %v2517 = vld [vmem:[%s3 + $0xfe8] sm:$0xff]
      %v2518 = vld [vmem:[%s3 + $0xff0] sm:$0xff]
      %v2519 = vld [vmem:[%s3 + $0xff8] sm:$0xff]
      %v2520 = vsub.f32 %v499, 99.0
      %v2521 = vsub.f32 %v501, 99.0
      %v2522 = vsub.f32 %v692, 99.0
      %v2523 = vsub.f32 %v694, 99.0
      %v2524 = vsub.f32 %v885, 99.0
      %v2525 = vsub.f32 %v887, 99.0
      %v2526 = vsub.f32 %v1078, 99.0
      %v2527 = vsub.f32 %v1080, 99.0
      %v2528 = vsub.f32 %v1271, 99.0
      %v2529 = vsub.f32 %v1273, 99.0
      %v2530 = vsub.f32 %v1464, 99.0
      %v2531 = vsub.f32 %v1466, 99.0
      %v2532 = vsub.f32 %v1657, 99.0
      %v2533 = vsub.f32 %v1659, 99.0
      %v2534 = vsub.f32 %v1850, 99.0
      %v2535 = vsub.f32 %v1852, 99.0
      %v2536 = vsub.f32 %v503, 99.0
      %v2537 = vsub.f32 %v505, 99.0
      %v2538 = vsub.f32 %v696, 99.0
      %v2539 = vsub.f32 %v698, 99.0
      %v2540 = vsub.f32 %v889, 99.0
      %v2541 = vsub.f32 %v891, 99.0
      %v2542 = vsub.f32 %v1082, 99.0
      %v2543 = vsub.f32 %v1084, 99.0
      %v2544 = vsub.f32 %v1275, 99.0
      %v2545 = vsub.f32 %v1277, 99.0
      %v2546 = vsub.f32 %v1468, 99.0
      %v2547 = vsub.f32 %v1470, 99.0
      %v2548 = vsub.f32 %v1661, 99.0
      %v2549 = vsub.f32 %v1663, 99.0
      %v2550 = vsub.f32 %v1854, 99.0
      %v2551 = vsub.f32 %v1856, 99.0
      %v2552 = vsub.f32 %v509, 99.0
      %v2553 = vsub.f32 %v511, 99.0
      %v2554 = vsub.f32 %v702, 99.0
      %v2555 = vsub.f32 %v704, 99.0
      %v2556 = vsub.f32 %v895, 99.0
      %v2557 = vsub.f32 %v897, 99.0
      %v2558 = vsub.f32 %v1088, 99.0
      %v2559 = vsub.f32 %v1090, 99.0
      %v2560 = vsub.f32 %v1281, 99.0
      %v2561 = vsub.f32 %v1283, 99.0
      %v2562 = vsub.f32 %v1474, 99.0
      %v2563 = vsub.f32 %v1476, 99.0
      %v2564 = vsub.f32 %v1667, 99.0
      %v2565 = vsub.f32 %v1669, 99.0
      %v2566 = vsub.f32 %v1860, 99.0
      %v2567 = vsub.f32 %v1862, 99.0
      %v2568 = vsub.f32 %v513, 99.0
      %v2569 = vsub.f32 %v515, 99.0
      %v2570 = vsub.f32 %v706, 99.0
      %v2571 = vsub.f32 %v708, 99.0
      %v2572 = vsub.f32 %v899, 99.0
      %v2573 = vsub.f32 %v901, 99.0
      %v2574 = vsub.f32 %v1092, 99.0
      %v2575 = vsub.f32 %v1094, 99.0
      %v2576 = vsub.f32 %v1285, 99.0
      %v2577 = vsub.f32 %v1287, 99.0
      %v2578 = vsub.f32 %v1478, 99.0
      %v2579 = vsub.f32 %v1480, 99.0
      %v2580 = vsub.f32 %v1671, 99.0
      %v2581 = vsub.f32 %v1673, 99.0
      %v2582 = vsub.f32 %v1864, 99.0
      %v2583 = vsub.f32 %v1866, 99.0
      %v2584 = vsub.f32 %v519, 99.0
      %v2585 = vsub.f32 %v521, 99.0
      %v2586 = vsub.f32 %v712, 99.0
      %v2587 = vsub.f32 %v714, 99.0
      %v2588 = vsub.f32 %v905, 99.0
      %v2589 = vsub.f32 %v907, 99.0
      %v2590 = vsub.f32 %v1098, 99.0
      %v2591 = vsub.f32 %v1100, 99.0
      %v2592 = vsub.f32 %v1291, 99.0
      %v2593 = vsub.f32 %v1293, 99.0
      %v2594 = vsub.f32 %v1484, 99.0
      %v2595 = vsub.f32 %v1486, 99.0
      %v2596 = vsub.f32 %v1677, 99.0
      %v2597 = vsub.f32 %v1679, 99.0
      %v2598 = vsub.f32 %v1870, 99.0
      %v2599 = vsub.f32 %v1872, 99.0
      %v2600 = vsub.f32 %v523, 99.0
      %v2601 = vsub.f32 %v525, 99.0
      %v2602 = vsub.f32 %v716, 99.0
      %v2603 = vsub.f32 %v718, 99.0
      %v2604 = vsub.f32 %v909, 99.0
      %v2605 = vsub.f32 %v911, 99.0
      %v2606 = vsub.f32 %v1102, 99.0
      %v2607 = vsub.f32 %v1104, 99.0
      %v2608 = vsub.f32 %v1295, 99.0
      %v2609 = vsub.f32 %v1297, 99.0
      %v2610 = vsub.f32 %v1488, 99.0
      %v2611 = vsub.f32 %v1490, 99.0
      %v2612 = vsub.f32 %v1681, 99.0
      %v2613 = vsub.f32 %v1683, 99.0
      %v2614 = vsub.f32 %v1874, 99.0
      %v2615 = vsub.f32 %v1876, 99.0
      %v2616 = vsub.f32 %v529, 99.0
      %v2617 = vsub.f32 %v531, 99.0
      %v2618 = vsub.f32 %v722, 99.0
      %v2619 = vsub.f32 %v724, 99.0
      %v2620 = vsub.f32 %v915, 99.0
      %v2621 = vsub.f32 %v917, 99.0
      %v2622 = vsub.f32 %v1108, 99.0
      %v2623 = vsub.f32 %v1110, 99.0
      %v2624 = vsub.f32 %v1301, 99.0
      %v2625 = vsub.f32 %v1303, 99.0
      %v2626 = vsub.f32 %v1494, 99.0
      %v2627 = vsub.f32 %v1496, 99.0
      %v2628 = vsub.f32 %v1687, 99.0
      %v2629 = vsub.f32 %v1689, 99.0
      %v2630 = vsub.f32 %v1880, 99.0
      %v2631 = vsub.f32 %v1882, 99.0
      %v2632 = vsub.f32 %v533, 99.0
      %v2633 = vsub.f32 %v535, 99.0
      %v2634 = vsub.f32 %v726, 99.0
      %v2635 = vsub.f32 %v728, 99.0
      %v2636 = vsub.f32 %v919, 99.0
      %v2637 = vsub.f32 %v921, 99.0
      %v2638 = vsub.f32 %v1112, 99.0
      %v2639 = vsub.f32 %v1114, 99.0
      %v2640 = vsub.f32 %v1305, 99.0
      %v2641 = vsub.f32 %v1307, 99.0
      %v2642 = vsub.f32 %v1498, 99.0
      %v2643 = vsub.f32 %v1500, 99.0
      %v2644 = vsub.f32 %v1691, 99.0
      %v2645 = vsub.f32 %v1693, 99.0
      %v2646 = vsub.f32 %v1884, 99.0
      %v2647 = vsub.f32 %v1886, 99.0
      %v2648 = vsub.f32 %v539, 99.0
      %v2649 = vsub.f32 %v541, 99.0
      %v2650 = vsub.f32 %v732, 99.0
      %v2651 = vsub.f32 %v734, 99.0
      %v2652 = vsub.f32 %v925, 99.0
      %v2653 = vsub.f32 %v927, 99.0
      %v2654 = vsub.f32 %v1118, 99.0
      %v2655 = vsub.f32 %v1120, 99.0
      %v2656 = vsub.f32 %v1311, 99.0
      %v2657 = vsub.f32 %v1313, 99.0
      %v2658 = vsub.f32 %v1504, 99.0
      %v2659 = vsub.f32 %v1506, 99.0
      %v2660 = vsub.f32 %v1697, 99.0
      %v2661 = vsub.f32 %v1699, 99.0
      %v2662 = vsub.f32 %v1890, 99.0
      %v2663 = vsub.f32 %v1892, 99.0
      %v2664 = vsub.f32 %v543, 99.0
      %v2665 = vsub.f32 %v545, 99.0
      %v2666 = vsub.f32 %v736, 99.0
      %v2667 = vsub.f32 %v738, 99.0
      %v2668 = vsub.f32 %v929, 99.0
      %v2669 = vsub.f32 %v931, 99.0
      %v2670 = vsub.f32 %v1122, 99.0
      %v2671 = vsub.f32 %v1124, 99.0
      %v2672 = vsub.f32 %v1315, 99.0
      %v2673 = vsub.f32 %v1317, 99.0
      %v2674 = vsub.f32 %v1508, 99.0
      %v2675 = vsub.f32 %v1510, 99.0
      %v2676 = vsub.f32 %v1701, 99.0
      %v2677 = vsub.f32 %v1703, 99.0
      %v2678 = vsub.f32 %v1894, 99.0
      %v2679 = vsub.f32 %v1896, 99.0
      %v2680 = vsub.f32 %v549, 99.0
      %v2681 = vsub.f32 %v551, 99.0
      %v2682 = vsub.f32 %v742, 99.0
      %v2683 = vsub.f32 %v744, 99.0
      %v2684 = vsub.f32 %v935, 99.0
      %v2685 = vsub.f32 %v937, 99.0
      %v2686 = vsub.f32 %v1128, 99.0
      %v2687 = vsub.f32 %v1130, 99.0
      %v2688 = vsub.f32 %v1321, 99.0
      %v2689 = vsub.f32 %v1323, 99.0
      %v2690 = vsub.f32 %v1514, 99.0
      %v2691 = vsub.f32 %v1516, 99.0
      %v2692 = vsub.f32 %v1707, 99.0
      %v2693 = vsub.f32 %v1709, 99.0
      %v2694 = vsub.f32 %v1900, 99.0
      %v2695 = vsub.f32 %v1902, 99.0
      %v2696 = vsub.f32 %v553, 99.0
      %v2697 = vsub.f32 %v555, 99.0
      %v2698 = vsub.f32 %v746, 99.0
      %v2699 = vsub.f32 %v748, 99.0
      %v2700 = vsub.f32 %v939, 99.0
      %v2701 = vsub.f32 %v941, 99.0
      %v2702 = vsub.f32 %v1132, 99.0
      %v2703 = vsub.f32 %v1134, 99.0
      %v2704 = vsub.f32 %v1325, 99.0
      %v2705 = vsub.f32 %v1327, 99.0
      %v2706 = vsub.f32 %v1518, 99.0
      %v2707 = vsub.f32 %v1520, 99.0
      %v2708 = vsub.f32 %v1711, 99.0
      %v2709 = vsub.f32 %v1713, 99.0
      %v2710 = vsub.f32 %v1904, 99.0
      %v2711 = vsub.f32 %v1906, 99.0
      %v2712 = vsub.f32 %v559, 99.0
      %v2713 = vsub.f32 %v561, 99.0
      %v2714 = vsub.f32 %v752, 99.0
      %v2715 = vsub.f32 %v754, 99.0
      %v2716 = vsub.f32 %v945, 99.0
      %v2717 = vsub.f32 %v947, 99.0
      %v2718 = vsub.f32 %v1138, 99.0
      %v2719 = vsub.f32 %v1140, 99.0
      %v2720 = vsub.f32 %v1331, 99.0
      %v2721 = vsub.f32 %v1333, 99.0
      %v2722 = vsub.f32 %v1524, 99.0
      %v2723 = vsub.f32 %v1526, 99.0
      %v2724 = vsub.f32 %v1717, 99.0
      %v2725 = vsub.f32 %v1719, 99.0
      %v2726 = vsub.f32 %v1910, 99.0
      %v2727 = vsub.f32 %v1912, 99.0
      %v2728 = vsub.f32 %v563, 99.0
      %v2729 = vsub.f32 %v565, 99.0
      %v2730 = vsub.f32 %v756, 99.0
      %v2731 = vsub.f32 %v758, 99.0
      %v2732 = vsub.f32 %v949, 99.0
      %v2733 = vsub.f32 %v951, 99.0
      %v2734 = vsub.f32 %v1142, 99.0
      %v2735 = vsub.f32 %v1144, 99.0
      %v2736 = vsub.f32 %v1335, 99.0
      %v2737 = vsub.f32 %v1337, 99.0
      %v2738 = vsub.f32 %v1528, 99.0
      %v2739 = vsub.f32 %v1530, 99.0
      %v2740 = vsub.f32 %v1721, 99.0
      %v2741 = vsub.f32 %v1723, 99.0
      %v2742 = vsub.f32 %v1914, 99.0
      %v2743 = vsub.f32 %v1916, 99.0
      %v2744 = vsub.f32 %v569, 99.0
      %v2745 = vsub.f32 %v571, 99.0
      %v2746 = vsub.f32 %v762, 99.0
      %v2747 = vsub.f32 %v764, 99.0
      %v2748 = vsub.f32 %v955, 99.0
      %v2749 = vsub.f32 %v957, 99.0
      %v2750 = vsub.f32 %v1148, 99.0
      %v2751 = vsub.f32 %v1150, 99.0
      %v2752 = vsub.f32 %v1341, 99.0
      %v2753 = vsub.f32 %v1343, 99.0
      %v2754 = vsub.f32 %v1534, 99.0
      %v2755 = vsub.f32 %v1536, 99.0
      %v2756 = vsub.f32 %v1727, 99.0
      %v2757 = vsub.f32 %v1729, 99.0
      %v2758 = vsub.f32 %v1920, 99.0
      %v2759 = vsub.f32 %v1922, 99.0
      %v2760 = vsub.f32 %v573, 99.0
      %v2761 = vsub.f32 %v575, 99.0
      %v2762 = vsub.f32 %v766, 99.0
      %v2763 = vsub.f32 %v768, 99.0
      %v2764 = vsub.f32 %v959, 99.0
      %v2765 = vsub.f32 %v961, 99.0
      %v2766 = vsub.f32 %v1152, 99.0
      %v2767 = vsub.f32 %v1154, 99.0
      %v2768 = vsub.f32 %v1345, 99.0
      %v2769 = vsub.f32 %v1347, 99.0
      %v2770 = vsub.f32 %v1538, 99.0
      %v2771 = vsub.f32 %v1540, 99.0
      %v2772 = vsub.f32 %v1731, 99.0
      %v2773 = vsub.f32 %v1733, 99.0
      %v2774 = vsub.f32 %v1924, 99.0
      %v2775 = vsub.f32 %v1926, 99.0
      %v2776 = vsub.f32 %v579, 99.0
      %v2777 = vsub.f32 %v581, 99.0
      %v2778 = vsub.f32 %v772, 99.0
      %v2779 = vsub.f32 %v774, 99.0
      %v2780 = vsub.f32 %v965, 99.0
      %v2781 = vsub.f32 %v967, 99.0
      %v2782 = vsub.f32 %v1158, 99.0
      %v2783 = vsub.f32 %v1160, 99.0
      %v2784 = vsub.f32 %v1351, 99.0
      %v2785 = vsub.f32 %v1353, 99.0
      %v2786 = vsub.f32 %v1544, 99.0
      %v2787 = vsub.f32 %v1546, 99.0
      %v2788 = vsub.f32 %v1737, 99.0
      %v2789 = vsub.f32 %v1739, 99.0
      %v2790 = vsub.f32 %v1930, 99.0
      %v2791 = vsub.f32 %v1932, 99.0
      %v2792 = vsub.f32 %v583, 99.0
      %v2793 = vsub.f32 %v585, 99.0
      %v2794 = vsub.f32 %v776, 99.0
      %v2795 = vsub.f32 %v778, 99.0
      %v2796 = vsub.f32 %v969, 99.0
      %v2797 = vsub.f32 %v971, 99.0
      %v2798 = vsub.f32 %v1162, 99.0
      %v2799 = vsub.f32 %v1164, 99.0
      %v2800 = vsub.f32 %v1355, 99.0
      %v2801 = vsub.f32 %v1357, 99.0
      %v2802 = vsub.f32 %v1548, 99.0
      %v2803 = vsub.f32 %v1550, 99.0
      %v2804 = vsub.f32 %v1741, 99.0
      %v2805 = vsub.f32 %v1743, 99.0
      %v2806 = vsub.f32 %v1934, 99.0
      %v2807 = vsub.f32 %v1936, 99.0
      %v2808 = vsub.f32 %v589, 99.0
      %v2809 = vsub.f32 %v591, 99.0
      %v2810 = vsub.f32 %v782, 99.0
      %v2811 = vsub.f32 %v784, 99.0
      %v2812 = vsub.f32 %v975, 99.0
      %v2813 = vsub.f32 %v977, 99.0
      %v2814 = vsub.f32 %v1168, 99.0
      %v2815 = vsub.f32 %v1170, 99.0
      %v2816 = vsub.f32 %v1361, 99.0
      %v2817 = vsub.f32 %v1363, 99.0
      %v2818 = vsub.f32 %v1554, 99.0
      %v2819 = vsub.f32 %v1556, 99.0
      %v2820 = vsub.f32 %v1747, 99.0
      %v2821 = vsub.f32 %v1749, 99.0
      %v2822 = vsub.f32 %v1940, 99.0
      %v2823 = vsub.f32 %v1942, 99.0
      %v2824 = vsub.f32 %v593, 99.0
      %v2825 = vsub.f32 %v595, 99.0
      %v2826 = vsub.f32 %v786, 99.0
      %v2827 = vsub.f32 %v788, 99.0
      %v2828 = vsub.f32 %v979, 99.0
      %v2829 = vsub.f32 %v981, 99.0
      %v2830 = vsub.f32 %v1172, 99.0
      %v2831 = vsub.f32 %v1174, 99.0
      %v2832 = vsub.f32 %v1365, 99.0
      %v2833 = vsub.f32 %v1367, 99.0
      %v2834 = vsub.f32 %v1558, 99.0
      %v2835 = vsub.f32 %v1560, 99.0
      %v2836 = vsub.f32 %v1751, 99.0
      %v2837 = vsub.f32 %v1753, 99.0
      %v2838 = vsub.f32 %v1944, 99.0
      %v2839 = vsub.f32 %v1946, 99.0
      %v2840 = vsub.f32 %v599, 99.0
      %v2841 = vsub.f32 %v601, 99.0
      %v2842 = vsub.f32 %v792, 99.0
      %v2843 = vsub.f32 %v794, 99.0
      %v2844 = vsub.f32 %v985, 99.0
      %v2845 = vsub.f32 %v987, 99.0
      %v2846 = vsub.f32 %v1178, 99.0
      %v2847 = vsub.f32 %v1180, 99.0
      %v2848 = vsub.f32 %v1371, 99.0
      %v2849 = vsub.f32 %v1373, 99.0
      %v2850 = vsub.f32 %v1564, 99.0
      %v2851 = vsub.f32 %v1566, 99.0
      %v2852 = vsub.f32 %v1757, 99.0
      %v2853 = vsub.f32 %v1759, 99.0
      %v2854 = vsub.f32 %v1950, 99.0
      %v2855 = vsub.f32 %v1952, 99.0
      %v2856 = vsub.f32 %v603, 99.0
      %v2857 = vsub.f32 %v605, 99.0
      %v2858 = vsub.f32 %v796, 99.0
      %v2859 = vsub.f32 %v798, 99.0
      %v2860 = vsub.f32 %v989, 99.0
      %v2861 = vsub.f32 %v991, 99.0
      %v2862 = vsub.f32 %v1182, 99.0
      %v2863 = vsub.f32 %v1184, 99.0
      %v2864 = vsub.f32 %v1375, 99.0
      %v2865 = vsub.f32 %v1377, 99.0
      %v2866 = vsub.f32 %v1568, 99.0
      %v2867 = vsub.f32 %v1570, 99.0
      %v2868 = vsub.f32 %v1761, 99.0
      %v2869 = vsub.f32 %v1763, 99.0
      %v2870 = vsub.f32 %v1954, 99.0
      %v2871 = vsub.f32 %v1956, 99.0
      %v2872 = vsub.f32 %v609, 99.0
      %v2873 = vsub.f32 %v611, 99.0
      %v2874 = vsub.f32 %v802, 99.0
      %v2875 = vsub.f32 %v804, 99.0
      %v2876 = vsub.f32 %v995, 99.0
      %v2877 = vsub.f32 %v997, 99.0
      %v2878 = vsub.f32 %v1188, 99.0
      %v2879 = vsub.f32 %v1190, 99.0
      %v2880 = vsub.f32 %v1381, 99.0
      %v2881 = vsub.f32 %v1383, 99.0
      %v2882 = vsub.f32 %v1574, 99.0
      %v2883 = vsub.f32 %v1576, 99.0
      %v2884 = vsub.f32 %v1767, 99.0
      %v2885 = vsub.f32 %v1769, 99.0
      %v2886 = vsub.f32 %v1960, 99.0
      %v2887 = vsub.f32 %v1962, 99.0
      %v2888 = vsub.f32 %v613, 99.0
      %v2889 = vsub.f32 %v615, 99.0
      %v2890 = vsub.f32 %v806, 99.0
      %v2891 = vsub.f32 %v808, 99.0
      %v2892 = vsub.f32 %v999, 99.0
      %v2893 = vsub.f32 %v1001, 99.0
      %v2894 = vsub.f32 %v1192, 99.0
      %v2895 = vsub.f32 %v1194, 99.0
      %v2896 = vsub.f32 %v1385, 99.0
      %v2897 = vsub.f32 %v1387, 99.0
      %v2898 = vsub.f32 %v1578, 99.0
      %v2899 = vsub.f32 %v1580, 99.0
      %v2900 = vsub.f32 %v1771, 99.0
      %v2901 = vsub.f32 %v1773, 99.0
      %v2902 = vsub.f32 %v1964, 99.0
      %v2903 = vsub.f32 %v1966, 99.0
      %v2904 = vsub.f32 %v619, 99.0
      %v2905 = vsub.f32 %v621, 99.0
      %v2906 = vsub.f32 %v812, 99.0
      %v2907 = vsub.f32 %v814, 99.0
      %v2908 = vsub.f32 %v1005, 99.0
      %v2909 = vsub.f32 %v1007, 99.0
      %v2910 = vsub.f32 %v1198, 99.0
      %v2911 = vsub.f32 %v1200, 99.0
      %v2912 = vsub.f32 %v1391, 99.0
      %v2913 = vsub.f32 %v1393, 99.0
      %v2914 = vsub.f32 %v1584, 99.0
      %v2915 = vsub.f32 %v1586, 99.0
      %v2916 = vsub.f32 %v1777, 99.0
      %v2917 = vsub.f32 %v1779, 99.0
      %v2918 = vsub.f32 %v1970, 99.0
      %v2919 = vsub.f32 %v1972, 99.0
      %v2920 = vsub.f32 %v623, 99.0
      %v2921 = vsub.f32 %v625, 99.0
      %v2922 = vsub.f32 %v816, 99.0
      %v2923 = vsub.f32 %v818, 99.0
      %v2924 = vsub.f32 %v1009, 99.0
      %v2925 = vsub.f32 %v1011, 99.0
      %v2926 = vsub.f32 %v1202, 99.0
      %v2927 = vsub.f32 %v1204, 99.0
      %v2928 = vsub.f32 %v1395, 99.0
      %v2929 = vsub.f32 %v1397, 99.0
      %v2930 = vsub.f32 %v1588, 99.0
      %v2931 = vsub.f32 %v1590, 99.0
      %v2932 = vsub.f32 %v1781, 99.0
      %v2933 = vsub.f32 %v1783, 99.0
      %v2934 = vsub.f32 %v1974, 99.0
      %v2935 = vsub.f32 %v1976, 99.0
      %v2936 = vsub.f32 %v629, 99.0
      %v2937 = vsub.f32 %v631, 99.0
      %v2938 = vsub.f32 %v822, 99.0
      %v2939 = vsub.f32 %v824, 99.0
      %v2940 = vsub.f32 %v1015, 99.0
      %v2941 = vsub.f32 %v1017, 99.0
      %v2942 = vsub.f32 %v1208, 99.0
      %v2943 = vsub.f32 %v1210, 99.0
      %v2944 = vsub.f32 %v1401, 99.0
      %v2945 = vsub.f32 %v1403, 99.0
      %v2946 = vsub.f32 %v1594, 99.0
      %v2947 = vsub.f32 %v1596, 99.0
      %v2948 = vsub.f32 %v1787, 99.0
      %v2949 = vsub.f32 %v1789, 99.0
      %v2950 = vsub.f32 %v1980, 99.0
      %v2951 = vsub.f32 %v1982, 99.0
      %v2952 = vsub.f32 %v633, 99.0
      %v2953 = vsub.f32 %v635, 99.0
      %v2954 = vsub.f32 %v826, 99.0
      %v2955 = vsub.f32 %v828, 99.0
      %v2956 = vsub.f32 %v1019, 99.0
      %v2957 = vsub.f32 %v1021, 99.0
      %v2958 = vsub.f32 %v1212, 99.0
      %v2959 = vsub.f32 %v1214, 99.0
      %v2960 = vsub.f32 %v1405, 99.0
      %v2961 = vsub.f32 %v1407, 99.0
      %v2962 = vsub.f32 %v1598, 99.0
      %v2963 = vsub.f32 %v1600, 99.0
      %v2964 = vsub.f32 %v1791, 99.0
      %v2965 = vsub.f32 %v1793, 99.0
      %v2966 = vsub.f32 %v1984, 99.0
      %v2967 = vsub.f32 %v1986, 99.0
      %v2968 = vsub.f32 %v639, 99.0
      %v2969 = vsub.f32 %v641, 99.0
      %v2970 = vsub.f32 %v832, 99.0
      %v2971 = vsub.f32 %v834, 99.0
      %v2972 = vsub.f32 %v1025, 99.0
      %v2973 = vsub.f32 %v1027, 99.0
      %v2974 = vsub.f32 %v1218, 99.0
      %v2975 = vsub.f32 %v1220, 99.0
      %v2976 = vsub.f32 %v1411, 99.0
      %v2977 = vsub.f32 %v1413, 99.0
      %v2978 = vsub.f32 %v1604, 99.0
      %v2979 = vsub.f32 %v1606, 99.0
      %v2980 = vsub.f32 %v1797, 99.0
      %v2981 = vsub.f32 %v1799, 99.0
      %v2982 = vsub.f32 %v1990, 99.0
      %v2983 = vsub.f32 %v1992, 99.0
      %v2984 = vsub.f32 %v643, 99.0
      %v2985 = vsub.f32 %v645, 99.0
      %v2986 = vsub.f32 %v836, 99.0
      %v2987 = vsub.f32 %v838, 99.0
      %v2988 = vsub.f32 %v1029, 99.0
      %v2989 = vsub.f32 %v1031, 99.0
      %v2990 = vsub.f32 %v1222, 99.0
      %v2991 = vsub.f32 %v1224, 99.0
      %v2992 = vsub.f32 %v1415, 99.0
      %v2993 = vsub.f32 %v1417, 99.0
      %v2994 = vsub.f32 %v1608, 99.0
      %v2995 = vsub.f32 %v1610, 99.0
      %v2996 = vsub.f32 %v1801, 99.0
      %v2997 = vsub.f32 %v1803, 99.0
      %v2998 = vsub.f32 %v1994, 99.0
      %v2999 = vsub.f32 %v1996, 99.0
      %v3000 = vsub.f32 %v649, 99.0
      %v3001 = vsub.f32 %v651, 99.0
      %v3002 = vsub.f32 %v842, 99.0
      %v3003 = vsub.f32 %v844, 99.0
      %v3004 = vsub.f32 %v1035, 99.0
      %v3005 = vsub.f32 %v1037, 99.0
      %v3006 = vsub.f32 %v1228, 99.0
      %v3007 = vsub.f32 %v1230, 99.0
      %v3008 = vsub.f32 %v1421, 99.0
      %v3009 = vsub.f32 %v1423, 99.0
      %v3010 = vsub.f32 %v1614, 99.0
      %v3011 = vsub.f32 %v1616, 99.0
      %v3012 = vsub.f32 %v1807, 99.0
      %v3013 = vsub.f32 %v1809, 99.0
      %v3014 = vsub.f32 %v2000, 99.0
      %v3015 = vsub.f32 %v2002, 99.0
      %v3016 = vsub.f32 %v653, 99.0
      %v3017 = vsub.f32 %v655, 99.0
      %v3018 = vsub.f32 %v846, 99.0
      %v3019 = vsub.f32 %v848, 99.0
      %v3020 = vsub.f32 %v1039, 99.0
      %v3021 = vsub.f32 %v1041, 99.0
      %v3022 = vsub.f32 %v1232, 99.0
      %v3023 = vsub.f32 %v1234, 99.0
      %v3024 = vsub.f32 %v1425, 99.0
      %v3025 = vsub.f32 %v1427, 99.0
      %v3026 = vsub.f32 %v1618, 99.0
      %v3027 = vsub.f32 %v1620, 99.0
      %v3028 = vsub.f32 %v1811, 99.0
      %v3029 = vsub.f32 %v1813, 99.0
      %v3030 = vsub.f32 %v2004, 99.0
      %v3031 = vsub.f32 %v2006, 99.0
      %v3032 = vmul.f32 %v2008, %v2520
      %v3033 = vmul.f32 %v2009, %v2521
      %v3034 = vmul.f32 %v2010, %v2522
      %v3035 = vmul.f32 %v2011, %v2523
      %v3036 = vmul.f32 %v2012, %v2524
      %v3037 = vmul.f32 %v2013, %v2525
      %v3038 = vmul.f32 %v2014, %v2526
      %v3039 = vmul.f32 %v2015, %v2527
      %v3040 = vmul.f32 %v2016, %v2528
      %v3041 = vmul.f32 %v2017, %v2529
      %v3042 = vmul.f32 %v2018, %v2530
      %v3043 = vmul.f32 %v2019, %v2531
      %v3044 = vmul.f32 %v2020, %v2532
      %v3045 = vmul.f32 %v2021, %v2533
      %v3046 = vmul.f32 %v2022, %v2534
      %v3047 = vmul.f32 %v2023, %v2535
      %v3048 = vmul.f32 %v2024, %v2536
      %v3049 = vmul.f32 %v2025, %v2537
      %v3050 = vmul.f32 %v2026, %v2538
      %v3051 = vmul.f32 %v2027, %v2539
      %v3052 = vmul.f32 %v2028, %v2540
      %v3053 = vmul.f32 %v2029, %v2541
      %v3054 = vmul.f32 %v2030, %v2542
      %v3055 = vmul.f32 %v2031, %v2543
      %v3056 = vmul.f32 %v2032, %v2544
      %v3057 = vmul.f32 %v2033, %v2545
      %v3058 = vmul.f32 %v2034, %v2546
      %v3059 = vmul.f32 %v2035, %v2547
      %v3060 = vmul.f32 %v2036, %v2548
      %v3061 = vmul.f32 %v2037, %v2549
      %v3062 = vmul.f32 %v2038, %v2550
      %v3063 = vmul.f32 %v2039, %v2551
      %v3064 = vmul.f32 %v2040, %v2552
      %v3065 = vmul.f32 %v2041, %v2553
      %v3066 = vmul.f32 %v2042, %v2554
      %v3067 = vmul.f32 %v2043, %v2555
      %v3068 = vmul.f32 %v2044, %v2556
      %v3069 = vmul.f32 %v2045, %v2557
      %v3070 = vmul.f32 %v2046, %v2558
      %v3071 = vmul.f32 %v2047, %v2559
      %v3072 = vmul.f32 %v2048, %v2560
      %v3073 = vmul.f32 %v2049, %v2561
      %v3074 = vmul.f32 %v2050, %v2562
      %v3075 = vmul.f32 %v2051, %v2563
      %v3076 = vmul.f32 %v2052, %v2564
      %v3077 = vmul.f32 %v2053, %v2565
      %v3078 = vmul.f32 %v2054, %v2566
      %v3079 = vmul.f32 %v2055, %v2567
      %v3080 = vmul.f32 %v2056, %v2568
      %v3081 = vmul.f32 %v2057, %v2569
      %v3082 = vmul.f32 %v2058, %v2570
      %v3083 = vmul.f32 %v2059, %v2571
      %v3084 = vmul.f32 %v2060, %v2572
      %v3085 = vmul.f32 %v2061, %v2573
      %v3086 = vmul.f32 %v2062, %v2574
      %v3087 = vmul.f32 %v2063, %v2575
      %v3088 = vmul.f32 %v2064, %v2576
      %v3089 = vmul.f32 %v2065, %v2577
      %v3090 = vmul.f32 %v2066, %v2578
      %v3091 = vmul.f32 %v2067, %v2579
      %v3092 = vmul.f32 %v2068, %v2580
      %v3093 = vmul.f32 %v2069, %v2581
      %v3094 = vmul.f32 %v2070, %v2582
      %v3095 = vmul.f32 %v2071, %v2583
      %v3096 = vmul.f32 %v2072, %v2584
      %v3097 = vmul.f32 %v2073, %v2585
      %v3098 = vmul.f32 %v2074, %v2586
      %v3099 = vmul.f32 %v2075, %v2587
      %v3100 = vmul.f32 %v2076, %v2588
      %v3101 = vmul.f32 %v2077, %v2589
      %v3102 = vmul.f32 %v2078, %v2590
      %v3103 = vmul.f32 %v2079, %v2591
      %v3104 = vmul.f32 %v2080, %v2592
      %v3105 = vmul.f32 %v2081, %v2593
      %v3106 = vmul.f32 %v2082, %v2594
      %v3107 = vmul.f32 %v2083, %v2595
      %v3108 = vmul.f32 %v2084, %v2596
      %v3109 = vmul.f32 %v2085, %v2597
      %v3110 = vmul.f32 %v2086, %v2598
      %v3111 = vmul.f32 %v2087, %v2599
      %v3112 = vmul.f32 %v2088, %v2600
      %v3113 = vmul.f32 %v2089, %v2601
      %v3114 = vmul.f32 %v2090, %v2602
      %v3115 = vmul.f32 %v2091, %v2603
      %v3116 = vmul.f32 %v2092, %v2604
      %v3117 = vmul.f32 %v2093, %v2605
      %v3118 = vmul.f32 %v2094, %v2606
      %v3119 = vmul.f32 %v2095, %v2607
      %v3120 = vmul.f32 %v2096, %v2608
      %v3121 = vmul.f32 %v2097, %v2609
      %v3122 = vmul.f32 %v2098, %v2610
      %v3123 = vmul.f32 %v2099, %v2611
      %v3124 = vmul.f32 %v2100, %v2612
      %v3125 = vmul.f32 %v2101, %v2613
      %v3126 = vmul.f32 %v2102, %v2614
      %v3127 = vmul.f32 %v2103, %v2615
      %v3128 = vmul.f32 %v2104, %v2616
      %v3129 = vmul.f32 %v2105, %v2617
      %v3130 = vmul.f32 %v2106, %v2618
      %v3131 = vmul.f32 %v2107, %v2619
      %v3132 = vmul.f32 %v2108, %v2620
      %v3133 = vmul.f32 %v2109, %v2621
      %v3134 = vmul.f32 %v2110, %v2622
      %v3135 = vmul.f32 %v2111, %v2623
      %v3136 = vmul.f32 %v2112, %v2624
      %v3137 = vmul.f32 %v2113, %v2625
      %v3138 = vmul.f32 %v2114, %v2626
      %v3139 = vmul.f32 %v2115, %v2627
      %v3140 = vmul.f32 %v2116, %v2628
      %v3141 = vmul.f32 %v2117, %v2629
      %v3142 = vmul.f32 %v2118, %v2630
      %v3143 = vmul.f32 %v2119, %v2631
      %v3144 = vmul.f32 %v2120, %v2632
      %v3145 = vmul.f32 %v2121, %v2633
      %v3146 = vmul.f32 %v2122, %v2634
      %v3147 = vmul.f32 %v2123, %v2635
      %v3148 = vmul.f32 %v2124, %v2636
      %v3149 = vmul.f32 %v2125, %v2637
      %v3150 = vmul.f32 %v2126, %v2638
      %v3151 = vmul.f32 %v2127, %v2639
      %v3152 = vmul.f32 %v2128, %v2640
      %v3153 = vmul.f32 %v2129, %v2641
      %v3154 = vmul.f32 %v2130, %v2642
      %v3155 = vmul.f32 %v2131, %v2643
      %v3156 = vmul.f32 %v2132, %v2644
      %v3157 = vmul.f32 %v2133, %v2645
      %v3158 = vmul.f32 %v2134, %v2646
      %v3159 = vmul.f32 %v2135, %v2647
      %v3160 = vmul.f32 %v2136, %v2648
      %v3161 = vmul.f32 %v2137, %v2649
      %v3162 = vmul.f32 %v2138, %v2650
      %v3163 = vmul.f32 %v2139, %v2651
      %v3164 = vmul.f32 %v2140, %v2652
      %v3165 = vmul.f32 %v2141, %v2653
      %v3166 = vmul.f32 %v2142, %v2654
      %v3167 = vmul.f32 %v2143, %v2655
      %v3168 = vmul.f32 %v2144, %v2656
      %v3169 = vmul.f32 %v2145, %v2657
      %v3170 = vmul.f32 %v2146, %v2658
      %v3171 = vmul.f32 %v2147, %v2659
      %v3172 = vmul.f32 %v2148, %v2660
      %v3173 = vmul.f32 %v2149, %v2661
      %v3174 = vmul.f32 %v2150, %v2662
      %v3175 = vmul.f32 %v2151, %v2663
      %v3176 = vmul.f32 %v2152, %v2664
      %v3177 = vmul.f32 %v2153, %v2665
      %v3178 = vmul.f32 %v2154, %v2666
      %v3179 = vmul.f32 %v2155, %v2667
      %v3180 = vmul.f32 %v2156, %v2668
      %v3181 = vmul.f32 %v2157, %v2669
      %v3182 = vmul.f32 %v2158, %v2670
      %v3183 = vmul.f32 %v2159, %v2671
      %v3184 = vmul.f32 %v2160, %v2672
      %v3185 = vmul.f32 %v2161, %v2673
      %v3186 = vmul.f32 %v2162, %v2674
      %v3187 = vmul.f32 %v2163, %v2675
      %v3188 = vmul.f32 %v2164, %v2676
      %v3189 = vmul.f32 %v2165, %v2677
      %v3190 = vmul.f32 %v2166, %v2678
      %v3191 = vmul.f32 %v2167, %v2679
      %v3192 = vmul.f32 %v2168, %v2680
      %v3193 = vmul.f32 %v2169, %v2681
      %v3194 = vmul.f32 %v2170, %v2682
      %v3195 = vmul.f32 %v2171, %v2683
      %v3196 = vmul.f32 %v2172, %v2684
      %v3197 = vmul.f32 %v2173, %v2685
      %v3198 = vmul.f32 %v2174, %v2686
      %v3199 = vmul.f32 %v2175, %v2687
      %v3200 = vmul.f32 %v2176, %v2688
      %v3201 = vmul.f32 %v2177, %v2689
      %v3202 = vmul.f32 %v2178, %v2690
      %v3203 = vmul.f32 %v2179, %v2691
      %v3204 = vmul.f32 %v2180, %v2692
      %v3205 = vmul.f32 %v2181, %v2693
      %v3206 = vmul.f32 %v2182, %v2694
      %v3207 = vmul.f32 %v2183, %v2695
      %v3208 = vmul.f32 %v2184, %v2696
      %v3209 = vmul.f32 %v2185, %v2697
      %v3210 = vmul.f32 %v2186, %v2698
      %v3211 = vmul.f32 %v2187, %v2699
      %v3212 = vmul.f32 %v2188, %v2700
      %v3213 = vmul.f32 %v2189, %v2701
      %v3214 = vmul.f32 %v2190, %v2702
      %v3215 = vmul.f32 %v2191, %v2703
      %v3216 = vmul.f32 %v2192, %v2704
      %v3217 = vmul.f32 %v2193, %v2705
      %v3218 = vmul.f32 %v2194, %v2706
      %v3219 = vmul.f32 %v2195, %v2707
      %v3220 = vmul.f32 %v2196, %v2708
      %v3221 = vmul.f32 %v2197, %v2709
      %v3222 = vmul.f32 %v2198, %v2710
      %v3223 = vmul.f32 %v2199, %v2711
      %v3224 = vmul.f32 %v2200, %v2712
      %v3225 = vmul.f32 %v2201, %v2713
      %v3226 = vmul.f32 %v2202, %v2714
      %v3227 = vmul.f32 %v2203, %v2715
      %v3228 = vmul.f32 %v2204, %v2716
      %v3229 = vmul.f32 %v2205, %v2717
      %v3230 = vmul.f32 %v2206, %v2718
      %v3231 = vmul.f32 %v2207, %v2719
      %v3232 = vmul.f32 %v2208, %v2720
      %v3233 = vmul.f32 %v2209, %v2721
      %v3234 = vmul.f32 %v2210, %v2722
      %v3235 = vmul.f32 %v2211, %v2723
      %v3236 = vmul.f32 %v2212, %v2724
      %v3237 = vmul.f32 %v2213, %v2725
      %v3238 = vmul.f32 %v2214, %v2726
      %v3239 = vmul.f32 %v2215, %v2727
      %v3240 = vmul.f32 %v2216, %v2728
      %v3241 = vmul.f32 %v2217, %v2729
      %v3242 = vmul.f32 %v2218, %v2730
      %v3243 = vmul.f32 %v2219, %v2731
      %v3244 = vmul.f32 %v2220, %v2732
      %v3245 = vmul.f32 %v2221, %v2733
      %v3246 = vmul.f32 %v2222, %v2734
      %v3247 = vmul.f32 %v2223, %v2735
      %v3248 = vmul.f32 %v2224, %v2736
      %v3249 = vmul.f32 %v2225, %v2737
      %v3250 = vmul.f32 %v2226, %v2738
      %v3251 = vmul.f32 %v2227, %v2739
      %v3252 = vmul.f32 %v2228, %v2740
      %v3253 = vmul.f32 %v2229, %v2741
      %v3254 = vmul.f32 %v2230, %v2742
      %v3255 = vmul.f32 %v2231, %v2743
      %v3256 = vmul.f32 %v2232, %v2744
      %v3257 = vmul.f32 %v2233, %v2745
      %v3258 = vmul.f32 %v2234, %v2746
      %v3259 = vmul.f32 %v2235, %v2747
      %v3260 = vmul.f32 %v2236, %v2748
      %v3261 = vmul.f32 %v2237, %v2749
      %v3262 = vmul.f32 %v2238, %v2750
      %v3263 = vmul.f32 %v2239, %v2751
      %v3264 = vmul.f32 %v2240, %v2752
      %v3265 = vmul.f32 %v2241, %v2753
      %v3266 = vmul.f32 %v2242, %v2754
      %v3267 = vmul.f32 %v2243, %v2755
      %v3268 = vmul.f32 %v2244, %v2756
      %v3269 = vmul.f32 %v2245, %v2757
      %v3270 = vmul.f32 %v2246, %v2758
      %v3271 = vmul.f32 %v2247, %v2759
      %v3272 = vmul.f32 %v2248, %v2760
      %v3273 = vmul.f32 %v2249, %v2761
      %v3274 = vmul.f32 %v2250, %v2762
      %v3275 = vmul.f32 %v2251, %v2763
      %v3276 = vmul.f32 %v2252, %v2764
      %v3277 = vmul.f32 %v2253, %v2765
      %v3278 = vmul.f32 %v2254, %v2766
      %v3279 = vmul.f32 %v2255, %v2767
      %v3280 = vmul.f32 %v2256, %v2768
      %v3281 = vmul.f32 %v2257, %v2769
      %v3282 = vmul.f32 %v2258, %v2770
      %v3283 = vmul.f32 %v2259, %v2771
      %v3284 = vmul.f32 %v2260, %v2772
      %v3285 = vmul.f32 %v2261, %v2773
      %v3286 = vmul.f32 %v2262, %v2774
      %v3287 = vmul.f32 %v2263, %v2775
      %v3288 = vmul.f32 %v2264, %v2776
      %v3289 = vmul.f32 %v2265, %v2777
      %v3290 = vmul.f32 %v2266, %v2778
      %v3291 = vmul.f32 %v2267, %v2779
      %v3292 = vmul.f32 %v2268, %v2780
      %v3293 = vmul.f32 %v2269, %v2781
      %v3294 = vmul.f32 %v2270, %v2782
      %v3295 = vmul.f32 %v2271, %v2783
      %v3296 = vmul.f32 %v2272, %v2784
      %v3297 = vmul.f32 %v2273, %v2785
      %v3298 = vmul.f32 %v2274, %v2786
      %v3299 = vmul.f32 %v2275, %v2787
      %v3300 = vmul.f32 %v2276, %v2788
      %v3301 = vmul.f32 %v2277, %v2789
      %v3302 = vmul.f32 %v2278, %v2790
      %v3303 = vmul.f32 %v2279, %v2791
      %v3304 = vmul.f32 %v2280, %v2792
      %v3305 = vmul.f32 %v2281, %v2793
      %v3306 = vmul.f32 %v2282, %v2794
      %v3307 = vmul.f32 %v2283, %v2795
      %v3308 = vmul.f32 %v2284, %v2796
      %v3309 = vmul.f32 %v2285, %v2797
      %v3310 = vmul.f32 %v2286, %v2798
      %v3311 = vmul.f32 %v2287, %v2799
      %v3312 = vmul.f32 %v2288, %v2800
      %v3313 = vmul.f32 %v2289, %v2801
      %v3314 = vmul.f32 %v2290, %v2802
      %v3315 = vmul.f32 %v2291, %v2803
      %v3316 = vmul.f32 %v2292, %v2804
      %v3317 = vmul.f32 %v2293, %v2805
      %v3318 = vmul.f32 %v2294, %v2806
      %v3319 = vmul.f32 %v2295, %v2807
      %v3320 = vmul.f32 %v2296, %v2808
      %v3321 = vmul.f32 %v2297, %v2809
      %v3322 = vmul.f32 %v2298, %v2810
      %v3323 = vmul.f32 %v2299, %v2811
      %v3324 = vmul.f32 %v2300, %v2812
      %v3325 = vmul.f32 %v2301, %v2813
      %v3326 = vmul.f32 %v2302, %v2814
      %v3327 = vmul.f32 %v2303, %v2815
      %v3328 = vmul.f32 %v2304, %v2816
      %v3329 = vmul.f32 %v2305, %v2817
      %v3330 = vmul.f32 %v2306, %v2818
      %v3331 = vmul.f32 %v2307, %v2819
      %v3332 = vmul.f32 %v2308, %v2820
      %v3333 = vmul.f32 %v2309, %v2821
      %v3334 = vmul.f32 %v2310, %v2822
      %v3335 = vmul.f32 %v2311, %v2823
      %v3336 = vmul.f32 %v2312, %v2824
      %v3337 = vmul.f32 %v2313, %v2825
      %v3338 = vmul.f32 %v2314, %v2826
      %v3339 = vmul.f32 %v2315, %v2827
      %v3340 = vmul.f32 %v2316, %v2828
      %v3341 = vmul.f32 %v2317, %v2829
      %v3342 = vmul.f32 %v2318, %v2830
      %v3343 = vmul.f32 %v2319, %v2831
      %v3344 = vmul.f32 %v2320, %v2832
      %v3345 = vmul.f32 %v2321, %v2833
      %v3346 = vmul.f32 %v2322, %v2834
      %v3347 = vmul.f32 %v2323, %v2835
      %v3348 = vmul.f32 %v2324, %v2836
      %v3349 = vmul.f32 %v2325, %v2837
      %v3350 = vmul.f32 %v2326, %v2838
      %v3351 = vmul.f32 %v2327, %v2839
      %v3352 = vmul.f32 %v2328, %v2840
      %v3353 = vmul.f32 %v2329, %v2841
      %v3354 = vmul.f32 %v2330, %v2842
      %v3355 = vmul.f32 %v2331, %v2843
      %v3356 = vmul.f32 %v2332, %v2844
      %v3357 = vmul.f32 %v2333, %v2845
      %v3358 = vmul.f32 %v2334, %v2846
      %v3359 = vmul.f32 %v2335, %v2847
      %v3360 = vmul.f32 %v2336, %v2848
      %v3361 = vmul.f32 %v2337, %v2849
      %v3362 = vmul.f32 %v2338, %v2850
      %v3363 = vmul.f32 %v2339, %v2851
      %v3364 = vmul.f32 %v2340, %v2852
      %v3365 = vmul.f32 %v2341, %v2853
      %v3366 = vmul.f32 %v2342, %v2854
      %v3367 = vmul.f32 %v2343, %v2855
      %v3368 = vmul.f32 %v2344, %v2856
      %v3369 = vmul.f32 %v2345, %v2857
      %v3370 = vmul.f32 %v2346, %v2858
      %v3371 = vmul.f32 %v2347, %v2859
      %v3372 = vmul.f32 %v2348, %v2860
      %v3373 = vmul.f32 %v2349, %v2861
      %v3374 = vmul.f32 %v2350, %v2862
      %v3375 = vmul.f32 %v2351, %v2863
      %v3376 = vmul.f32 %v2352, %v2864
      %v3377 = vmul.f32 %v2353, %v2865
      %v3378 = vmul.f32 %v2354, %v2866
      %v3379 = vmul.f32 %v2355, %v2867
      %v3380 = vmul.f32 %v2356, %v2868
      %v3381 = vmul.f32 %v2357, %v2869
      %v3382 = vmul.f32 %v2358, %v2870
      %v3383 = vmul.f32 %v2359, %v2871
      %v3384 = vmul.f32 %v2360, %v2872
      %v3385 = vmul.f32 %v2361, %v2873
      %v3386 = vmul.f32 %v2362, %v2874
      %v3387 = vmul.f32 %v2363, %v2875
      %v3388 = vmul.f32 %v2364, %v2876
      %v3389 = vmul.f32 %v2365, %v2877
      %v3390 = vmul.f32 %v2366, %v2878
      %v3391 = vmul.f32 %v2367, %v2879
      %v3392 = vmul.f32 %v2368, %v2880
      %v3393 = vmul.f32 %v2369, %v2881
      %v3394 = vmul.f32 %v2370, %v2882
      %v3395 = vmul.f32 %v2371, %v2883
      %v3396 = vmul.f32 %v2372, %v2884
      %v3397 = vmul.f32 %v2373, %v2885
      %v3398 = vmul.f32 %v2374, %v2886
      %v3399 = vmul.f32 %v2375, %v2887
      %v3400 = vmul.f32 %v2376, %v2888
      %v3401 = vmul.f32 %v2377, %v2889
      %v3402 = vmul.f32 %v2378, %v2890
      %v3403 = vmul.f32 %v2379, %v2891
      %v3404 = vmul.f32 %v2380, %v2892
      %v3405 = vmul.f32 %v2381, %v2893
      %v3406 = vmul.f32 %v2382, %v2894
      %v3407 = vmul.f32 %v2383, %v2895
      %v3408 = vmul.f32 %v2384, %v2896
      %v3409 = vmul.f32 %v2385, %v2897
      %v3410 = vmul.f32 %v2386, %v2898
      %v3411 = vmul.f32 %v2387, %v2899
      %v3412 = vmul.f32 %v2388, %v2900
      %v3413 = vmul.f32 %v2389, %v2901
      %v3414 = vmul.f32 %v2390, %v2902
      %v3415 = vmul.f32 %v2391, %v2903
      %v3416 = vmul.f32 %v2392, %v2904
      %v3417 = vmul.f32 %v2393, %v2905
      %v3418 = vmul.f32 %v2394, %v2906
      %v3419 = vmul.f32 %v2395, %v2907
      %v3420 = vmul.f32 %v2396, %v2908
      %v3421 = vmul.f32 %v2397, %v2909
      %v3422 = vmul.f32 %v2398, %v2910
      %v3423 = vmul.f32 %v2399, %v2911
      %v3424 = vmul.f32 %v2400, %v2912
      %v3425 = vmul.f32 %v2401, %v2913
      %v3426 = vmul.f32 %v2402, %v2914
      %v3427 = vmul.f32 %v2403, %v2915
      %v3428 = vmul.f32 %v2404, %v2916
      %v3429 = vmul.f32 %v2405, %v2917
      %v3430 = vmul.f32 %v2406, %v2918
      %v3431 = vmul.f32 %v2407, %v2919
      %v3432 = vmul.f32 %v2408, %v2920
      %v3433 = vmul.f32 %v2409, %v2921
      %v3434 = vmul.f32 %v2410, %v2922
      %v3435 = vmul.f32 %v2411, %v2923
      %v3436 = vmul.f32 %v2412, %v2924
      %v3437 = vmul.f32 %v2413, %v2925
      %v3438 = vmul.f32 %v2414, %v2926
      %v3439 = vmul.f32 %v2415, %v2927
      %v3440 = vmul.f32 %v2416, %v2928
      %v3441 = vmul.f32 %v2417, %v2929
      %v3442 = vmul.f32 %v2418, %v2930
      %v3443 = vmul.f32 %v2419, %v2931
      %v3444 = vmul.f32 %v2420, %v2932
      %v3445 = vmul.f32 %v2421, %v2933
      %v3446 = vmul.f32 %v2422, %v2934
      %v3447 = vmul.f32 %v2423, %v2935
      %v3448 = vmul.f32 %v2424, %v2936
      %v3449 = vmul.f32 %v2425, %v2937
      %v3450 = vmul.f32 %v2426, %v2938
      %v3451 = vmul.f32 %v2427, %v2939
      %v3452 = vmul.f32 %v2428, %v2940
      %v3453 = vmul.f32 %v2429, %v2941
      %v3454 = vmul.f32 %v2430, %v2942
      %v3455 = vmul.f32 %v2431, %v2943
      %v3456 = vmul.f32 %v2432, %v2944
      %v3457 = vmul.f32 %v2433, %v2945
      %v3458 = vmul.f32 %v2434, %v2946
      %v3459 = vmul.f32 %v2435, %v2947
      %v3460 = vmul.f32 %v2436, %v2948
      %v3461 = vmul.f32 %v2437, %v2949
      %v3462 = vmul.f32 %v2438, %v2950
      %v3463 = vmul.f32 %v2439, %v2951
      %v3464 = vmul.f32 %v2440, %v2952
      %v3465 = vmul.f32 %v2441, %v2953
      %v3466 = vmul.f32 %v2442, %v2954
      %v3467 = vmul.f32 %v2443, %v2955
      %v3468 = vmul.f32 %v2444, %v2956
      %v3469 = vmul.f32 %v2445, %v2957
      %v3470 = vmul.f32 %v2446, %v2958
      %v3471 = vmul.f32 %v2447, %v2959
      %v3472 = vmul.f32 %v2448, %v2960
      %v3473 = vmul.f32 %v2449, %v2961
      %v3474 = vmul.f32 %v2450, %v2962
      %v3475 = vmul.f32 %v2451, %v2963
      %v3476 = vmul.f32 %v2452, %v2964
      %v3477 = vmul.f32 %v2453, %v2965
      %v3478 = vmul.f32 %v2454, %v2966
      %v3479 = vmul.f32 %v2455, %v2967
      %v3480 = vmul.f32 %v2456, %v2968
      %v3481 = vmul.f32 %v2457, %v2969
      %v3482 = vmul.f32 %v2458, %v2970
      %v3483 = vmul.f32 %v2459, %v2971
      %v3484 = vmul.f32 %v2460, %v2972
      %v3485 = vmul.f32 %v2461, %v2973
      %v3486 = vmul.f32 %v2462, %v2974
      %v3487 = vmul.f32 %v2463, %v2975
      %v3488 = vmul.f32 %v2464, %v2976
      %v3489 = vmul.f32 %v2465, %v2977
      %v3490 = vmul.f32 %v2466, %v2978
      %v3491 = vmul.f32 %v2467, %v2979
      %v3492 = vmul.f32 %v2468, %v2980
      %v3493 = vmul.f32 %v2469, %v2981
      %v3494 = vmul.f32 %v2470, %v2982
      %v3495 = vmul.f32 %v2471, %v2983
      %v3496 = vmul.f32 %v2472, %v2984
      %v3497 = vmul.f32 %v2473, %v2985
      %v3498 = vmul.f32 %v2474, %v2986
      %v3499 = vmul.f32 %v2475, %v2987
      %v3500 = vmul.f32 %v2476, %v2988
      %v3501 = vmul.f32 %v2477, %v2989
      %v3502 = vmul.f32 %v2478, %v2990
      %v3503 = vmul.f32 %v2479, %v2991
      %v3504 = vmul.f32 %v2480, %v2992
      %v3505 = vmul.f32 %v2481, %v2993
      %v3506 = vmul.f32 %v2482, %v2994
      %v3507 = vmul.f32 %v2483, %v2995
      %v3508 = vmul.f32 %v2484, %v2996
      %v3509 = vmul.f32 %v2485, %v2997
      %v3510 = vmul.f32 %v2486, %v2998
      %v3511 = vmul.f32 %v2487, %v2999
      %v3512 = vmul.f32 %v2488, %v3000
      %v3513 = vmul.f32 %v2489, %v3001
      %v3514 = vmul.f32 %v2490, %v3002
      %v3515 = vmul.f32 %v2491, %v3003
      %v3516 = vmul.f32 %v2492, %v3004
      %v3517 = vmul.f32 %v2493, %v3005
      %v3518 = vmul.f32 %v2494, %v3006
      %v3519 = vmul.f32 %v2495, %v3007
      %v3520 = vmul.f32 %v2496, %v3008
      %v3521 = vmul.f32 %v2497, %v3009
      %v3522 = vmul.f32 %v2498, %v3010
      %v3523 = vmul.f32 %v2499, %v3011
      %v3524 = vmul.f32 %v2500, %v3012
      %v3525 = vmul.f32 %v2501, %v3013
      %v3526 = vmul.f32 %v2502, %v3014
      %v3527 = vmul.f32 %v2503, %v3015
      %v3528 = vmul.f32 %v2504, %v3016
      %v3529 = vmul.f32 %v2505, %v3017
      %v3530 = vmul.f32 %v2506, %v3018
      %v3531 = vmul.f32 %v2507, %v3019
      %v3532 = vmul.f32 %v2508, %v3020
      %v3533 = vmul.f32 %v2509, %v3021
      %v3534 = vmul.f32 %v2510, %v3022
      %v3535 = vmul.f32 %v2511, %v3023
      %v3536 = vmul.f32 %v2512, %v3024
      %v3537 = vmul.f32 %v2513, %v3025
      %v3538 = vmul.f32 %v2514, %v3026
      %v3539 = vmul.f32 %v2515, %v3027
      %v3540 = vmul.f32 %v2516, %v3028
      %v3541 = vmul.f32 %v2517, %v3029
      %v3542 = vmul.f32 %v2518, %v3030
      %v3543 = vmul.f32 %v2519, %v3031
      %v3544 = vmax.f32 %v3032, %v3033
      %v3545 = vmax.f32 %v3544, %v3034
      %v3546 = vmax.f32 %v3545, %v3035
      %v3547 = vmax.f32 %v3546, %v3036
      %v3548 = vmax.f32 %v3547, %v3037
      %v3549 = vmax.f32 %v3548, %v3038
      %v3550 = vmax.f32 %v3549, %v3039
      %v3551 = vmax.f32 %v3550, %v3040
      %v3552 = vmax.f32 %v3551, %v3041
      %v3553 = vmax.f32 %v3552, %v3042
      %v3554 = vmax.f32 %v3553, %v3043
      %v3555 = vmax.f32 %v3554, %v3044
      %v3556 = vmax.f32 %v3555, %v3045
      %v3557 = vmax.f32 %v3556, %v3046
      %v3558 = vmax.f32 %v3557, %v3047
      %3559 = vmax.xlane.f32.xlu0 %v3558
      %v3560 = vpop.xlane.xlu0 %3559
      %v3561 = vmax.f32 %v3048, %v3049
      %v3562 = vmax.f32 %v3561, %v3050
      %v3563 = vmax.f32 %v3562, %v3051
      %v3564 = vmax.f32 %v3563, %v3052
      %v3565 = vmax.f32 %v3564, %v3053
      %v3566 = vmax.f32 %v3565, %v3054
      %v3567 = vmax.f32 %v3566, %v3055
      %v3568 = vmax.f32 %v3567, %v3056
      %v3569 = vmax.f32 %v3568, %v3057
      %v3570 = vmax.f32 %v3569, %v3058
      %v3571 = vmax.f32 %v3570, %v3059
      %v3572 = vmax.f32 %v3571, %v3060
      %v3573 = vmax.f32 %v3572, %v3061
      %v3574 = vmax.f32 %v3573, %v3062
      %v3575 = vmax.f32 %v3574, %v3063
      %3576 = vmax.xlane.f32.xlu0 %v3575
      %v3577 = vpop.xlane.xlu0 %3576
      %v3578 = vmax.f32 %v3064, %v3065
      %v3579 = vmax.f32 %v3578, %v3066
      %v3580 = vmax.f32 %v3579, %v3067
      %v3581 = vmax.f32 %v3580, %v3068
      %v3582 = vmax.f32 %v3581, %v3069
      %v3583 = vmax.f32 %v3582, %v3070
      %v3584 = vmax.f32 %v3583, %v3071
      %v3585 = vmax.f32 %v3584, %v3072
      %v3586 = vmax.f32 %v3585, %v3073
      %v3587 = vmax.f32 %v3586, %v3074
      %v3588 = vmax.f32 %v3587, %v3075
      %v3589 = vmax.f32 %v3588, %v3076
      %v3590 = vmax.f32 %v3589, %v3077
      %v3591 = vmax.f32 %v3590, %v3078
      %v3592 = vmax.f32 %v3591, %v3079
      %3593 = vmax.xlane.f32.xlu0 %v3592
      %v3594 = vpop.xlane.xlu0 %3593
      %v3595 = vmax.f32 %v3080, %v3081
      %v3596 = vmax.f32 %v3595, %v3082
      %v3597 = vmax.f32 %v3596, %v3083
      %v3598 = vmax.f32 %v3597, %v3084
      %v3599 = vmax.f32 %v3598, %v3085
      %v3600 = vmax.f32 %v3599, %v3086
      %v3601 = vmax.f32 %v3600, %v3087
      %v3602 = vmax.f32 %v3601, %v3088
      %v3603 = vmax.f32 %v3602, %v3089
      %v3604 = vmax.f32 %v3603, %v3090
      %v3605 = vmax.f32 %v3604, %v3091
      %v3606 = vmax.f32 %v3605, %v3092
      %v3607 = vmax.f32 %v3606, %v3093
      %v3608 = vmax.f32 %v3607, %v3094
      %v3609 = vmax.f32 %v3608, %v3095
      %3610 = vmax.xlane.f32.xlu0 %v3609
      %v3611 = vpop.xlane.xlu0 %3610
      %v3612 = vmax.f32 %v3096, %v3097
      %v3613 = vmax.f32 %v3612, %v3098
      %v3614 = vmax.f32 %v3613, %v3099
      %v3615 = vmax.f32 %v3614, %v3100
      %v3616 = vmax.f32 %v3615, %v3101
      %v3617 = vmax.f32 %v3616, %v3102
      %v3618 = vmax.f32 %v3617, %v3103
      %v3619 = vmax.f32 %v3618, %v3104
      %v3620 = vmax.f32 %v3619, %v3105
      %v3621 = vmax.f32 %v3620, %v3106
      %v3622 = vmax.f32 %v3621, %v3107
      %v3623 = vmax.f32 %v3622, %v3108
      %v3624 = vmax.f32 %v3623, %v3109
      %v3625 = vmax.f32 %v3624, %v3110
      %v3626 = vmax.f32 %v3625, %v3111
      %3627 = vmax.xlane.f32.xlu0 %v3626
      %v3628 = vpop.xlane.xlu0 %3627
      %v3629 = vmax.f32 %v3112, %v3113
      %v3630 = vmax.f32 %v3629, %v3114
      %v3631 = vmax.f32 %v3630, %v3115
      %v3632 = vmax.f32 %v3631, %v3116
      %v3633 = vmax.f32 %v3632, %v3117
      %v3634 = vmax.f32 %v3633, %v3118
      %v3635 = vmax.f32 %v3634, %v3119
      %v3636 = vmax.f32 %v3635, %v3120
      %v3637 = vmax.f32 %v3636, %v3121
      %v3638 = vmax.f32 %v3637, %v3122
      %v3639 = vmax.f32 %v3638, %v3123
      %v3640 = vmax.f32 %v3639, %v3124
      %v3641 = vmax.f32 %v3640, %v3125
      %v3642 = vmax.f32 %v3641, %v3126
      %v3643 = vmax.f32 %v3642, %v3127
      %3644 = vmax.xlane.f32.xlu0 %v3643
      %v3645 = vpop.xlane.xlu0 %3644
      %v3646 = vmax.f32 %v3128, %v3129
      %v3647 = vmax.f32 %v3646, %v3130
      %v3648 = vmax.f32 %v3647, %v3131
      %v3649 = vmax.f32 %v3648, %v3132
      %v3650 = vmax.f32 %v3649, %v3133
      %v3651 = vmax.f32 %v3650, %v3134
      %v3652 = vmax.f32 %v3651, %v3135
      %v3653 = vmax.f32 %v3652, %v3136
      %v3654 = vmax.f32 %v3653, %v3137
      %v3655 = vmax.f32 %v3654, %v3138
      %v3656 = vmax.f32 %v3655, %v3139
      %v3657 = vmax.f32 %v3656, %v3140
      %v3658 = vmax.f32 %v3657, %v3141
      %v3659 = vmax.f32 %v3658, %v3142
      %v3660 = vmax.f32 %v3659, %v3143
      %3661 = vmax.xlane.f32.xlu0 %v3660
      %v3662 = vpop.xlane.xlu0 %3661
      %v3663 = vmax.f32 %v3144, %v3145
      %v3664 = vmax.f32 %v3663, %v3146
      %v3665 = vmax.f32 %v3664, %v3147
      %v3666 = vmax.f32 %v3665, %v3148
      %v3667 = vmax.f32 %v3666, %v3149
      %v3668 = vmax.f32 %v3667, %v3150
      %v3669 = vmax.f32 %v3668, %v3151
      %v3670 = vmax.f32 %v3669, %v3152
      %v3671 = vmax.f32 %v3670, %v3153
      %v3672 = vmax.f32 %v3671, %v3154
      %v3673 = vmax.f32 %v3672, %v3155
      %v3674 = vmax.f32 %v3673, %v3156
      %v3675 = vmax.f32 %v3674, %v3157
      %v3676 = vmax.f32 %v3675, %v3158
      %v3677 = vmax.f32 %v3676, %v3159
      %3678 = vmax.xlane.f32.xlu0 %v3677
      %v3679 = vpop.xlane.xlu0 %3678
      %v3680 = vmax.f32 %v3160, %v3161
      %v3681 = vmax.f32 %v3680, %v3162
      %v3682 = vmax.f32 %v3681, %v3163
      %v3683 = vmax.f32 %v3682, %v3164
      %v3684 = vmax.f32 %v3683, %v3165
      %v3685 = vmax.f32 %v3684, %v3166
      %v3686 = vmax.f32 %v3685, %v3167
      %v3687 = vmax.f32 %v3686, %v3168
      %v3688 = vmax.f32 %v3687, %v3169
      %v3689 = vmax.f32 %v3688, %v3170
      %v3690 = vmax.f32 %v3689, %v3171
      %v3691 = vmax.f32 %v3690, %v3172
      %v3692 = vmax.f32 %v3691, %v3173
      %v3693 = vmax.f32 %v3692, %v3174
      %v3694 = vmax.f32 %v3693, %v3175
      %3695 = vmax.xlane.f32.xlu0 %v3694
      %v3696 = vpop.xlane.xlu0 %3695
      %v3697 = vmax.f32 %v3176, %v3177
      %v3698 = vmax.f32 %v3697, %v3178
      %v3699 = vmax.f32 %v3698, %v3179
      %v3700 = vmax.f32 %v3699, %v3180
      %v3701 = vmax.f32 %v3700, %v3181
      %v3702 = vmax.f32 %v3701, %v3182
      %v3703 = vmax.f32 %v3702, %v3183
      %v3704 = vmax.f32 %v3703, %v3184
      %v3705 = vmax.f32 %v3704, %v3185
      %v3706 = vmax.f32 %v3705, %v3186
      %v3707 = vmax.f32 %v3706, %v3187
      %v3708 = vmax.f32 %v3707, %v3188
      %v3709 = vmax.f32 %v3708, %v3189
      %v3710 = vmax.f32 %v3709, %v3190
      %v3711 = vmax.f32 %v3710, %v3191
      %3712 = vmax.xlane.f32.xlu0 %v3711
      %v3713 = vpop.xlane.xlu0 %3712
      %v3714 = vmax.f32 %v3192, %v3193
      %v3715 = vmax.f32 %v3714, %v3194
      %v3716 = vmax.f32 %v3715, %v3195
      %v3717 = vmax.f32 %v3716, %v3196
      %v3718 = vmax.f32 %v3717, %v3197
      %v3719 = vmax.f32 %v3718, %v3198
      %v3720 = vmax.f32 %v3719, %v3199
      %v3721 = vmax.f32 %v3720, %v3200
      %v3722 = vmax.f32 %v3721, %v3201
      %v3723 = vmax.f32 %v3722, %v3202
      %v3724 = vmax.f32 %v3723, %v3203
      %v3725 = vmax.f32 %v3724, %v3204
      %v3726 = vmax.f32 %v3725, %v3205
      %v3727 = vmax.f32 %v3726, %v3206
      %v3728 = vmax.f32 %v3727, %v3207
      %3729 = vmax.xlane.f32.xlu0 %v3728
      %v3730 = vpop.xlane.xlu0 %3729
      %v3731 = vmax.f32 %v3208, %v3209
      %v3732 = vmax.f32 %v3731, %v3210
      %v3733 = vmax.f32 %v3732, %v3211
      %v3734 = vmax.f32 %v3733, %v3212
      %v3735 = vmax.f32 %v3734, %v3213
      %v3736 = vmax.f32 %v3735, %v3214
      %v3737 = vmax.f32 %v3736, %v3215
      %v3738 = vmax.f32 %v3737, %v3216
      %v3739 = vmax.f32 %v3738, %v3217
      %v3740 = vmax.f32 %v3739, %v3218
      %v3741 = vmax.f32 %v3740, %v3219
      %v3742 = vmax.f32 %v3741, %v3220
      %v3743 = vmax.f32 %v3742, %v3221
      %v3744 = vmax.f32 %v3743, %v3222
      %v3745 = vmax.f32 %v3744, %v3223
      %3746 = vmax.xlane.f32.xlu0 %v3745
      %v3747 = vpop.xlane.xlu0 %3746
      %v3748 = vmax.f32 %v3224, %v3225
      %v3749 = vmax.f32 %v3748, %v3226
      %v3750 = vmax.f32 %v3749, %v3227
      %v3751 = vmax.f32 %v3750, %v3228
      %v3752 = vmax.f32 %v3751, %v3229
      %v3753 = vmax.f32 %v3752, %v3230
      %v3754 = vmax.f32 %v3753, %v3231
      %v3755 = vmax.f32 %v3754, %v3232
      %v3756 = vmax.f32 %v3755, %v3233
      %v3757 = vmax.f32 %v3756, %v3234
      %v3758 = vmax.f32 %v3757, %v3235
      %v3759 = vmax.f32 %v3758, %v3236
      %v3760 = vmax.f32 %v3759, %v3237
      %v3761 = vmax.f32 %v3760, %v3238
      %v3762 = vmax.f32 %v3761, %v3239
      %3763 = vmax.xlane.f32.xlu0 %v3762
      %v3764 = vpop.xlane.xlu0 %3763
      %v3765 = vmax.f32 %v3240, %v3241
      %v3766 = vmax.f32 %v3765, %v3242
      %v3767 = vmax.f32 %v3766, %v3243
      %v3768 = vmax.f32 %v3767, %v3244
      %v3769 = vmax.f32 %v3768, %v3245
      %v3770 = vmax.f32 %v3769, %v3246
      %v3771 = vmax.f32 %v3770, %v3247
      %v3772 = vmax.f32 %v3771, %v3248
      %v3773 = vmax.f32 %v3772, %v3249
      %v3774 = vmax.f32 %v3773, %v3250
      %v3775 = vmax.f32 %v3774, %v3251
      %v3776 = vmax.f32 %v3775, %v3252
      %v3777 = vmax.f32 %v3776, %v3253
      %v3778 = vmax.f32 %v3777, %v3254
      %v3779 = vmax.f32 %v3778, %v3255
      %3780 = vmax.xlane.f32.xlu0 %v3779
      %v3781 = vpop.xlane.xlu0 %3780
      %v3782 = vmax.f32 %v3256, %v3257
      %v3783 = vmax.f32 %v3782, %v3258
      %v3784 = vmax.f32 %v3783, %v3259
      %v3785 = vmax.f32 %v3784, %v3260
      %v3786 = vmax.f32 %v3785, %v3261
      %v3787 = vmax.f32 %v3786, %v3262
      %v3788 = vmax.f32 %v3787, %v3263
      %v3789 = vmax.f32 %v3788, %v3264
      %v3790 = vmax.f32 %v3789, %v3265
      %v3791 = vmax.f32 %v3790, %v3266
      %v3792 = vmax.f32 %v3791, %v3267
      %v3793 = vmax.f32 %v3792, %v3268
      %v3794 = vmax.f32 %v3793, %v3269
      %v3795 = vmax.f32 %v3794, %v3270
      %v3796 = vmax.f32 %v3795, %v3271
      %3797 = vmax.xlane.f32.xlu0 %v3796
      %v3798 = vpop.xlane.xlu0 %3797
      %v3799 = vmax.f32 %v3272, %v3273
      %v3800 = vmax.f32 %v3799, %v3274
      %v3801 = vmax.f32 %v3800, %v3275
      %v3802 = vmax.f32 %v3801, %v3276
      %v3803 = vmax.f32 %v3802, %v3277
      %v3804 = vmax.f32 %v3803, %v3278
      %v3805 = vmax.f32 %v3804, %v3279
      %v3806 = vmax.f32 %v3805, %v3280
      %v3807 = vmax.f32 %v3806, %v3281
      %v3808 = vmax.f32 %v3807, %v3282
      %v3809 = vmax.f32 %v3808, %v3283
      %v3810 = vmax.f32 %v3809, %v3284
      %v3811 = vmax.f32 %v3810, %v3285
      %v3812 = vmax.f32 %v3811, %v3286
      %v3813 = vmax.f32 %v3812, %v3287
      %3814 = vmax.xlane.f32.xlu0 %v3813
      %v3815 = vpop.xlane.xlu0 %3814
      %v3816 = vmax.f32 %v3288, %v3289
      %v3817 = vmax.f32 %v3816, %v3290
      %v3818 = vmax.f32 %v3817, %v3291
      %v3819 = vmax.f32 %v3818, %v3292
      %v3820 = vmax.f32 %v3819, %v3293
      %v3821 = vmax.f32 %v3820, %v3294
      %v3822 = vmax.f32 %v3821, %v3295
      %v3823 = vmax.f32 %v3822, %v3296
      %v3824 = vmax.f32 %v3823, %v3297
      %v3825 = vmax.f32 %v3824, %v3298
      %v3826 = vmax.f32 %v3825, %v3299
      %v3827 = vmax.f32 %v3826, %v3300
      %v3828 = vmax.f32 %v3827, %v3301
      %v3829 = vmax.f32 %v3828, %v3302
      %v3830 = vmax.f32 %v3829, %v3303
      %3831 = vmax.xlane.f32.xlu0 %v3830
      %v3832 = vpop.xlane.xlu0 %3831
      %v3833 = vmax.f32 %v3304, %v3305
      %v3834 = vmax.f32 %v3833, %v3306
      %v3835 = vmax.f32 %v3834, %v3307
      %v3836 = vmax.f32 %v3835, %v3308
      %v3837 = vmax.f32 %v3836, %v3309
      %v3838 = vmax.f32 %v3837, %v3310
      %v3839 = vmax.f32 %v3838, %v3311
      %v3840 = vmax.f32 %v3839, %v3312
      %v3841 = vmax.f32 %v3840, %v3313
      %v3842 = vmax.f32 %v3841, %v3314
      %v3843 = vmax.f32 %v3842, %v3315
      %v3844 = vmax.f32 %v3843, %v3316
      %v3845 = vmax.f32 %v3844, %v3317
      %v3846 = vmax.f32 %v3845, %v3318
      %v3847 = vmax.f32 %v3846, %v3319
      %3848 = vmax.xlane.f32.xlu0 %v3847
      %v3849 = vpop.xlane.xlu0 %3848
      %v3850 = vmax.f32 %v3320, %v3321
      %v3851 = vmax.f32 %v3850, %v3322
      %v3852 = vmax.f32 %v3851, %v3323
      %v3853 = vmax.f32 %v3852, %v3324
      %v3854 = vmax.f32 %v3853, %v3325
      %v3855 = vmax.f32 %v3854, %v3326
      %v3856 = vmax.f32 %v3855, %v3327
      %v3857 = vmax.f32 %v3856, %v3328
      %v3858 = vmax.f32 %v3857, %v3329
      %v3859 = vmax.f32 %v3858, %v3330
      %v3860 = vmax.f32 %v3859, %v3331
      %v3861 = vmax.f32 %v3860, %v3332
      %v3862 = vmax.f32 %v3861, %v3333
      %v3863 = vmax.f32 %v3862, %v3334
      %v3864 = vmax.f32 %v3863, %v3335
      %3865 = vmax.xlane.f32.xlu0 %v3864
      %v3866 = vpop.xlane.xlu0 %3865
      %v3867 = vmax.f32 %v3336, %v3337
      %v3868 = vmax.f32 %v3867, %v3338
      %v3869 = vmax.f32 %v3868, %v3339
      %v3870 = vmax.f32 %v3869, %v3340
      %v3871 = vmax.f32 %v3870, %v3341
      %v3872 = vmax.f32 %v3871, %v3342
      %v3873 = vmax.f32 %v3872, %v3343
      %v3874 = vmax.f32 %v3873, %v3344
      %v3875 = vmax.f32 %v3874, %v3345
      %v3876 = vmax.f32 %v3875, %v3346
      %v3877 = vmax.f32 %v3876, %v3347
      %v3878 = vmax.f32 %v3877, %v3348
      %v3879 = vmax.f32 %v3878, %v3349
      %v3880 = vmax.f32 %v3879, %v3350
      %v3881 = vmax.f32 %v3880, %v3351
      %3882 = vmax.xlane.f32.xlu0 %v3881
      %v3883 = vpop.xlane.xlu0 %3882
      %v3884 = vmax.f32 %v3352, %v3353
      %v3885 = vmax.f32 %v3884, %v3354
      %v3886 = vmax.f32 %v3885, %v3355
      %v3887 = vmax.f32 %v3886, %v3356
      %v3888 = vmax.f32 %v3887, %v3357
      %v3889 = vmax.f32 %v3888, %v3358
      %v3890 = vmax.f32 %v3889, %v3359
      %v3891 = vmax.f32 %v3890, %v3360
      %v3892 = vmax.f32 %v3891, %v3361
      %v3893 = vmax.f32 %v3892, %v3362
      %v3894 = vmax.f32 %v3893, %v3363
      %v3895 = vmax.f32 %v3894, %v3364
      %v3896 = vmax.f32 %v3895, %v3365
      %v3897 = vmax.f32 %v3896, %v3366
      %v3898 = vmax.f32 %v3897, %v3367
      %3899 = vmax.xlane.f32.xlu0 %v3898
      %v3900 = vpop.xlane.xlu0 %3899
      %v3901 = vmax.f32 %v3368, %v3369
      %v3902 = vmax.f32 %v3901, %v3370
      %v3903 = vmax.f32 %v3902, %v3371
      %v3904 = vmax.f32 %v3903, %v3372
      %v3905 = vmax.f32 %v3904, %v3373
      %v3906 = vmax.f32 %v3905, %v3374
      %v3907 = vmax.f32 %v3906, %v3375
      %v3908 = vmax.f32 %v3907, %v3376
      %v3909 = vmax.f32 %v3908, %v3377
      %v3910 = vmax.f32 %v3909, %v3378
      %v3911 = vmax.f32 %v3910, %v3379
      %v3912 = vmax.f32 %v3911, %v3380
      %v3913 = vmax.f32 %v3912, %v3381
      %v3914 = vmax.f32 %v3913, %v3382
      %v3915 = vmax.f32 %v3914, %v3383
      %3916 = vmax.xlane.f32.xlu0 %v3915
      %v3917 = vpop.xlane.xlu0 %3916
      %v3918 = vmax.f32 %v3384, %v3385
      %v3919 = vmax.f32 %v3918, %v3386
      %v3920 = vmax.f32 %v3919, %v3387
      %v3921 = vmax.f32 %v3920, %v3388
      %v3922 = vmax.f32 %v3921, %v3389
      %v3923 = vmax.f32 %v3922, %v3390
      %v3924 = vmax.f32 %v3923, %v3391
      %v3925 = vmax.f32 %v3924, %v3392
      %v3926 = vmax.f32 %v3925, %v3393
      %v3927 = vmax.f32 %v3926, %v3394
      %v3928 = vmax.f32 %v3927, %v3395
      %v3929 = vmax.f32 %v3928, %v3396
      %v3930 = vmax.f32 %v3929, %v3397
      %v3931 = vmax.f32 %v3930, %v3398
      %v3932 = vmax.f32 %v3931, %v3399
      %3933 = vmax.xlane.f32.xlu0 %v3932
      %v3934 = vpop.xlane.xlu0 %3933
      %v3935 = vmax.f32 %v3400, %v3401
      %v3936 = vmax.f32 %v3935, %v3402
      %v3937 = vmax.f32 %v3936, %v3403
      %v3938 = vmax.f32 %v3937, %v3404
      %v3939 = vmax.f32 %v3938, %v3405
      %v3940 = vmax.f32 %v3939, %v3406
      %v3941 = vmax.f32 %v3940, %v3407
      %v3942 = vmax.f32 %v3941, %v3408
      %v3943 = vmax.f32 %v3942, %v3409
      %v3944 = vmax.f32 %v3943, %v3410
      %v3945 = vmax.f32 %v3944, %v3411
      %v3946 = vmax.f32 %v3945, %v3412
      %v3947 = vmax.f32 %v3946, %v3413
      %v3948 = vmax.f32 %v3947, %v3414
      %v3949 = vmax.f32 %v3948, %v3415
      %3950 = vmax.xlane.f32.xlu0 %v3949
      %v3951 = vpop.xlane.xlu0 %3950
      %v3952 = vmax.f32 %v3416, %v3417
      %v3953 = vmax.f32 %v3952, %v3418
      %v3954 = vmax.f32 %v3953, %v3419
      %v3955 = vmax.f32 %v3954, %v3420
      %v3956 = vmax.f32 %v3955, %v3421
      %v3957 = vmax.f32 %v3956, %v3422
      %v3958 = vmax.f32 %v3957, %v3423
      %v3959 = vmax.f32 %v3958, %v3424
      %v3960 = vmax.f32 %v3959, %v3425
      %v3961 = vmax.f32 %v3960, %v3426
      %v3962 = vmax.f32 %v3961, %v3427
      %v3963 = vmax.f32 %v3962, %v3428
      %v3964 = vmax.f32 %v3963, %v3429
      %v3965 = vmax.f32 %v3964, %v3430
      %v3966 = vmax.f32 %v3965, %v3431
      %3967 = vmax.xlane.f32.xlu0 %v3966
      %v3968 = vpop.xlane.xlu0 %3967
      %v3969 = vmax.f32 %v3432, %v3433
      %v3970 = vmax.f32 %v3969, %v3434
      %v3971 = vmax.f32 %v3970, %v3435
      %v3972 = vmax.f32 %v3971, %v3436
      %v3973 = vmax.f32 %v3972, %v3437
      %v3974 = vmax.f32 %v3973, %v3438
      %v3975 = vmax.f32 %v3974, %v3439
      %v3976 = vmax.f32 %v3975, %v3440
      %v3977 = vmax.f32 %v3976, %v3441
      %v3978 = vmax.f32 %v3977, %v3442
      %v3979 = vmax.f32 %v3978, %v3443
      %v3980 = vmax.f32 %v3979, %v3444
      %v3981 = vmax.f32 %v3980, %v3445
      %v3982 = vmax.f32 %v3981, %v3446
      %v3983 = vmax.f32 %v3982, %v3447
      %3984 = vmax.xlane.f32.xlu0 %v3983
      %v3985 = vpop.xlane.xlu0 %3984
      %v3986 = vmax.f32 %v3448, %v3449
      %v3987 = vmax.f32 %v3986, %v3450
      %v3988 = vmax.f32 %v3987, %v3451
      %v3989 = vmax.f32 %v3988, %v3452
      %v3990 = vmax.f32 %v3989, %v3453
      %v3991 = vmax.f32 %v3990, %v3454
      %v3992 = vmax.f32 %v3991, %v3455
      %v3993 = vmax.f32 %v3992, %v3456
      %v3994 = vmax.f32 %v3993, %v3457
      %v3995 = vmax.f32 %v3994, %v3458
      %v3996 = vmax.f32 %v3995, %v3459
      %v3997 = vmax.f32 %v3996, %v3460
      %v3998 = vmax.f32 %v3997, %v3461
      %v3999 = vmax.f32 %v3998, %v3462
      %v4000 = vmax.f32 %v3999, %v3463
      %4001 = vmax.xlane.f32.xlu0 %v4000
      %v4002 = vpop.xlane.xlu0 %4001
      %v4003 = vmax.f32 %v3464, %v3465
      %v4004 = vmax.f32 %v4003, %v3466
      %v4005 = vmax.f32 %v4004, %v3467
      %v4006 = vmax.f32 %v4005, %v3468
      %v4007 = vmax.f32 %v4006, %v3469
      %v4008 = vmax.f32 %v4007, %v3470
      %v4009 = vmax.f32 %v4008, %v3471
      %v4010 = vmax.f32 %v4009, %v3472
      %v4011 = vmax.f32 %v4010, %v3473
      %v4012 = vmax.f32 %v4011, %v3474
      %v4013 = vmax.f32 %v4012, %v3475
      %v4014 = vmax.f32 %v4013, %v3476
      %v4015 = vmax.f32 %v4014, %v3477
      %v4016 = vmax.f32 %v4015, %v3478
      %v4017 = vmax.f32 %v4016, %v3479
      %4018 = vmax.xlane.f32.xlu0 %v4017
      %v4019 = vpop.xlane.xlu0 %4018
      %v4020 = vmax.f32 %v3480, %v3481
      %v4021 = vmax.f32 %v4020, %v3482
      %v4022 = vmax.f32 %v4021, %v3483
      %v4023 = vmax.f32 %v4022, %v3484
      %v4024 = vmax.f32 %v4023, %v3485
      %v4025 = vmax.f32 %v4024, %v3486
      %v4026 = vmax.f32 %v4025, %v3487
      %v4027 = vmax.f32 %v4026, %v3488
      %v4028 = vmax.f32 %v4027, %v3489
      %v4029 = vmax.f32 %v4028, %v3490
      %v4030 = vmax.f32 %v4029, %v3491
      %v4031 = vmax.f32 %v4030, %v3492
      %v4032 = vmax.f32 %v4031, %v3493
      %v4033 = vmax.f32 %v4032, %v3494
      %v4034 = vmax.f32 %v4033, %v3495
      %4035 = vmax.xlane.f32.xlu0 %v4034
      %v4036 = vpop.xlane.xlu0 %4035
      %v4037 = vmax.f32 %v3496, %v3497
      %v4038 = vmax.f32 %v4037, %v3498
      %v4039 = vmax.f32 %v4038, %v3499
      %v4040 = vmax.f32 %v4039, %v3500
      %v4041 = vmax.f32 %v4040, %v3501
      %v4042 = vmax.f32 %v4041, %v3502
      %v4043 = vmax.f32 %v4042, %v3503
      %v4044 = vmax.f32 %v4043, %v3504
      %v4045 = vmax.f32 %v4044, %v3505
      %v4046 = vmax.f32 %v4045, %v3506
      %v4047 = vmax.f32 %v4046, %v3507
      %v4048 = vmax.f32 %v4047, %v3508
      %v4049 = vmax.f32 %v4048, %v3509
      %v4050 = vmax.f32 %v4049, %v3510
      %v4051 = vmax.f32 %v4050, %v3511
      %4052 = vmax.xlane.f32.xlu0 %v4051
      %v4053 = vpop.xlane.xlu0 %4052
      %v4054 = vmax.f32 %v3512, %v3513
      %v4055 = vmax.f32 %v4054, %v3514
      %v4056 = vmax.f32 %v4055, %v3515
      %v4057 = vmax.f32 %v4056, %v3516
      %v4058 = vmax.f32 %v4057, %v3517
      %v4059 = vmax.f32 %v4058, %v3518
      %v4060 = vmax.f32 %v4059, %v3519
      %v4061 = vmax.f32 %v4060, %v3520
      %v4062 = vmax.f32 %v4061, %v3521
      %v4063 = vmax.f32 %v4062, %v3522
      %v4064 = vmax.f32 %v4063, %v3523
      %v4065 = vmax.f32 %v4064, %v3524
      %v4066 = vmax.f32 %v4065, %v3525
      %v4067 = vmax.f32 %v4066, %v3526
      %v4068 = vmax.f32 %v4067, %v3527
      %4069 = vmax.xlane.f32.xlu0 %v4068
      %v4070 = vpop.xlane.xlu0 %4069
      %v4071 = vmax.f32 %v3528, %v3529
      %v4072 = vmax.f32 %v4071, %v3530
      %v4073 = vmax.f32 %v4072, %v3531
      %v4074 = vmax.f32 %v4073, %v3532
      %v4075 = vmax.f32 %v4074, %v3533
      %v4076 = vmax.f32 %v4075, %v3534
      %v4077 = vmax.f32 %v4076, %v3535
      %v4078 = vmax.f32 %v4077, %v3536
      %v4079 = vmax.f32 %v4078, %v3537
      %v4080 = vmax.f32 %v4079, %v3538
      %v4081 = vmax.f32 %v4080, %v3539
      %v4082 = vmax.f32 %v4081, %v3540
      %v4083 = vmax.f32 %v4082, %v3541
      %v4084 = vmax.f32 %v4083, %v3542
      %v4085 = vmax.f32 %v4084, %v3543
      %4086 = vmax.xlane.f32.xlu0 %v4085
      %v4087 = vpop.xlane.xlu0 %4086
      %v4088 = vsub.f32 %v3032, %v3560
      %v4089 = vsub.f32 %v3033, %v3560
      %v4090 = vsub.f32 %v3034, %v3560
      %v4091 = vsub.f32 %v3035, %v3560
      %v4092 = vsub.f32 %v3036, %v3560
      %v4093 = vsub.f32 %v3037, %v3560
      %v4094 = vsub.f32 %v3038, %v3560
      %v4095 = vsub.f32 %v3039, %v3560
      %v4096 = vsub.f32 %v3040, %v3560
      %v4097 = vsub.f32 %v3041, %v3560
      %v4098 = vsub.f32 %v3042, %v3560
      %v4099 = vsub.f32 %v3043, %v3560
      %v4100 = vsub.f32 %v3044, %v3560
      %v4101 = vsub.f32 %v3045, %v3560
      %v4102 = vsub.f32 %v3046, %v3560
      %v4103 = vsub.f32 %v3047, %v3560
      %v4104 = vsub.f32 %v3048, %v3577
      %v4105 = vsub.f32 %v3049, %v3577
      %v4106 = vsub.f32 %v3050, %v3577
      %v4107 = vsub.f32 %v3051, %v3577
      %v4108 = vsub.f32 %v3052, %v3577
      %v4109 = vsub.f32 %v3053, %v3577
      %v4110 = vsub.f32 %v3054, %v3577
      %v4111 = vsub.f32 %v3055, %v3577
      %v4112 = vsub.f32 %v3056, %v3577
      %v4113 = vsub.f32 %v3057, %v3577
      %v4114 = vsub.f32 %v3058, %v3577
      %v4115 = vsub.f32 %v3059, %v3577
      %v4116 = vsub.f32 %v3060, %v3577
      %v4117 = vsub.f32 %v3061, %v3577
      %v4118 = vsub.f32 %v3062, %v3577
      %v4119 = vsub.f32 %v3063, %v3577
      %v4120 = vsub.f32 %v3064, %v3594
      %v4121 = vsub.f32 %v3065, %v3594
      %v4122 = vsub.f32 %v3066, %v3594
      %v4123 = vsub.f32 %v3067, %v3594
      %v4124 = vsub.f32 %v3068, %v3594
      %v4125 = vsub.f32 %v3069, %v3594
      %v4126 = vsub.f32 %v3070, %v3594
      %v4127 = vsub.f32 %v3071, %v3594
      %v4128 = vsub.f32 %v3072, %v3594
      %v4129 = vsub.f32 %v3073, %v3594
      %v4130 = vsub.f32 %v3074, %v3594
      %v4131 = vsub.f32 %v3075, %v3594
      %v4132 = vsub.f32 %v3076, %v3594
      %v4133 = vsub.f32 %v3077, %v3594
      %v4134 = vsub.f32 %v3078, %v3594
      %v4135 = vsub.f32 %v3079, %v3594
      %v4136 = vsub.f32 %v3080, %v3611
      %v4137 = vsub.f32 %v3081, %v3611
      %v4138 = vsub.f32 %v3082, %v3611
      %v4139 = vsub.f32 %v3083, %v3611
      %v4140 = vsub.f32 %v3084, %v3611
      %v4141 = vsub.f32 %v3085, %v3611
      %v4142 = vsub.f32 %v3086, %v3611
      %v4143 = vsub.f32 %v3087, %v3611
      %v4144 = vsub.f32 %v3088, %v3611
      %v4145 = vsub.f32 %v3089, %v3611
      %v4146 = vsub.f32 %v3090, %v3611
      %v4147 = vsub.f32 %v3091, %v3611
      %v4148 = vsub.f32 %v3092, %v3611
      %v4149 = vsub.f32 %v3093, %v3611
      %v4150 = vsub.f32 %v3094, %v3611
      %v4151 = vsub.f32 %v3095, %v3611
      %v4152 = vsub.f32 %v3096, %v3628
      %v4153 = vsub.f32 %v3097, %v3628
      %v4154 = vsub.f32 %v3098, %v3628
      %v4155 = vsub.f32 %v3099, %v3628
      %v4156 = vsub.f32 %v3100, %v3628
      %v4157 = vsub.f32 %v3101, %v3628
      %v4158 = vsub.f32 %v3102, %v3628
      %v4159 = vsub.f32 %v3103, %v3628
      %v4160 = vsub.f32 %v3104, %v3628
      %v4161 = vsub.f32 %v3105, %v3628
      %v4162 = vsub.f32 %v3106, %v3628
      %v4163 = vsub.f32 %v3107, %v3628
      %v4164 = vsub.f32 %v3108, %v3628
      %v4165 = vsub.f32 %v3109, %v3628
      %v4166 = vsub.f32 %v3110, %v3628
      %v4167 = vsub.f32 %v3111, %v3628
      %v4168 = vsub.f32 %v3112, %v3645
      %v4169 = vsub.f32 %v3113, %v3645
      %v4170 = vsub.f32 %v3114, %v3645
      %v4171 = vsub.f32 %v3115, %v3645
      %v4172 = vsub.f32 %v3116, %v3645
      %v4173 = vsub.f32 %v3117, %v3645
      %v4174 = vsub.f32 %v3118, %v3645
      %v4175 = vsub.f32 %v3119, %v3645
      %v4176 = vsub.f32 %v3120, %v3645
      %v4177 = vsub.f32 %v3121, %v3645
      %v4178 = vsub.f32 %v3122, %v3645
      %v4179 = vsub.f32 %v3123, %v3645
      %v4180 = vsub.f32 %v3124, %v3645
      %v4181 = vsub.f32 %v3125, %v3645
      %v4182 = vsub.f32 %v3126, %v3645
      %v4183 = vsub.f32 %v3127, %v3645
      %v4184 = vsub.f32 %v3128, %v3662
      %v4185 = vsub.f32 %v3129, %v3662
      %v4186 = vsub.f32 %v3130, %v3662
      %v4187 = vsub.f32 %v3131, %v3662
      %v4188 = vsub.f32 %v3132, %v3662
      %v4189 = vsub.f32 %v3133, %v3662
      %v4190 = vsub.f32 %v3134, %v3662
      %v4191 = vsub.f32 %v3135, %v3662
      %v4192 = vsub.f32 %v3136, %v3662
      %v4193 = vsub.f32 %v3137, %v3662
      %v4194 = vsub.f32 %v3138, %v3662
      %v4195 = vsub.f32 %v3139, %v3662
      %v4196 = vsub.f32 %v3140, %v3662
      %v4197 = vsub.f32 %v3141, %v3662
      %v4198 = vsub.f32 %v3142, %v3662
      %v4199 = vsub.f32 %v3143, %v3662
      %v4200 = vsub.f32 %v3144, %v3679
      %v4201 = vsub.f32 %v3145, %v3679
      %v4202 = vsub.f32 %v3146, %v3679
      %v4203 = vsub.f32 %v3147, %v3679
      %v4204 = vsub.f32 %v3148, %v3679
      %v4205 = vsub.f32 %v3149, %v3679
      %v4206 = vsub.f32 %v3150, %v3679
      %v4207 = vsub.f32 %v3151, %v3679
      %v4208 = vsub.f32 %v3152, %v3679
      %v4209 = vsub.f32 %v3153, %v3679
      %v4210 = vsub.f32 %v3154, %v3679
      %v4211 = vsub.f32 %v3155, %v3679
      %v4212 = vsub.f32 %v3156, %v3679
      %v4213 = vsub.f32 %v3157, %v3679
      %v4214 = vsub.f32 %v3158, %v3679
      %v4215 = vsub.f32 %v3159, %v3679
      %v4216 = vsub.f32 %v3160, %v3696
      %v4217 = vsub.f32 %v3161, %v3696
      %v4218 = vsub.f32 %v3162, %v3696
      %v4219 = vsub.f32 %v3163, %v3696
      %v4220 = vsub.f32 %v3164, %v3696
      %v4221 = vsub.f32 %v3165, %v3696
      %v4222 = vsub.f32 %v3166, %v3696
      %v4223 = vsub.f32 %v3167, %v3696
      %v4224 = vsub.f32 %v3168, %v3696
      %v4225 = vsub.f32 %v3169, %v3696
      %v4226 = vsub.f32 %v3170, %v3696
      %v4227 = vsub.f32 %v3171, %v3696
      %v4228 = vsub.f32 %v3172, %v3696
      %v4229 = vsub.f32 %v3173, %v3696
      %v4230 = vsub.f32 %v3174, %v3696
      %v4231 = vsub.f32 %v3175, %v3696
      %v4232 = vsub.f32 %v3176, %v3713
      %v4233 = vsub.f32 %v3177, %v3713
      %v4234 = vsub.f32 %v3178, %v3713
      %v4235 = vsub.f32 %v3179, %v3713
      %v4236 = vsub.f32 %v3180, %v3713
      %v4237 = vsub.f32 %v3181, %v3713
      %v4238 = vsub.f32 %v3182, %v3713
      %v4239 = vsub.f32 %v3183, %v3713
      %v4240 = vsub.f32 %v3184, %v3713
      %v4241 = vsub.f32 %v3185, %v3713
      %v4242 = vsub.f32 %v3186, %v3713
      %v4243 = vsub.f32 %v3187, %v3713
      %v4244 = vsub.f32 %v3188, %v3713
      %v4245 = vsub.f32 %v3189, %v3713
      %v4246 = vsub.f32 %v3190, %v3713
      %v4247 = vsub.f32 %v3191, %v3713
      %v4248 = vsub.f32 %v3192, %v3730
      %v4249 = vsub.f32 %v3193, %v3730
      %v4250 = vsub.f32 %v3194, %v3730
      %v4251 = vsub.f32 %v3195, %v3730
      %v4252 = vsub.f32 %v3196, %v3730
      %v4253 = vsub.f32 %v3197, %v3730
      %v4254 = vsub.f32 %v3198, %v3730
      %v4255 = vsub.f32 %v3199, %v3730
      %v4256 = vsub.f32 %v3200, %v3730
      %v4257 = vsub.f32 %v3201, %v3730
      %v4258 = vsub.f32 %v3202, %v3730
      %v4259 = vsub.f32 %v3203, %v3730
      %v4260 = vsub.f32 %v3204, %v3730
      %v4261 = vsub.f32 %v3205, %v3730
      %v4262 = vsub.f32 %v3206, %v3730
      %v4263 = vsub.f32 %v3207, %v3730
      %v4264 = vsub.f32 %v3208, %v3747
      %v4265 = vsub.f32 %v3209, %v3747
      %v4266 = vsub.f32 %v3210, %v3747
      %v4267 = vsub.f32 %v3211, %v3747
      %v4268 = vsub.f32 %v3212, %v3747
      %v4269 = vsub.f32 %v3213, %v3747
      %v4270 = vsub.f32 %v3214, %v3747
      %v4271 = vsub.f32 %v3215, %v3747
      %v4272 = vsub.f32 %v3216, %v3747
      %v4273 = vsub.f32 %v3217, %v3747
      %v4274 = vsub.f32 %v3218, %v3747
      %v4275 = vsub.f32 %v3219, %v3747
      %v4276 = vsub.f32 %v3220, %v3747
      %v4277 = vsub.f32 %v3221, %v3747
      %v4278 = vsub.f32 %v3222, %v3747
      %v4279 = vsub.f32 %v3223, %v3747
      %v4280 = vsub.f32 %v3224, %v3764
      %v4281 = vsub.f32 %v3225, %v3764
      %v4282 = vsub.f32 %v3226, %v3764
      %v4283 = vsub.f32 %v3227, %v3764
      %v4284 = vsub.f32 %v3228, %v3764
      %v4285 = vsub.f32 %v3229, %v3764
      %v4286 = vsub.f32 %v3230, %v3764
      %v4287 = vsub.f32 %v3231, %v3764
      %v4288 = vsub.f32 %v3232, %v3764
      %v4289 = vsub.f32 %v3233, %v3764
      %v4290 = vsub.f32 %v3234, %v3764
      %v4291 = vsub.f32 %v3235, %v3764
      %v4292 = vsub.f32 %v3236, %v3764
      %v4293 = vsub.f32 %v3237, %v3764
      %v4294 = vsub.f32 %v3238, %v3764
      %v4295 = vsub.f32 %v3239, %v3764
      %v4296 = vsub.f32 %v3240, %v3781
      %v4297 = vsub.f32 %v3241, %v3781
      %v4298 = vsub.f32 %v3242, %v3781
      %v4299 = vsub.f32 %v3243, %v3781
      %v4300 = vsub.f32 %v3244, %v3781
      %v4301 = vsub.f32 %v3245, %v3781
      %v4302 = vsub.f32 %v3246, %v3781
      %v4303 = vsub.f32 %v3247, %v3781
      %v4304 = vsub.f32 %v3248, %v3781
      %v4305 = vsub.f32 %v3249, %v3781
      %v4306 = vsub.f32 %v3250, %v3781
      %v4307 = vsub.f32 %v3251, %v3781
      %v4308 = vsub.f32 %v3252, %v3781
      %v4309 = vsub.f32 %v3253, %v3781
      %v4310 = vsub.f32 %v3254, %v3781
      %v4311 = vsub.f32 %v3255, %v3781
      %v4312 = vsub.f32 %v3256, %v3798
      %v4313 = vsub.f32 %v3257, %v3798
      %v4314 = vsub.f32 %v3258, %v3798
      %v4315 = vsub.f32 %v3259, %v3798
      %v4316 = vsub.f32 %v3260, %v3798
      %v4317 = vsub.f32 %v3261, %v3798
      %v4318 = vsub.f32 %v3262, %v3798
      %v4319 = vsub.f32 %v3263, %v3798
      %v4320 = vsub.f32 %v3264, %v3798
      %v4321 = vsub.f32 %v3265, %v3798
      %v4322 = vsub.f32 %v3266, %v3798
      %v4323 = vsub.f32 %v3267, %v3798
      %v4324 = vsub.f32 %v3268, %v3798
      %v4325 = vsub.f32 %v3269, %v3798
      %v4326 = vsub.f32 %v3270, %v3798
      %v4327 = vsub.f32 %v3271, %v3798
      %v4328 = vsub.f32 %v3272, %v3815
      %v4329 = vsub.f32 %v3273, %v3815
      %v4330 = vsub.f32 %v3274, %v3815
      %v4331 = vsub.f32 %v3275, %v3815
      %v4332 = vsub.f32 %v3276, %v3815
      %v4333 = vsub.f32 %v3277, %v3815
      %v4334 = vsub.f32 %v3278, %v3815
      %v4335 = vsub.f32 %v3279, %v3815
      %v4336 = vsub.f32 %v3280, %v3815
      %v4337 = vsub.f32 %v3281, %v3815
      %v4338 = vsub.f32 %v3282, %v3815
      %v4339 = vsub.f32 %v3283, %v3815
      %v4340 = vsub.f32 %v3284, %v3815
      %v4341 = vsub.f32 %v3285, %v3815
      %v4342 = vsub.f32 %v3286, %v3815
      %v4343 = vsub.f32 %v3287, %v3815
      %v4344 = vsub.f32 %v3288, %v3832
      %v4345 = vsub.f32 %v3289, %v3832
      %v4346 = vsub.f32 %v3290, %v3832
      %v4347 = vsub.f32 %v3291, %v3832
      %v4348 = vsub.f32 %v3292, %v3832
      %v4349 = vsub.f32 %v3293, %v3832
      %v4350 = vsub.f32 %v3294, %v3832
      %v4351 = vsub.f32 %v3295, %v3832
      %v4352 = vsub.f32 %v3296, %v3832
      %v4353 = vsub.f32 %v3297, %v3832
      %v4354 = vsub.f32 %v3298, %v3832
      %v4355 = vsub.f32 %v3299, %v3832
      %v4356 = vsub.f32 %v3300, %v3832
      %v4357 = vsub.f32 %v3301, %v3832
      %v4358 = vsub.f32 %v3302, %v3832
      %v4359 = vsub.f32 %v3303, %v3832
      %v4360 = vsub.f32 %v3304, %v3849
      %v4361 = vsub.f32 %v3305, %v3849
      %v4362 = vsub.f32 %v3306, %v3849
      %v4363 = vsub.f32 %v3307, %v3849
      %v4364 = vsub.f32 %v3308, %v3849
      %v4365 = vsub.f32 %v3309, %v3849
      %v4366 = vsub.f32 %v3310, %v3849
      %v4367 = vsub.f32 %v3311, %v3849
      %v4368 = vsub.f32 %v3312, %v3849
      %v4369 = vsub.f32 %v3313, %v3849
      %v4370 = vsub.f32 %v3314, %v3849
      %v4371 = vsub.f32 %v3315, %v3849
      %v4372 = vsub.f32 %v3316, %v3849
      %v4373 = vsub.f32 %v3317, %v3849
      %v4374 = vsub.f32 %v3318, %v3849
      %v4375 = vsub.f32 %v3319, %v3849
      %v4376 = vsub.f32 %v3320, %v3866
      %v4377 = vsub.f32 %v3321, %v3866
      %v4378 = vsub.f32 %v3322, %v3866
      %v4379 = vsub.f32 %v3323, %v3866
      %v4380 = vsub.f32 %v3324, %v3866
      %v4381 = vsub.f32 %v3325, %v3866
      %v4382 = vsub.f32 %v3326, %v3866
      %v4383 = vsub.f32 %v3327, %v3866
      %v4384 = vsub.f32 %v3328, %v3866
      %v4385 = vsub.f32 %v3329, %v3866
      %v4386 = vsub.f32 %v3330, %v3866
      %v4387 = vsub.f32 %v3331, %v3866
      %v4388 = vsub.f32 %v3332, %v3866
      %v4389 = vsub.f32 %v3333, %v3866
      %v4390 = vsub.f32 %v3334, %v3866
      %v4391 = vsub.f32 %v3335, %v3866
      %v4392 = vsub.f32 %v3336, %v3883
      %v4393 = vsub.f32 %v3337, %v3883
      %v4394 = vsub.f32 %v3338, %v3883
      %v4395 = vsub.f32 %v3339, %v3883
      %v4396 = vsub.f32 %v3340, %v3883
      %v4397 = vsub.f32 %v3341, %v3883
      %v4398 = vsub.f32 %v3342, %v3883
      %v4399 = vsub.f32 %v3343, %v3883
      %v4400 = vsub.f32 %v3344, %v3883
      %v4401 = vsub.f32 %v3345, %v3883
      %v4402 = vsub.f32 %v3346, %v3883
      %v4403 = vsub.f32 %v3347, %v3883
      %v4404 = vsub.f32 %v3348, %v3883
      %v4405 = vsub.f32 %v3349, %v3883
      %v4406 = vsub.f32 %v3350, %v3883
      %v4407 = vsub.f32 %v3351, %v3883
      %v4408 = vsub.f32 %v3352, %v3900
      %v4409 = vsub.f32 %v3353, %v3900
      %v4410 = vsub.f32 %v3354, %v3900
      %v4411 = vsub.f32 %v3355, %v3900
      %v4412 = vsub.f32 %v3356, %v3900
      %v4413 = vsub.f32 %v3357, %v3900
      %v4414 = vsub.f32 %v3358, %v3900
      %v4415 = vsub.f32 %v3359, %v3900
      %v4416 = vsub.f32 %v3360, %v3900
      %v4417 = vsub.f32 %v3361, %v3900
      %v4418 = vsub.f32 %v3362, %v3900
      %v4419 = vsub.f32 %v3363, %v3900
      %v4420 = vsub.f32 %v3364, %v3900
      %v4421 = vsub.f32 %v3365, %v3900
      %v4422 = vsub.f32 %v3366, %v3900
      %v4423 = vsub.f32 %v3367, %v3900
      %v4424 = vsub.f32 %v3368, %v3917
      %v4425 = vsub.f32 %v3369, %v3917
      %v4426 = vsub.f32 %v3370, %v3917
      %v4427 = vsub.f32 %v3371, %v3917
      %v4428 = vsub.f32 %v3372, %v3917
      %v4429 = vsub.f32 %v3373, %v3917
      %v4430 = vsub.f32 %v3374, %v3917
      %v4431 = vsub.f32 %v3375, %v3917
      %v4432 = vsub.f32 %v3376, %v3917
      %v4433 = vsub.f32 %v3377, %v3917
      %v4434 = vsub.f32 %v3378, %v3917
      %v4435 = vsub.f32 %v3379, %v3917
      %v4436 = vsub.f32 %v3380, %v3917
      %v4437 = vsub.f32 %v3381, %v3917
      %v4438 = vsub.f32 %v3382, %v3917
      %v4439 = vsub.f32 %v3383, %v3917
      %v4440 = vsub.f32 %v3384, %v3934
      %v4441 = vsub.f32 %v3385, %v3934
      %v4442 = vsub.f32 %v3386, %v3934
      %v4443 = vsub.f32 %v3387, %v3934
      %v4444 = vsub.f32 %v3388, %v3934
      %v4445 = vsub.f32 %v3389, %v3934
      %v4446 = vsub.f32 %v3390, %v3934
      %v4447 = vsub.f32 %v3391, %v3934
      %v4448 = vsub.f32 %v3392, %v3934
      %v4449 = vsub.f32 %v3393, %v3934
      %v4450 = vsub.f32 %v3394, %v3934
      %v4451 = vsub.f32 %v3395, %v3934
      %v4452 = vsub.f32 %v3396, %v3934
      %v4453 = vsub.f32 %v3397, %v3934
      %v4454 = vsub.f32 %v3398, %v3934
      %v4455 = vsub.f32 %v3399, %v3934
      %v4456 = vsub.f32 %v3400, %v3951
      %v4457 = vsub.f32 %v3401, %v3951
      %v4458 = vsub.f32 %v3402, %v3951
      %v4459 = vsub.f32 %v3403, %v3951
      %v4460 = vsub.f32 %v3404, %v3951
      %v4461 = vsub.f32 %v3405, %v3951
      %v4462 = vsub.f32 %v3406, %v3951
      %v4463 = vsub.f32 %v3407, %v3951
      %v4464 = vsub.f32 %v3408, %v3951
      %v4465 = vsub.f32 %v3409, %v3951
      %v4466 = vsub.f32 %v3410, %v3951
      %v4467 = vsub.f32 %v3411, %v3951
      %v4468 = vsub.f32 %v3412, %v3951
      %v4469 = vsub.f32 %v3413, %v3951
      %v4470 = vsub.f32 %v3414, %v3951
      %v4471 = vsub.f32 %v3415, %v3951
      %v4472 = vsub.f32 %v3416, %v3968
      %v4473 = vsub.f32 %v3417, %v3968
      %v4474 = vsub.f32 %v3418, %v3968
      %v4475 = vsub.f32 %v3419, %v3968
      %v4476 = vsub.f32 %v3420, %v3968
      %v4477 = vsub.f32 %v3421, %v3968
      %v4478 = vsub.f32 %v3422, %v3968
      %v4479 = vsub.f32 %v3423, %v3968
      %v4480 = vsub.f32 %v3424, %v3968
      %v4481 = vsub.f32 %v3425, %v3968
      %v4482 = vsub.f32 %v3426, %v3968
      %v4483 = vsub.f32 %v3427, %v3968
      %v4484 = vsub.f32 %v3428, %v3968
      %v4485 = vsub.f32 %v3429, %v3968
      %v4486 = vsub.f32 %v3430, %v3968
      %v4487 = vsub.f32 %v3431, %v3968
      %v4488 = vsub.f32 %v3432, %v3985
      %v4489 = vsub.f32 %v3433, %v3985
      %v4490 = vsub.f32 %v3434, %v3985
      %v4491 = vsub.f32 %v3435, %v3985
      %v4492 = vsub.f32 %v3436, %v3985
      %v4493 = vsub.f32 %v3437, %v3985
      %v4494 = vsub.f32 %v3438, %v3985
      %v4495 = vsub.f32 %v3439, %v3985
      %v4496 = vsub.f32 %v3440, %v3985
      %v4497 = vsub.f32 %v3441, %v3985
      %v4498 = vsub.f32 %v3442, %v3985
      %v4499 = vsub.f32 %v3443, %v3985
      %v4500 = vsub.f32 %v3444, %v3985
      %v4501 = vsub.f32 %v3445, %v3985
      %v4502 = vsub.f32 %v3446, %v3985
      %v4503 = vsub.f32 %v3447, %v3985
      %v4504 = vsub.f32 %v3448, %v4002
      %v4505 = vsub.f32 %v3449, %v4002
      %v4506 = vsub.f32 %v3450, %v4002
      %v4507 = vsub.f32 %v3451, %v4002
      %v4508 = vsub.f32 %v3452, %v4002
      %v4509 = vsub.f32 %v3453, %v4002
      %v4510 = vsub.f32 %v3454, %v4002
      %v4511 = vsub.f32 %v3455, %v4002
      %v4512 = vsub.f32 %v3456, %v4002
      %v4513 = vsub.f32 %v3457, %v4002
      %v4514 = vsub.f32 %v3458, %v4002
      %v4515 = vsub.f32 %v3459, %v4002
      %v4516 = vsub.f32 %v3460, %v4002
      %v4517 = vsub.f32 %v3461, %v4002
      %v4518 = vsub.f32 %v3462, %v4002
      %v4519 = vsub.f32 %v3463, %v4002
      %v4520 = vsub.f32 %v3464, %v4019
      %v4521 = vsub.f32 %v3465, %v4019
      %v4522 = vsub.f32 %v3466, %v4019
      %v4523 = vsub.f32 %v3467, %v4019
      %v4524 = vsub.f32 %v3468, %v4019
      %v4525 = vsub.f32 %v3469, %v4019
      %v4526 = vsub.f32 %v3470, %v4019
      %v4527 = vsub.f32 %v3471, %v4019
      %v4528 = vsub.f32 %v3472, %v4019
      %v4529 = vsub.f32 %v3473, %v4019
      %v4530 = vsub.f32 %v3474, %v4019
      %v4531 = vsub.f32 %v3475, %v4019
      %v4532 = vsub.f32 %v3476, %v4019
      %v4533 = vsub.f32 %v3477, %v4019
      %v4534 = vsub.f32 %v3478, %v4019
      %v4535 = vsub.f32 %v3479, %v4019
      %v4536 = vsub.f32 %v3480, %v4036
      %v4537 = vsub.f32 %v3481, %v4036
      %v4538 = vsub.f32 %v3482, %v4036
      %v4539 = vsub.f32 %v3483, %v4036
      %v4540 = vsub.f32 %v3484, %v4036
      %v4541 = vsub.f32 %v3485, %v4036
      %v4542 = vsub.f32 %v3486, %v4036
      %v4543 = vsub.f32 %v3487, %v4036
      %v4544 = vsub.f32 %v3488, %v4036
      %v4545 = vsub.f32 %v3489, %v4036
      %v4546 = vsub.f32 %v3490, %v4036
      %v4547 = vsub.f32 %v3491, %v4036
      %v4548 = vsub.f32 %v3492, %v4036
      %v4549 = vsub.f32 %v3493, %v4036
      %v4550 = vsub.f32 %v3494, %v4036
      %v4551 = vsub.f32 %v3495, %v4036
      %v4552 = vsub.f32 %v3496, %v4053
      %v4553 = vsub.f32 %v3497, %v4053
      %v4554 = vsub.f32 %v3498, %v4053
      %v4555 = vsub.f32 %v3499, %v4053
      %v4556 = vsub.f32 %v3500, %v4053
      %v4557 = vsub.f32 %v3501, %v4053
      %v4558 = vsub.f32 %v3502, %v4053
      %v4559 = vsub.f32 %v3503, %v4053
      %v4560 = vsub.f32 %v3504, %v4053
      %v4561 = vsub.f32 %v3505, %v4053
      %v4562 = vsub.f32 %v3506, %v4053
      %v4563 = vsub.f32 %v3507, %v4053
      %v4564 = vsub.f32 %v3508, %v4053
      %v4565 = vsub.f32 %v3509, %v4053
      %v4566 = vsub.f32 %v3510, %v4053
      %v4567 = vsub.f32 %v3511, %v4053
      %v4568 = vsub.f32 %v3512, %v4070
      %v4569 = vsub.f32 %v3513, %v4070
      %v4570 = vsub.f32 %v3514, %v4070
      %v4571 = vsub.f32 %v3515, %v4070
      %v4572 = vsub.f32 %v3516, %v4070
      %v4573 = vsub.f32 %v3517, %v4070
      %v4574 = vsub.f32 %v3518, %v4070
      %v4575 = vsub.f32 %v3519, %v4070
      %v4576 = vsub.f32 %v3520, %v4070
      %v4577 = vsub.f32 %v3521, %v4070
      %v4578 = vsub.f32 %v3522, %v4070
      %v4579 = vsub.f32 %v3523, %v4070
      %v4580 = vsub.f32 %v3524, %v4070
      %v4581 = vsub.f32 %v3525, %v4070
      %v4582 = vsub.f32 %v3526, %v4070
      %v4583 = vsub.f32 %v3527, %v4070
      %v4584 = vsub.f32 %v3528, %v4087
      %v4585 = vsub.f32 %v3529, %v4087
      %v4586 = vsub.f32 %v3530, %v4087
      %v4587 = vsub.f32 %v3531, %v4087
      %v4588 = vsub.f32 %v3532, %v4087
      %v4589 = vsub.f32 %v3533, %v4087
      %v4590 = vsub.f32 %v3534, %v4087
      %v4591 = vsub.f32 %v3535, %v4087
      %v4592 = vsub.f32 %v3536, %v4087
      %v4593 = vsub.f32 %v3537, %v4087
      %v4594 = vsub.f32 %v3538, %v4087
      %v4595 = vsub.f32 %v3539, %v4087
      %v4596 = vsub.f32 %v3540, %v4087
      %v4597 = vsub.f32 %v3541, %v4087
      %v4598 = vsub.f32 %v3542, %v4087
      %v4599 = vsub.f32 %v3543, %v4087
      %v4600 = vmul.f32 %v4088, 1.442695
      %v4601 = vpow.pop %v4600
      %v4602 = vmul.f32 %v4089, 1.442695
      %v4603 = vpow.pop %v4602
      %v4604 = vmul.f32 %v4090, 1.442695
      %v4605 = vpow.pop %v4604
      %v4606 = vmul.f32 %v4091, 1.442695
      %v4607 = vpow.pop %v4606
      %v4608 = vmul.f32 %v4092, 1.442695
      %v4609 = vpow.pop %v4608
      %v4610 = vmul.f32 %v4093, 1.442695
      %v4611 = vpow.pop %v4610
      %v4612 = vmul.f32 %v4094, 1.442695
      %v4613 = vpow.pop %v4612
      %v4614 = vmul.f32 %v4095, 1.442695
      %v4615 = vpow.pop %v4614
      %v4616 = vmul.f32 %v4096, 1.442695
      %v4617 = vpow.pop %v4616
      %v4618 = vmul.f32 %v4097, 1.442695
      %v4619 = vpow.pop %v4618
      %v4620 = vmul.f32 %v4098, 1.442695
      %v4621 = vpow.pop %v4620
      %v4622 = vmul.f32 %v4099, 1.442695
      %v4623 = vpow.pop %v4622
      %v4624 = vmul.f32 %v4100, 1.442695
      %v4625 = vpow.pop %v4624
      %v4626 = vmul.f32 %v4101, 1.442695
      %v4627 = vpow.pop %v4626
      %v4628 = vmul.f32 %v4102, 1.442695
      %v4629 = vpow.pop %v4628
      %v4630 = vmul.f32 %v4103, 1.442695
      %v4631 = vpow.pop %v4630
      %v4632 = vmul.f32 %v4104, 1.442695
      %v4633 = vpow.pop %v4632
      %v4634 = vmul.f32 %v4105, 1.442695
      %v4635 = vpow.pop %v4634
      %v4636 = vmul.f32 %v4106, 1.442695
      %v4637 = vpow.pop %v4636
      %v4638 = vmul.f32 %v4107, 1.442695
      %v4639 = vpow.pop %v4638
      %v4640 = vmul.f32 %v4108, 1.442695
      %v4641 = vpow.pop %v4640
      %v4642 = vmul.f32 %v4109, 1.442695
      %v4643 = vpow.pop %v4642
      %v4644 = vmul.f32 %v4110, 1.442695
      %v4645 = vpow.pop %v4644
      %v4646 = vmul.f32 %v4111, 1.442695
      %v4647 = vpow.pop %v4646
      %v4648 = vmul.f32 %v4112, 1.442695
      %v4649 = vpow.pop %v4648
      %v4650 = vmul.f32 %v4113, 1.442695
      %v4651 = vpow.pop %v4650
      %v4652 = vmul.f32 %v4114, 1.442695
      %v4653 = vpow.pop %v4652
      %v4654 = vmul.f32 %v4115, 1.442695
      %v4655 = vpow.pop %v4654
      %v4656 = vmul.f32 %v4116, 1.442695
      %v4657 = vpow.pop %v4656
      %v4658 = vmul.f32 %v4117, 1.442695
      %v4659 = vpow.pop %v4658
      %v4660 = vmul.f32 %v4118, 1.442695
      %v4661 = vpow.pop %v4660
      %v4662 = vmul.f32 %v4119, 1.442695
      %v4663 = vpow.pop %v4662
      %v4664 = vmul.f32 %v4120, 1.442695
      %v4665 = vpow.pop %v4664
      %v4666 = vmul.f32 %v4121, 1.442695
      %v4667 = vpow.pop %v4666
      %v4668 = vmul.f32 %v4122, 1.442695
      %v4669 = vpow.pop %v4668
      %v4670 = vmul.f32 %v4123, 1.442695
      %v4671 = vpow.pop %v4670
      %v4672 = vmul.f32 %v4124, 1.442695
      %v4673 = vpow.pop %v4672
      %v4674 = vmul.f32 %v4125, 1.442695
      %v4675 = vpow.pop %v4674
      %v4676 = vmul.f32 %v4126, 1.442695
      %v4677 = vpow.pop %v4676
      %v4678 = vmul.f32 %v4127, 1.442695
      %v4679 = vpow.pop %v4678
      %v4680 = vmul.f32 %v4128, 1.442695
      %v4681 = vpow.pop %v4680
      %v4682 = vmul.f32 %v4129, 1.442695
      %v4683 = vpow.pop %v4682
      %v4684 = vmul.f32 %v4130, 1.442695
      %v4685 = vpow.pop %v4684
      %v4686 = vmul.f32 %v4131, 1.442695
      %v4687 = vpow.pop %v4686
      %v4688 = vmul.f32 %v4132, 1.442695
      %v4689 = vpow.pop %v4688
      %v4690 = vmul.f32 %v4133, 1.442695
      %v4691 = vpow.pop %v4690
      %v4692 = vmul.f32 %v4134, 1.442695
      %v4693 = vpow.pop %v4692
      %v4694 = vmul.f32 %v4135, 1.442695
      %v4695 = vpow.pop %v4694
      %v4696 = vmul.f32 %v4136, 1.442695
      %v4697 = vpow.pop %v4696
      %v4698 = vmul.f32 %v4137, 1.442695
      %v4699 = vpow.pop %v4698
      %v4700 = vmul.f32 %v4138, 1.442695
      %v4701 = vpow.pop %v4700
      %v4702 = vmul.f32 %v4139, 1.442695
      %v4703 = vpow.pop %v4702
      %v4704 = vmul.f32 %v4140, 1.442695
      %v4705 = vpow.pop %v4704
      %v4706 = vmul.f32 %v4141, 1.442695
      %v4707 = vpow.pop %v4706
      %v4708 = vmul.f32 %v4142, 1.442695
      %v4709 = vpow.pop %v4708
      %v4710 = vmul.f32 %v4143, 1.442695
      %v4711 = vpow.pop %v4710
      %v4712 = vmul.f32 %v4144, 1.442695
      %v4713 = vpow.pop %v4712
      %v4714 = vmul.f32 %v4145, 1.442695
      %v4715 = vpow.pop %v4714
      %v4716 = vmul.f32 %v4146, 1.442695
      %v4717 = vpow.pop %v4716
      %v4718 = vmul.f32 %v4147, 1.442695
      %v4719 = vpow.pop %v4718
      %v4720 = vmul.f32 %v4148, 1.442695
      %v4721 = vpow.pop %v4720
      %v4722 = vmul.f32 %v4149, 1.442695
      %v4723 = vpow.pop %v4722
      %v4724 = vmul.f32 %v4150, 1.442695
      %v4725 = vpow.pop %v4724
      %v4726 = vmul.f32 %v4151, 1.442695
      %v4727 = vpow.pop %v4726
      %v4728 = vmul.f32 %v4152, 1.442695
      %v4729 = vpow.pop %v4728
      %v4730 = vmul.f32 %v4153, 1.442695
      %v4731 = vpow.pop %v4730
      %v4732 = vmul.f32 %v4154, 1.442695
      %v4733 = vpow.pop %v4732
      %v4734 = vmul.f32 %v4155, 1.442695
      %v4735 = vpow.pop %v4734
      %v4736 = vmul.f32 %v4156, 1.442695
      %v4737 = vpow.pop %v4736
      %v4738 = vmul.f32 %v4157, 1.442695
      %v4739 = vpow.pop %v4738
      %v4740 = vmul.f32 %v4158, 1.442695
      %v4741 = vpow.pop %v4740
      %v4742 = vmul.f32 %v4159, 1.442695
      %v4743 = vpow.pop %v4742
      %v4744 = vmul.f32 %v4160, 1.442695
      %v4745 = vpow.pop %v4744
      %v4746 = vmul.f32 %v4161, 1.442695
      %v4747 = vpow.pop %v4746
      %v4748 = vmul.f32 %v4162, 1.442695
      %v4749 = vpow.pop %v4748
      %v4750 = vmul.f32 %v4163, 1.442695
      %v4751 = vpow.pop %v4750
      %v4752 = vmul.f32 %v4164, 1.442695
      %v4753 = vpow.pop %v4752
      %v4754 = vmul.f32 %v4165, 1.442695
      %v4755 = vpow.pop %v4754
      %v4756 = vmul.f32 %v4166, 1.442695
      %v4757 = vpow.pop %v4756
      %v4758 = vmul.f32 %v4167, 1.442695
      %v4759 = vpow.pop %v4758
      %v4760 = vmul.f32 %v4168, 1.442695
      %v4761 = vpow.pop %v4760
      %v4762 = vmul.f32 %v4169, 1.442695
      %v4763 = vpow.pop %v4762
      %v4764 = vmul.f32 %v4170, 1.442695
      %v4765 = vpow.pop %v4764
      %v4766 = vmul.f32 %v4171, 1.442695
      %v4767 = vpow.pop %v4766
      %v4768 = vmul.f32 %v4172, 1.442695
      %v4769 = vpow.pop %v4768
      %v4770 = vmul.f32 %v4173, 1.442695
      %v4771 = vpow.pop %v4770
      %v4772 = vmul.f32 %v4174, 1.442695
      %v4773 = vpow.pop %v4772
      %v4774 = vmul.f32 %v4175, 1.442695
      %v4775 = vpow.pop %v4774
      %v4776 = vmul.f32 %v4176, 1.442695
      %v4777 = vpow.pop %v4776
      %v4778 = vmul.f32 %v4177, 1.442695
      %v4779 = vpow.pop %v4778
      %v4780 = vmul.f32 %v4178, 1.442695
      %v4781 = vpow.pop %v4780
      %v4782 = vmul.f32 %v4179, 1.442695
      %v4783 = vpow.pop %v4782
      %v4784 = vmul.f32 %v4180, 1.442695
      %v4785 = vpow.pop %v4784
      %v4786 = vmul.f32 %v4181, 1.442695
      %v4787 = vpow.pop %v4786
      %v4788 = vmul.f32 %v4182, 1.442695
      %v4789 = vpow.pop %v4788
      %v4790 = vmul.f32 %v4183, 1.442695
      %v4791 = vpow.pop %v4790
      %v4792 = vmul.f32 %v4184, 1.442695
      %v4793 = vpow.pop %v4792
      %v4794 = vmul.f32 %v4185, 1.442695
      %v4795 = vpow.pop %v4794
      %v4796 = vmul.f32 %v4186, 1.442695
      %v4797 = vpow.pop %v4796
      %v4798 = vmul.f32 %v4187, 1.442695
      %v4799 = vpow.pop %v4798
      %v4800 = vmul.f32 %v4188, 1.442695
      %v4801 = vpow.pop %v4800
      %v4802 = vmul.f32 %v4189, 1.442695
      %v4803 = vpow.pop %v4802
      %v4804 = vmul.f32 %v4190, 1.442695
      %v4805 = vpow.pop %v4804
      %v4806 = vmul.f32 %v4191, 1.442695
      %v4807 = vpow.pop %v4806
      %v4808 = vmul.f32 %v4192, 1.442695
      %v4809 = vpow.pop %v4808
      %v4810 = vmul.f32 %v4193, 1.442695
      %v4811 = vpow.pop %v4810
      %v4812 = vmul.f32 %v4194, 1.442695
      %v4813 = vpow.pop %v4812
      %v4814 = vmul.f32 %v4195, 1.442695
      %v4815 = vpow.pop %v4814
      %v4816 = vmul.f32 %v4196, 1.442695
      %v4817 = vpow.pop %v4816
      %v4818 = vmul.f32 %v4197, 1.442695
      %v4819 = vpow.pop %v4818
      %v4820 = vmul.f32 %v4198, 1.442695
      %v4821 = vpow.pop %v4820
      %v4822 = vmul.f32 %v4199, 1.442695
      %v4823 = vpow.pop %v4822
      %v4824 = vmul.f32 %v4200, 1.442695
      %v4825 = vpow.pop %v4824
      %v4826 = vmul.f32 %v4201, 1.442695
      %v4827 = vpow.pop %v4826
      %v4828 = vmul.f32 %v4202, 1.442695
      %v4829 = vpow.pop %v4828
      %v4830 = vmul.f32 %v4203, 1.442695
      %v4831 = vpow.pop %v4830
      %v4832 = vmul.f32 %v4204, 1.442695
      %v4833 = vpow.pop %v4832
      %v4834 = vmul.f32 %v4205, 1.442695
      %v4835 = vpow.pop %v4834
      %v4836 = vmul.f32 %v4206, 1.442695
      %v4837 = vpow.pop %v4836
      %v4838 = vmul.f32 %v4207, 1.442695
      %v4839 = vpow.pop %v4838
      %v4840 = vmul.f32 %v4208, 1.442695
      %v4841 = vpow.pop %v4840
      %v4842 = vmul.f32 %v4209, 1.442695
      %v4843 = vpow.pop %v4842
      %v4844 = vmul.f32 %v4210, 1.442695
      %v4845 = vpow.pop %v4844
      %v4846 = vmul.f32 %v4211, 1.442695
      %v4847 = vpow.pop %v4846
      %v4848 = vmul.f32 %v4212, 1.442695
      %v4849 = vpow.pop %v4848
      %v4850 = vmul.f32 %v4213, 1.442695
      %v4851 = vpow.pop %v4850
      %v4852 = vmul.f32 %v4214, 1.442695
      %v4853 = vpow.pop %v4852
      %v4854 = vmul.f32 %v4215, 1.442695
      %v4855 = vpow.pop %v4854
      %v4856 = vmul.f32 %v4216, 1.442695
      %v4857 = vpow.pop %v4856
      %v4858 = vmul.f32 %v4217, 1.442695
      %v4859 = vpow.pop %v4858
      %v4860 = vmul.f32 %v4218, 1.442695
      %v4861 = vpow.pop %v4860
      %v4862 = vmul.f32 %v4219, 1.442695
      %v4863 = vpow.pop %v4862
      %v4864 = vmul.f32 %v4220, 1.442695
      %v4865 = vpow.pop %v4864
      %v4866 = vmul.f32 %v4221, 1.442695
      %v4867 = vpow.pop %v4866
      %v4868 = vmul.f32 %v4222, 1.442695
      %v4869 = vpow.pop %v4868
      %v4870 = vmul.f32 %v4223, 1.442695
      %v4871 = vpow.pop %v4870
      %v4872 = vmul.f32 %v4224, 1.442695
      %v4873 = vpow.pop %v4872
      %v4874 = vmul.f32 %v4225, 1.442695
      %v4875 = vpow.pop %v4874
      %v4876 = vmul.f32 %v4226, 1.442695
      %v4877 = vpow.pop %v4876
      %v4878 = vmul.f32 %v4227, 1.442695
      %v4879 = vpow.pop %v4878
      %v4880 = vmul.f32 %v4228, 1.442695
      %v4881 = vpow.pop %v4880
      %v4882 = vmul.f32 %v4229, 1.442695
      %v4883 = vpow.pop %v4882
      %v4884 = vmul.f32 %v4230, 1.442695
      %v4885 = vpow.pop %v4884
      %v4886 = vmul.f32 %v4231, 1.442695
      %v4887 = vpow.pop %v4886
      %v4888 = vmul.f32 %v4232, 1.442695
      %v4889 = vpow.pop %v4888
      %v4890 = vmul.f32 %v4233, 1.442695
      %v4891 = vpow.pop %v4890
      %v4892 = vmul.f32 %v4234, 1.442695
      %v4893 = vpow.pop %v4892
      %v4894 = vmul.f32 %v4235, 1.442695
      %v4895 = vpow.pop %v4894
      %v4896 = vmul.f32 %v4236, 1.442695
      %v4897 = vpow.pop %v4896
      %v4898 = vmul.f32 %v4237, 1.442695
      %v4899 = vpow.pop %v4898
      %v4900 = vmul.f32 %v4238, 1.442695
      %v4901 = vpow.pop %v4900
      %v4902 = vmul.f32 %v4239, 1.442695
      %v4903 = vpow.pop %v4902
      %v4904 = vmul.f32 %v4240, 1.442695
      %v4905 = vpow.pop %v4904
      %v4906 = vmul.f32 %v4241, 1.442695
      %v4907 = vpow.pop %v4906
      %v4908 = vmul.f32 %v4242, 1.442695
      %v4909 = vpow.pop %v4908
      %v4910 = vmul.f32 %v4243, 1.442695
      %v4911 = vpow.pop %v4910
      %v4912 = vmul.f32 %v4244, 1.442695
      %v4913 = vpow.pop %v4912
      %v4914 = vmul.f32 %v4245, 1.442695
      %v4915 = vpow.pop %v4914
      %v4916 = vmul.f32 %v4246, 1.442695
      %v4917 = vpow.pop %v4916
      %v4918 = vmul.f32 %v4247, 1.442695
      %v4919 = vpow.pop %v4918
      %v4920 = vmul.f32 %v4248, 1.442695
      %v4921 = vpow.pop %v4920
      %v4922 = vmul.f32 %v4249, 1.442695
      %v4923 = vpow.pop %v4922
      %v4924 = vmul.f32 %v4250, 1.442695
      %v4925 = vpow.pop %v4924
      %v4926 = vmul.f32 %v4251, 1.442695
      %v4927 = vpow.pop %v4926
      %v4928 = vmul.f32 %v4252, 1.442695
      %v4929 = vpow.pop %v4928
      %v4930 = vmul.f32 %v4253, 1.442695
      %v4931 = vpow.pop %v4930
      %v4932 = vmul.f32 %v4254, 1.442695
      %v4933 = vpow.pop %v4932
      %v4934 = vmul.f32 %v4255, 1.442695
      %v4935 = vpow.pop %v4934
      %v4936 = vmul.f32 %v4256, 1.442695
      %v4937 = vpow.pop %v4936
      %v4938 = vmul.f32 %v4257, 1.442695
      %v4939 = vpow.pop %v4938
      %v4940 = vmul.f32 %v4258, 1.442695
      %v4941 = vpow.pop %v4940
      %v4942 = vmul.f32 %v4259, 1.442695
      %v4943 = vpow.pop %v4942
      %v4944 = vmul.f32 %v4260, 1.442695
      %v4945 = vpow.pop %v4944
      %v4946 = vmul.f32 %v4261, 1.442695
      %v4947 = vpow.pop %v4946
      %v4948 = vmul.f32 %v4262, 1.442695
      %v4949 = vpow.pop %v4948
      %v4950 = vmul.f32 %v4263, 1.442695
      %v4951 = vpow.pop %v4950
      %v4952 = vmul.f32 %v4264, 1.442695
      %v4953 = vpow.pop %v4952
      %v4954 = vmul.f32 %v4265, 1.442695
      %v4955 = vpow.pop %v4954
      %v4956 = vmul.f32 %v4266, 1.442695
      %v4957 = vpow.pop %v4956
      %v4958 = vmul.f32 %v4267, 1.442695
      %v4959 = vpow.pop %v4958
      %v4960 = vmul.f32 %v4268, 1.442695
      %v4961 = vpow.pop %v4960
      %v4962 = vmul.f32 %v4269, 1.442695
      %v4963 = vpow.pop %v4962
      %v4964 = vmul.f32 %v4270, 1.442695
      %v4965 = vpow.pop %v4964
      %v4966 = vmul.f32 %v4271, 1.442695
      %v4967 = vpow.pop %v4966
      %v4968 = vmul.f32 %v4272, 1.442695
      %v4969 = vpow.pop %v4968
      %v4970 = vmul.f32 %v4273, 1.442695
      %v4971 = vpow.pop %v4970
      %v4972 = vmul.f32 %v4274, 1.442695
      %v4973 = vpow.pop %v4972
      %v4974 = vmul.f32 %v4275, 1.442695
      %v4975 = vpow.pop %v4974
      %v4976 = vmul.f32 %v4276, 1.442695
      %v4977 = vpow.pop %v4976
      %v4978 = vmul.f32 %v4277, 1.442695
      %v4979 = vpow.pop %v4978
      %v4980 = vmul.f32 %v4278, 1.442695
      %v4981 = vpow.pop %v4980
      %v4982 = vmul.f32 %v4279, 1.442695
      %v4983 = vpow.pop %v4982
      %v4984 = vmul.f32 %v4280, 1.442695
      %v4985 = vpow.pop %v4984
      %v4986 = vmul.f32 %v4281, 1.442695
      %v4987 = vpow.pop %v4986
      %v4988 = vmul.f32 %v4282, 1.442695
      %v4989 = vpow.pop %v4988
      %v4990 = vmul.f32 %v4283, 1.442695
      %v4991 = vpow.pop %v4990
      %v4992 = vmul.f32 %v4284, 1.442695
      %v4993 = vpow.pop %v4992
      %v4994 = vmul.f32 %v4285, 1.442695
      %v4995 = vpow.pop %v4994
      %v4996 = vmul.f32 %v4286, 1.442695
      %v4997 = vpow.pop %v4996
      %v4998 = vmul.f32 %v4287, 1.442695
      %v4999 = vpow.pop %v4998
      %v5000 = vmul.f32 %v4288, 1.442695
      %v5001 = vpow.pop %v5000
      %v5002 = vmul.f32 %v4289, 1.442695
      %v5003 = vpow.pop %v5002
      %v5004 = vmul.f32 %v4290, 1.442695
      %v5005 = vpow.pop %v5004
      %v5006 = vmul.f32 %v4291, 1.442695
      %v5007 = vpow.pop %v5006
      %v5008 = vmul.f32 %v4292, 1.442695
      %v5009 = vpow.pop %v5008
      %v5010 = vmul.f32 %v4293, 1.442695
      %v5011 = vpow.pop %v5010
      %v5012 = vmul.f32 %v4294, 1.442695
      %v5013 = vpow.pop %v5012
      %v5014 = vmul.f32 %v4295, 1.442695
      %v5015 = vpow.pop %v5014
      %v5016 = vmul.f32 %v4296, 1.442695
      %v5017 = vpow.pop %v5016
      %v5018 = vmul.f32 %v4297, 1.442695
      %v5019 = vpow.pop %v5018
      %v5020 = vmul.f32 %v4298, 1.442695
      %v5021 = vpow.pop %v5020
      %v5022 = vmul.f32 %v4299, 1.442695
      %v5023 = vpow.pop %v5022
      %v5024 = vmul.f32 %v4300, 1.442695
      %v5025 = vpow.pop %v5024
      %v5026 = vmul.f32 %v4301, 1.442695
      %v5027 = vpow.pop %v5026
      %v5028 = vmul.f32 %v4302, 1.442695
      %v5029 = vpow.pop %v5028
      %v5030 = vmul.f32 %v4303, 1.442695
      %v5031 = vpow.pop %v5030
      %v5032 = vmul.f32 %v4304, 1.442695
      %v5033 = vpow.pop %v5032
      %v5034 = vmul.f32 %v4305, 1.442695
      %v5035 = vpow.pop %v5034
      %v5036 = vmul.f32 %v4306, 1.442695
      %v5037 = vpow.pop %v5036
      %v5038 = vmul.f32 %v4307, 1.442695
      %v5039 = vpow.pop %v5038
      %v5040 = vmul.f32 %v4308, 1.442695
      %v5041 = vpow.pop %v5040
      %v5042 = vmul.f32 %v4309, 1.442695
      %v5043 = vpow.pop %v5042
      %v5044 = vmul.f32 %v4310, 1.442695
      %v5045 = vpow.pop %v5044
      %v5046 = vmul.f32 %v4311, 1.442695
      %v5047 = vpow.pop %v5046
      %v5048 = vmul.f32 %v4312, 1.442695
      %v5049 = vpow.pop %v5048
      %v5050 = vmul.f32 %v4313, 1.442695
      %v5051 = vpow.pop %v5050
      %v5052 = vmul.f32 %v4314, 1.442695
      %v5053 = vpow.pop %v5052
      %v5054 = vmul.f32 %v4315, 1.442695
      %v5055 = vpow.pop %v5054
      %v5056 = vmul.f32 %v4316, 1.442695
      %v5057 = vpow.pop %v5056
      %v5058 = vmul.f32 %v4317, 1.442695
      %v5059 = vpow.pop %v5058
      %v5060 = vmul.f32 %v4318, 1.442695
      %v5061 = vpow.pop %v5060
      %v5062 = vmul.f32 %v4319, 1.442695
      %v5063 = vpow.pop %v5062
      %v5064 = vmul.f32 %v4320, 1.442695
      %v5065 = vpow.pop %v5064
      %v5066 = vmul.f32 %v4321, 1.442695
      %v5067 = vpow.pop %v5066
      %v5068 = vmul.f32 %v4322, 1.442695
      %v5069 = vpow.pop %v5068
      %v5070 = vmul.f32 %v4323, 1.442695
      %v5071 = vpow.pop %v5070
      %v5072 = vmul.f32 %v4324, 1.442695
      %v5073 = vpow.pop %v5072
      %v5074 = vmul.f32 %v4325, 1.442695
      %v5075 = vpow.pop %v5074
      %v5076 = vmul.f32 %v4326, 1.442695
      %v5077 = vpow.pop %v5076
      %v5078 = vmul.f32 %v4327, 1.442695
      %v5079 = vpow.pop %v5078
      %v5080 = vmul.f32 %v4328, 1.442695
      %v5081 = vpow.pop %v5080
      %v5082 = vmul.f32 %v4329, 1.442695
      %v5083 = vpow.pop %v5082
      %v5084 = vmul.f32 %v4330, 1.442695
      %v5085 = vpow.pop %v5084
      %v5086 = vmul.f32 %v4331, 1.442695
      %v5087 = vpow.pop %v5086
      %v5088 = vmul.f32 %v4332, 1.442695
      %v5089 = vpow.pop %v5088
      %v5090 = vmul.f32 %v4333, 1.442695
      %v5091 = vpow.pop %v5090
      %v5092 = vmul.f32 %v4334, 1.442695
      %v5093 = vpow.pop %v5092
      %v5094 = vmul.f32 %v4335, 1.442695
      %v5095 = vpow.pop %v5094
      %v5096 = vmul.f32 %v4336, 1.442695
      %v5097 = vpow.pop %v5096
      %v5098 = vmul.f32 %v4337, 1.442695
      %v5099 = vpow.pop %v5098
      %v5100 = vmul.f32 %v4338, 1.442695
      %v5101 = vpow.pop %v5100
      %v5102 = vmul.f32 %v4339, 1.442695
      %v5103 = vpow.pop %v5102
      %v5104 = vmul.f32 %v4340, 1.442695
      %v5105 = vpow.pop %v5104
      %v5106 = vmul.f32 %v4341, 1.442695
      %v5107 = vpow.pop %v5106
      %v5108 = vmul.f32 %v4342, 1.442695
      %v5109 = vpow.pop %v5108
      %v5110 = vmul.f32 %v4343, 1.442695
      %v5111 = vpow.pop %v5110
      %v5112 = vmul.f32 %v4344, 1.442695
      %v5113 = vpow.pop %v5112
      %v5114 = vmul.f32 %v4345, 1.442695
      %v5115 = vpow.pop %v5114
      %v5116 = vmul.f32 %v4346, 1.442695
      %v5117 = vpow.pop %v5116
      %v5118 = vmul.f32 %v4347, 1.442695
      %v5119 = vpow.pop %v5118
      %v5120 = vmul.f32 %v4348, 1.442695
      %v5121 = vpow.pop %v5120
      %v5122 = vmul.f32 %v4349, 1.442695
      %v5123 = vpow.pop %v5122
      %v5124 = vmul.f32 %v4350, 1.442695
      %v5125 = vpow.pop %v5124
      %v5126 = vmul.f32 %v4351, 1.442695
      %v5127 = vpow.pop %v5126
      %v5128 = vmul.f32 %v4352, 1.442695
      %v5129 = vpow.pop %v5128
      %v5130 = vmul.f32 %v4353, 1.442695
      %v5131 = vpow.pop %v5130
      %v5132 = vmul.f32 %v4354, 1.442695
      %v5133 = vpow.pop %v5132
      %v5134 = vmul.f32 %v4355, 1.442695
      %v5135 = vpow.pop %v5134
      %v5136 = vmul.f32 %v4356, 1.442695
      %v5137 = vpow.pop %v5136
      %v5138 = vmul.f32 %v4357, 1.442695
      %v5139 = vpow.pop %v5138
      %v5140 = vmul.f32 %v4358, 1.442695
      %v5141 = vpow.pop %v5140
      %v5142 = vmul.f32 %v4359, 1.442695
      %v5143 = vpow.pop %v5142
      %v5144 = vmul.f32 %v4360, 1.442695
      %v5145 = vpow.pop %v5144
      %v5146 = vmul.f32 %v4361, 1.442695
      %v5147 = vpow.pop %v5146
      %v5148 = vmul.f32 %v4362, 1.442695
      %v5149 = vpow.pop %v5148
      %v5150 = vmul.f32 %v4363, 1.442695
      %v5151 = vpow.pop %v5150
      %v5152 = vmul.f32 %v4364, 1.442695
      %v5153 = vpow.pop %v5152
      %v5154 = vmul.f32 %v4365, 1.442695
      %v5155 = vpow.pop %v5154
      %v5156 = vmul.f32 %v4366, 1.442695
      %v5157 = vpow.pop %v5156
      %v5158 = vmul.f32 %v4367, 1.442695
      %v5159 = vpow.pop %v5158
      %v5160 = vmul.f32 %v4368, 1.442695
      %v5161 = vpow.pop %v5160
      %v5162 = vmul.f32 %v4369, 1.442695
      %v5163 = vpow.pop %v5162
      %v5164 = vmul.f32 %v4370, 1.442695
      %v5165 = vpow.pop %v5164
      %v5166 = vmul.f32 %v4371, 1.442695
      %v5167 = vpow.pop %v5166
      %v5168 = vmul.f32 %v4372, 1.442695
      %v5169 = vpow.pop %v5168
      %v5170 = vmul.f32 %v4373, 1.442695
      %v5171 = vpow.pop %v5170
      %v5172 = vmul.f32 %v4374, 1.442695
      %v5173 = vpow.pop %v5172
      %v5174 = vmul.f32 %v4375, 1.442695
      %v5175 = vpow.pop %v5174
      %v5176 = vmul.f32 %v4376, 1.442695
      %v5177 = vpow.pop %v5176
      %v5178 = vmul.f32 %v4377, 1.442695
      %v5179 = vpow.pop %v5178
      %v5180 = vmul.f32 %v4378, 1.442695
      %v5181 = vpow.pop %v5180
      %v5182 = vmul.f32 %v4379, 1.442695
      %v5183 = vpow.pop %v5182
      %v5184 = vmul.f32 %v4380, 1.442695
      %v5185 = vpow.pop %v5184
      %v5186 = vmul.f32 %v4381, 1.442695
      %v5187 = vpow.pop %v5186
      %v5188 = vmul.f32 %v4382, 1.442695
      %v5189 = vpow.pop %v5188
      %v5190 = vmul.f32 %v4383, 1.442695
      %v5191 = vpow.pop %v5190
      %v5192 = vmul.f32 %v4384, 1.442695
      %v5193 = vpow.pop %v5192
      %v5194 = vmul.f32 %v4385, 1.442695
      %v5195 = vpow.pop %v5194
      %v5196 = vmul.f32 %v4386, 1.442695
      %v5197 = vpow.pop %v5196
      %v5198 = vmul.f32 %v4387, 1.442695
      %v5199 = vpow.pop %v5198
      %v5200 = vmul.f32 %v4388, 1.442695
      %v5201 = vpow.pop %v5200
      %v5202 = vmul.f32 %v4389, 1.442695
      %v5203 = vpow.pop %v5202
      %v5204 = vmul.f32 %v4390, 1.442695
      %v5205 = vpow.pop %v5204
      %v5206 = vmul.f32 %v4391, 1.442695
      %v5207 = vpow.pop %v5206
      %v5208 = vmul.f32 %v4392, 1.442695
      %v5209 = vpow.pop %v5208
      %v5210 = vmul.f32 %v4393, 1.442695
      %v5211 = vpow.pop %v5210
      %v5212 = vmul.f32 %v4394, 1.442695
      %v5213 = vpow.pop %v5212
      %v5214 = vmul.f32 %v4395, 1.442695
      %v5215 = vpow.pop %v5214
      %v5216 = vmul.f32 %v4396, 1.442695
      %v5217 = vpow.pop %v5216
      %v5218 = vmul.f32 %v4397, 1.442695
      %v5219 = vpow.pop %v5218
      %v5220 = vmul.f32 %v4398, 1.442695
      %v5221 = vpow.pop %v5220
      %v5222 = vmul.f32 %v4399, 1.442695
      %v5223 = vpow.pop %v5222
      %v5224 = vmul.f32 %v4400, 1.442695
      %v5225 = vpow.pop %v5224
      %v5226 = vmul.f32 %v4401, 1.442695
      %v5227 = vpow.pop %v5226
      %v5228 = vmul.f32 %v4402, 1.442695
      %v5229 = vpow.pop %v5228
      %v5230 = vmul.f32 %v4403, 1.442695
      %v5231 = vpow.pop %v5230
      %v5232 = vmul.f32 %v4404, 1.442695
      %v5233 = vpow.pop %v5232
      %v5234 = vmul.f32 %v4405, 1.442695
      %v5235 = vpow.pop %v5234
      %v5236 = vmul.f32 %v4406, 1.442695
      %v5237 = vpow.pop %v5236
      %v5238 = vmul.f32 %v4407, 1.442695
      %v5239 = vpow.pop %v5238
      %v5240 = vmul.f32 %v4408, 1.442695
      %v5241 = vpow.pop %v5240
      %v5242 = vmul.f32 %v4409, 1.442695
      %v5243 = vpow.pop %v5242
      %v5244 = vmul.f32 %v4410, 1.442695
      %v5245 = vpow.pop %v5244
      %v5246 = vmul.f32 %v4411, 1.442695
      %v5247 = vpow.pop %v5246
      %v5248 = vmul.f32 %v4412, 1.442695
      %v5249 = vpow.pop %v5248
      %v5250 = vmul.f32 %v4413, 1.442695
      %v5251 = vpow.pop %v5250
      %v5252 = vmul.f32 %v4414, 1.442695
      %v5253 = vpow.pop %v5252
      %v5254 = vmul.f32 %v4415, 1.442695
      %v5255 = vpow.pop %v5254
      %v5256 = vmul.f32 %v4416, 1.442695
      %v5257 = vpow.pop %v5256
      %v5258 = vmul.f32 %v4417, 1.442695
      %v5259 = vpow.pop %v5258
      %v5260 = vmul.f32 %v4418, 1.442695
      %v5261 = vpow.pop %v5260
      %v5262 = vmul.f32 %v4419, 1.442695
      %v5263 = vpow.pop %v5262
      %v5264 = vmul.f32 %v4420, 1.442695
      %v5265 = vpow.pop %v5264
      %v5266 = vmul.f32 %v4421, 1.442695
      %v5267 = vpow.pop %v5266
      %v5268 = vmul.f32 %v4422, 1.442695
      %v5269 = vpow.pop %v5268
      %v5270 = vmul.f32 %v4423, 1.442695
      %v5271 = vpow.pop %v5270
      %v5272 = vmul.f32 %v4424, 1.442695
      %v5273 = vpow.pop %v5272
      %v5274 = vmul.f32 %v4425, 1.442695
      %v5275 = vpow.pop %v5274
      %v5276 = vmul.f32 %v4426, 1.442695
      %v5277 = vpow.pop %v5276
      %v5278 = vmul.f32 %v4427, 1.442695
      %v5279 = vpow.pop %v5278
      %v5280 = vmul.f32 %v4428, 1.442695
      %v5281 = vpow.pop %v5280
      %v5282 = vmul.f32 %v4429, 1.442695
      %v5283 = vpow.pop %v5282
      %v5284 = vmul.f32 %v4430, 1.442695
      %v5285 = vpow.pop %v5284
      %v5286 = vmul.f32 %v4431, 1.442695
      %v5287 = vpow.pop %v5286
      %v5288 = vmul.f32 %v4432, 1.442695
      %v5289 = vpow.pop %v5288
      %v5290 = vmul.f32 %v4433, 1.442695
      %v5291 = vpow.pop %v5290
      %v5292 = vmul.f32 %v4434, 1.442695
      %v5293 = vpow.pop %v5292
      %v5294 = vmul.f32 %v4435, 1.442695
      %v5295 = vpow.pop %v5294
      %v5296 = vmul.f32 %v4436, 1.442695
      %v5297 = vpow.pop %v5296
      %v5298 = vmul.f32 %v4437, 1.442695
      %v5299 = vpow.pop %v5298
      %v5300 = vmul.f32 %v4438, 1.442695
      %v5301 = vpow.pop %v5300
      %v5302 = vmul.f32 %v4439, 1.442695
      %v5303 = vpow.pop %v5302
      %v5304 = vmul.f32 %v4440, 1.442695
      %v5305 = vpow.pop %v5304
      %v5306 = vmul.f32 %v4441, 1.442695
      %v5307 = vpow.pop %v5306
      %v5308 = vmul.f32 %v4442, 1.442695
      %v5309 = vpow.pop %v5308
      %v5310 = vmul.f32 %v4443, 1.442695
      %v5311 = vpow.pop %v5310
      %v5312 = vmul.f32 %v4444, 1.442695
      %v5313 = vpow.pop %v5312
      %v5314 = vmul.f32 %v4445, 1.442695
      %v5315 = vpow.pop %v5314
      %v5316 = vmul.f32 %v4446, 1.442695
      %v5317 = vpow.pop %v5316
      %v5318 = vmul.f32 %v4447, 1.442695
      %v5319 = vpow.pop %v5318
      %v5320 = vmul.f32 %v4448, 1.442695
      %v5321 = vpow.pop %v5320
      %v5322 = vmul.f32 %v4449, 1.442695
      %v5323 = vpow.pop %v5322
      %v5324 = vmul.f32 %v4450, 1.442695
      %v5325 = vpow.pop %v5324
      %v5326 = vmul.f32 %v4451, 1.442695
      %v5327 = vpow.pop %v5326
      %v5328 = vmul.f32 %v4452, 1.442695
      %v5329 = vpow.pop %v5328
      %v5330 = vmul.f32 %v4453, 1.442695
      %v5331 = vpow.pop %v5330
      %v5332 = vmul.f32 %v4454, 1.442695
      %v5333 = vpow.pop %v5332
      %v5334 = vmul.f32 %v4455, 1.442695
      %v5335 = vpow.pop %v5334
      %v5336 = vmul.f32 %v4456, 1.442695
      %v5337 = vpow.pop %v5336
      %v5338 = vmul.f32 %v4457, 1.442695
      %v5339 = vpow.pop %v5338
      %v5340 = vmul.f32 %v4458, 1.442695
      %v5341 = vpow.pop %v5340
      %v5342 = vmul.f32 %v4459, 1.442695
      %v5343 = vpow.pop %v5342
      %v5344 = vmul.f32 %v4460, 1.442695
      %v5345 = vpow.pop %v5344
      %v5346 = vmul.f32 %v4461, 1.442695
      %v5347 = vpow.pop %v5346
      %v5348 = vmul.f32 %v4462, 1.442695
      %v5349 = vpow.pop %v5348
      %v5350 = vmul.f32 %v4463, 1.442695
      %v5351 = vpow.pop %v5350
      %v5352 = vmul.f32 %v4464, 1.442695
      %v5353 = vpow.pop %v5352
      %v5354 = vmul.f32 %v4465, 1.442695
      %v5355 = vpow.pop %v5354
      %v5356 = vmul.f32 %v4466, 1.442695
      %v5357 = vpow.pop %v5356
      %v5358 = vmul.f32 %v4467, 1.442695
      %v5359 = vpow.pop %v5358
      %v5360 = vmul.f32 %v4468, 1.442695
      %v5361 = vpow.pop %v5360
      %v5362 = vmul.f32 %v4469, 1.442695
      %v5363 = vpow.pop %v5362
      %v5364 = vmul.f32 %v4470, 1.442695
      %v5365 = vpow.pop %v5364
      %v5366 = vmul.f32 %v4471, 1.442695
      %v5367 = vpow.pop %v5366
      %v5368 = vmul.f32 %v4472, 1.442695
      %v5369 = vpow.pop %v5368
      %v5370 = vmul.f32 %v4473, 1.442695
      %v5371 = vpow.pop %v5370
      %v5372 = vmul.f32 %v4474, 1.442695
      %v5373 = vpow.pop %v5372
      %v5374 = vmul.f32 %v4475, 1.442695
      %v5375 = vpow.pop %v5374
      %v5376 = vmul.f32 %v4476, 1.442695
      %v5377 = vpow.pop %v5376
      %v5378 = vmul.f32 %v4477, 1.442695
      %v5379 = vpow.pop %v5378
      %v5380 = vmul.f32 %v4478, 1.442695
      %v5381 = vpow.pop %v5380
      %v5382 = vmul.f32 %v4479, 1.442695
      %v5383 = vpow.pop %v5382
      %v5384 = vmul.f32 %v4480, 1.442695
      %v5385 = vpow.pop %v5384
      %v5386 = vmul.f32 %v4481, 1.442695
      %v5387 = vpow.pop %v5386
      %v5388 = vmul.f32 %v4482, 1.442695
      %v5389 = vpow.pop %v5388
      %v5390 = vmul.f32 %v4483, 1.442695
      %v5391 = vpow.pop %v5390
      %v5392 = vmul.f32 %v4484, 1.442695
      %v5393 = vpow.pop %v5392
      %v5394 = vmul.f32 %v4485, 1.442695
      %v5395 = vpow.pop %v5394
      %v5396 = vmul.f32 %v4486, 1.442695
      %v5397 = vpow.pop %v5396
      %v5398 = vmul.f32 %v4487, 1.442695
      %v5399 = vpow.pop %v5398
      %v5400 = vmul.f32 %v4488, 1.442695
      %v5401 = vpow.pop %v5400
      %v5402 = vmul.f32 %v4489, 1.442695
      %v5403 = vpow.pop %v5402
      %v5404 = vmul.f32 %v4490, 1.442695
      %v5405 = vpow.pop %v5404
      %v5406 = vmul.f32 %v4491, 1.442695
      %v5407 = vpow.pop %v5406
      %v5408 = vmul.f32 %v4492, 1.442695
      %v5409 = vpow.pop %v5408
      %v5410 = vmul.f32 %v4493, 1.442695
      %v5411 = vpow.pop %v5410
      %v5412 = vmul.f32 %v4494, 1.442695
      %v5413 = vpow.pop %v5412
      %v5414 = vmul.f32 %v4495, 1.442695
      %v5415 = vpow.pop %v5414
      %v5416 = vmul.f32 %v4496, 1.442695
      %v5417 = vpow.pop %v5416
      %v5418 = vmul.f32 %v4497, 1.442695
      %v5419 = vpow.pop %v5418
      %v5420 = vmul.f32 %v4498, 1.442695
      %v5421 = vpow.pop %v5420
      %v5422 = vmul.f32 %v4499, 1.442695
      %v5423 = vpow.pop %v5422
      %v5424 = vmul.f32 %v4500, 1.442695
      %v5425 = vpow.pop %v5424
      %v5426 = vmul.f32 %v4501, 1.442695
      %v5427 = vpow.pop %v5426
      %v5428 = vmul.f32 %v4502, 1.442695
      %v5429 = vpow.pop %v5428
      %v5430 = vmul.f32 %v4503, 1.442695
      %v5431 = vpow.pop %v5430
      %v5432 = vmul.f32 %v4504, 1.442695
      %v5433 = vpow.pop %v5432
      %v5434 = vmul.f32 %v4505, 1.442695
      %v5435 = vpow.pop %v5434
      %v5436 = vmul.f32 %v4506, 1.442695
      %v5437 = vpow.pop %v5436
      %v5438 = vmul.f32 %v4507, 1.442695
      %v5439 = vpow.pop %v5438
      %v5440 = vmul.f32 %v4508, 1.442695
      %v5441 = vpow.pop %v5440
      %v5442 = vmul.f32 %v4509, 1.442695
      %v5443 = vpow.pop %v5442
      %v5444 = vmul.f32 %v4510, 1.442695
      %v5445 = vpow.pop %v5444
      %v5446 = vmul.f32 %v4511, 1.442695
      %v5447 = vpow.pop %v5446
      %v5448 = vmul.f32 %v4512, 1.442695
      %v5449 = vpow.pop %v5448
      %v5450 = vmul.f32 %v4513, 1.442695
      %v5451 = vpow.pop %v5450
      %v5452 = vmul.f32 %v4514, 1.442695
      %v5453 = vpow.pop %v5452
      %v5454 = vmul.f32 %v4515, 1.442695
      %v5455 = vpow.pop %v5454
      %v5456 = vmul.f32 %v4516, 1.442695
      %v5457 = vpow.pop %v5456
      %v5458 = vmul.f32 %v4517, 1.442695
      %v5459 = vpow.pop %v5458
      %v5460 = vmul.f32 %v4518, 1.442695
      %v5461 = vpow.pop %v5460
      %v5462 = vmul.f32 %v4519, 1.442695
      %v5463 = vpow.pop %v5462
      %v5464 = vmul.f32 %v4520, 1.442695
      %v5465 = vpow.pop %v5464
      %v5466 = vmul.f32 %v4521, 1.442695
      %v5467 = vpow.pop %v5466
      %v5468 = vmul.f32 %v4522, 1.442695
      %v5469 = vpow.pop %v5468
      %v5470 = vmul.f32 %v4523, 1.442695
      %v5471 = vpow.pop %v5470
      %v5472 = vmul.f32 %v4524, 1.442695
      %v5473 = vpow.pop %v5472
      %v5474 = vmul.f32 %v4525, 1.442695
      %v5475 = vpow.pop %v5474
      %v5476 = vmul.f32 %v4526, 1.442695
      %v5477 = vpow.pop %v5476
      %v5478 = vmul.f32 %v4527, 1.442695
      %v5479 = vpow.pop %v5478
      %v5480 = vmul.f32 %v4528, 1.442695
      %v5481 = vpow.pop %v5480
      %v5482 = vmul.f32 %v4529, 1.442695
      %v5483 = vpow.pop %v5482
      %v5484 = vmul.f32 %v4530, 1.442695
      %v5485 = vpow.pop %v5484
      %v5486 = vmul.f32 %v4531, 1.442695
      %v5487 = vpow.pop %v5486
      %v5488 = vmul.f32 %v4532, 1.442695
      %v5489 = vpow.pop %v5488
      %v5490 = vmul.f32 %v4533, 1.442695
      %v5491 = vpow.pop %v5490
      %v5492 = vmul.f32 %v4534, 1.442695
      %v5493 = vpow.pop %v5492
      %v5494 = vmul.f32 %v4535, 1.442695
      %v5495 = vpow.pop %v5494
      %v5496 = vmul.f32 %v4536, 1.442695
      %v5497 = vpow.pop %v5496
      %v5498 = vmul.f32 %v4537, 1.442695
      %v5499 = vpow.pop %v5498
      %v5500 = vmul.f32 %v4538, 1.442695
      %v5501 = vpow.pop %v5500
      %v5502 = vmul.f32 %v4539, 1.442695
      %v5503 = vpow.pop %v5502
      %v5504 = vmul.f32 %v4540, 1.442695
      %v5505 = vpow.pop %v5504
      %v5506 = vmul.f32 %v4541, 1.442695
      %v5507 = vpow.pop %v5506
      %v5508 = vmul.f32 %v4542, 1.442695
      %v5509 = vpow.pop %v5508
      %v5510 = vmul.f32 %v4543, 1.442695
      %v5511 = vpow.pop %v5510
      %v5512 = vmul.f32 %v4544, 1.442695
      %v5513 = vpow.pop %v5512
      %v5514 = vmul.f32 %v4545, 1.442695
      %v5515 = vpow.pop %v5514
      %v5516 = vmul.f32 %v4546, 1.442695
      %v5517 = vpow.pop %v5516
      %v5518 = vmul.f32 %v4547, 1.442695
      %v5519 = vpow.pop %v5518
      %v5520 = vmul.f32 %v4548, 1.442695
      %v5521 = vpow.pop %v5520
      %v5522 = vmul.f32 %v4549, 1.442695
      %v5523 = vpow.pop %v5522
      %v5524 = vmul.f32 %v4550, 1.442695
      %v5525 = vpow.pop %v5524
      %v5526 = vmul.f32 %v4551, 1.442695
      %v5527 = vpow.pop %v5526
      %v5528 = vmul.f32 %v4552, 1.442695
      %v5529 = vpow.pop %v5528
      %v5530 = vmul.f32 %v4553, 1.442695
      %v5531 = vpow.pop %v5530
      %v5532 = vmul.f32 %v4554, 1.442695
      %v5533 = vpow.pop %v5532
      %v5534 = vmul.f32 %v4555, 1.442695
      %v5535 = vpow.pop %v5534
      %v5536 = vmul.f32 %v4556, 1.442695
      %v5537 = vpow.pop %v5536
      %v5538 = vmul.f32 %v4557, 1.442695
      %v5539 = vpow.pop %v5538
      %v5540 = vmul.f32 %v4558, 1.442695
      %v5541 = vpow.pop %v5540
      %v5542 = vmul.f32 %v4559, 1.442695
      %v5543 = vpow.pop %v5542
      %v5544 = vmul.f32 %v4560, 1.442695
      %v5545 = vpow.pop %v5544
      %v5546 = vmul.f32 %v4561, 1.442695
      %v5547 = vpow.pop %v5546
      %v5548 = vmul.f32 %v4562, 1.442695
      %v5549 = vpow.pop %v5548
      %v5550 = vmul.f32 %v4563, 1.442695
      %v5551 = vpow.pop %v5550
      %v5552 = vmul.f32 %v4564, 1.442695
      %v5553 = vpow.pop %v5552
      %v5554 = vmul.f32 %v4565, 1.442695
      %v5555 = vpow.pop %v5554
      %v5556 = vmul.f32 %v4566, 1.442695
      %v5557 = vpow.pop %v5556
      %v5558 = vmul.f32 %v4567, 1.442695
      %v5559 = vpow.pop %v5558
      %v5560 = vmul.f32 %v4568, 1.442695
      %v5561 = vpow.pop %v5560
      %v5562 = vmul.f32 %v4569, 1.442695
      %v5563 = vpow.pop %v5562
      %v5564 = vmul.f32 %v4570, 1.442695
      %v5565 = vpow.pop %v5564
      %v5566 = vmul.f32 %v4571, 1.442695
      %v5567 = vpow.pop %v5566
      %v5568 = vmul.f32 %v4572, 1.442695
      %v5569 = vpow.pop %v5568
      %v5570 = vmul.f32 %v4573, 1.442695
      %v5571 = vpow.pop %v5570
      %v5572 = vmul.f32 %v4574, 1.442695
      %v5573 = vpow.pop %v5572
      %v5574 = vmul.f32 %v4575, 1.442695
      %v5575 = vpow.pop %v5574
      %v5576 = vmul.f32 %v4576, 1.442695
      %v5577 = vpow.pop %v5576
      %v5578 = vmul.f32 %v4577, 1.442695
      %v5579 = vpow.pop %v5578
      %v5580 = vmul.f32 %v4578, 1.442695
      %v5581 = vpow.pop %v5580
      %v5582 = vmul.f32 %v4579, 1.442695
      %v5583 = vpow.pop %v5582
      %v5584 = vmul.f32 %v4580, 1.442695
      %v5585 = vpow.pop %v5584
      %v5586 = vmul.f32 %v4581, 1.442695
      %v5587 = vpow.pop %v5586
      %v5588 = vmul.f32 %v4582, 1.442695
      %v5589 = vpow.pop %v5588
      %v5590 = vmul.f32 %v4583, 1.442695
      %v5591 = vpow.pop %v5590
      %v5592 = vmul.f32 %v4584, 1.442695
      %v5593 = vpow.pop %v5592
      %v5594 = vmul.f32 %v4585, 1.442695
      %v5595 = vpow.pop %v5594
      %v5596 = vmul.f32 %v4586, 1.442695
      %v5597 = vpow.pop %v5596
      %v5598 = vmul.f32 %v4587, 1.442695
      %v5599 = vpow.pop %v5598
      %v5600 = vmul.f32 %v4588, 1.442695
      %v5601 = vpow.pop %v5600
      %v5602 = vmul.f32 %v4589, 1.442695
      %v5603 = vpow.pop %v5602
      %v5604 = vmul.f32 %v4590, 1.442695
      %v5605 = vpow.pop %v5604
      %v5606 = vmul.f32 %v4591, 1.442695
      %v5607 = vpow.pop %v5606
      %v5608 = vmul.f32 %v4592, 1.442695
      %v5609 = vpow.pop %v5608
      %v5610 = vmul.f32 %v4593, 1.442695
      %v5611 = vpow.pop %v5610
      %v5612 = vmul.f32 %v4594, 1.442695
      %v5613 = vpow.pop %v5612
      %v5614 = vmul.f32 %v4595, 1.442695
      %v5615 = vpow.pop %v5614
      %v5616 = vmul.f32 %v4596, 1.442695
      %v5617 = vpow.pop %v5616
      %v5618 = vmul.f32 %v4597, 1.442695
      %v5619 = vpow.pop %v5618
      %v5620 = vmul.f32 %v4598, 1.442695
      %v5621 = vpow.pop %v5620
      %v5622 = vmul.f32 %v4599, 1.442695
      %v5623 = vpow.pop %v5622
      %v5624 = vpack.c.bf16 %v4633, %v4601
      %v5625 = vpack.c.bf16 %v4635, %v4603
      %v5626 = vpack.c.bf16 %v4637, %v4605
      %v5627 = vpack.c.bf16 %v4639, %v4607
      %v5628 = vpack.c.bf16 %v4641, %v4609
      %v5629 = vpack.c.bf16 %v4643, %v4611
      %v5630 = vpack.c.bf16 %v4645, %v4613
      %v5631 = vpack.c.bf16 %v4647, %v4615
      %v5632 = vpack.c.bf16 %v4649, %v4617
      %v5633 = vpack.c.bf16 %v4651, %v4619
      %v5634 = vpack.c.bf16 %v4653, %v4621
      %v5635 = vpack.c.bf16 %v4655, %v4623
      %v5636 = vpack.c.bf16 %v4657, %v4625
      %v5637 = vpack.c.bf16 %v4659, %v4627
      %v5638 = vpack.c.bf16 %v4661, %v4629
      %v5639 = vpack.c.bf16 %v4663, %v4631
      %v5640 = vpack.c.bf16 %v4697, %v4665
      %v5641 = vpack.c.bf16 %v4699, %v4667
      %v5642 = vpack.c.bf16 %v4701, %v4669
      %v5643 = vpack.c.bf16 %v4703, %v4671
      %v5644 = vpack.c.bf16 %v4705, %v4673
      %v5645 = vpack.c.bf16 %v4707, %v4675
      %v5646 = vpack.c.bf16 %v4709, %v4677
      %v5647 = vpack.c.bf16 %v4711, %v4679
      %v5648 = vpack.c.bf16 %v4713, %v4681
      %v5649 = vpack.c.bf16 %v4715, %v4683
      %v5650 = vpack.c.bf16 %v4717, %v4685
      %v5651 = vpack.c.bf16 %v4719, %v4687
      %v5652 = vpack.c.bf16 %v4721, %v4689
      %v5653 = vpack.c.bf16 %v4723, %v4691
      %v5654 = vpack.c.bf16 %v4725, %v4693
      %v5655 = vpack.c.bf16 %v4727, %v4695
      %v5656 = vpack.c.bf16 %v4761, %v4729
      %v5657 = vpack.c.bf16 %v4763, %v4731
      %v5658 = vpack.c.bf16 %v4765, %v4733
      %v5659 = vpack.c.bf16 %v4767, %v4735
      %v5660 = vpack.c.bf16 %v4769, %v4737
      %v5661 = vpack.c.bf16 %v4771, %v4739
      %v5662 = vpack.c.bf16 %v4773, %v4741
      %v5663 = vpack.c.bf16 %v4775, %v4743
      %v5664 = vpack.c.bf16 %v4777, %v4745
      %v5665 = vpack.c.bf16 %v4779, %v4747
      %v5666 = vpack.c.bf16 %v4781, %v4749
      %v5667 = vpack.c.bf16 %v4783, %v4751
      %v5668 = vpack.c.bf16 %v4785, %v4753
      %v5669 = vpack.c.bf16 %v4787, %v4755
      %v5670 = vpack.c.bf16 %v4789, %v4757
      %v5671 = vpack.c.bf16 %v4791, %v4759
      %v5672 = vpack.c.bf16 %v4825, %v4793
      %v5673 = vpack.c.bf16 %v4827, %v4795
      %v5674 = vpack.c.bf16 %v4829, %v4797
      %v5675 = vpack.c.bf16 %v4831, %v4799
      %v5676 = vpack.c.bf16 %v4833, %v4801
      %v5677 = vpack.c.bf16 %v4835, %v4803
      %v5678 = vpack.c.bf16 %v4837, %v4805
      %v5679 = vpack.c.bf16 %v4839, %v4807
      %v5680 = vpack.c.bf16 %v4841, %v4809
      %v5681 = vpack.c.bf16 %v4843, %v4811
      %v5682 = vpack.c.bf16 %v4845, %v4813
      %v5683 = vpack.c.bf16 %v4847, %v4815
      %v5684 = vpack.c.bf16 %v4849, %v4817
      %v5685 = vpack.c.bf16 %v4851, %v4819
      %v5686 = vpack.c.bf16 %v4853, %v4821
      %v5687 = vpack.c.bf16 %v4855, %v4823
      %v5688 = vpack.c.bf16 %v4889, %v4857
      %v5689 = vpack.c.bf16 %v4891, %v4859
      %v5690 = vpack.c.bf16 %v4893, %v4861
      %v5691 = vpack.c.bf16 %v4895, %v4863
      %v5692 = vpack.c.bf16 %v4897, %v4865
      %v5693 = vpack.c.bf16 %v4899, %v4867
      %v5694 = vpack.c.bf16 %v4901, %v4869
      %v5695 = vpack.c.bf16 %v4903, %v4871
      %v5696 = vpack.c.bf16 %v4905, %v4873
      %v5697 = vpack.c.bf16 %v4907, %v4875
      %v5698 = vpack.c.bf16 %v4909, %v4877
      %v5699 = vpack.c.bf16 %v4911, %v4879
      %v5700 = vpack.c.bf16 %v4913, %v4881
      %v5701 = vpack.c.bf16 %v4915, %v4883
      %v5702 = vpack.c.bf16 %v4917, %v4885
      %v5703 = vpack.c.bf16 %v4919, %v4887
      %v5704 = vpack.c.bf16 %v4953, %v4921
      %v5705 = vpack.c.bf16 %v4955, %v4923
      %v5706 = vpack.c.bf16 %v4957, %v4925
      %v5707 = vpack.c.bf16 %v4959, %v4927
      %v5708 = vpack.c.bf16 %v4961, %v4929
      %v5709 = vpack.c.bf16 %v4963, %v4931
      %v5710 = vpack.c.bf16 %v4965, %v4933
      %v5711 = vpack.c.bf16 %v4967, %v4935
      %v5712 = vpack.c.bf16 %v4969, %v4937
      %v5713 = vpack.c.bf16 %v4971, %v4939
      %v5714 = vpack.c.bf16 %v4973, %v4941
      %v5715 = vpack.c.bf16 %v4975, %v4943
      %v5716 = vpack.c.bf16 %v4977, %v4945
      %v5717 = vpack.c.bf16 %v4979, %v4947
      %v5718 = vpack.c.bf16 %v4981, %v4949
      %v5719 = vpack.c.bf16 %v4983, %v4951
      %v5720 = vpack.c.bf16 %v5017, %v4985
      %v5721 = vpack.c.bf16 %v5019, %v4987
      %v5722 = vpack.c.bf16 %v5021, %v4989
      %v5723 = vpack.c.bf16 %v5023, %v4991
      %v5724 = vpack.c.bf16 %v5025, %v4993
      %v5725 = vpack.c.bf16 %v5027, %v4995
      %v5726 = vpack.c.bf16 %v5029, %v4997
      %v5727 = vpack.c.bf16 %v5031, %v4999
      %v5728 = vpack.c.bf16 %v5033, %v5001
      %v5729 = vpack.c.bf16 %v5035, %v5003
      %v5730 = vpack.c.bf16 %v5037, %v5005
      %v5731 = vpack.c.bf16 %v5039, %v5007
      %v5732 = vpack.c.bf16 %v5041, %v5009
      %v5733 = vpack.c.bf16 %v5043, %v5011
      %v5734 = vpack.c.bf16 %v5045, %v5013
      %v5735 = vpack.c.bf16 %v5047, %v5015
      %v5736 = vpack.c.bf16 %v5081, %v5049
      %v5737 = vpack.c.bf16 %v5083, %v5051
      %v5738 = vpack.c.bf16 %v5085, %v5053
      %v5739 = vpack.c.bf16 %v5087, %v5055
      %v5740 = vpack.c.bf16 %v5089, %v5057
      %v5741 = vpack.c.bf16 %v5091, %v5059
      %v5742 = vpack.c.bf16 %v5093, %v5061
      %v5743 = vpack.c.bf16 %v5095, %v5063
      %v5744 = vpack.c.bf16 %v5097, %v5065
      %v5745 = vpack.c.bf16 %v5099, %v5067
      %v5746 = vpack.c.bf16 %v5101, %v5069
      %v5747 = vpack.c.bf16 %v5103, %v5071
      %v5748 = vpack.c.bf16 %v5105, %v5073
      %v5749 = vpack.c.bf16 %v5107, %v5075
      %v5750 = vpack.c.bf16 %v5109, %v5077
      %v5751 = vpack.c.bf16 %v5111, %v5079
      %v5752 = vpack.c.bf16 %v5145, %v5113
      %v5753 = vpack.c.bf16 %v5147, %v5115
      %v5754 = vpack.c.bf16 %v5149, %v5117
      %v5755 = vpack.c.bf16 %v5151, %v5119
      %v5756 = vpack.c.bf16 %v5153, %v5121
      %v5757 = vpack.c.bf16 %v5155, %v5123
      %v5758 = vpack.c.bf16 %v5157, %v5125
      %v5759 = vpack.c.bf16 %v5159, %v5127
      %v5760 = vpack.c.bf16 %v5161, %v5129
      %v5761 = vpack.c.bf16 %v5163, %v5131
      %v5762 = vpack.c.bf16 %v5165, %v5133
      %v5763 = vpack.c.bf16 %v5167, %v5135
      %v5764 = vpack.c.bf16 %v5169, %v5137
      %v5765 = vpack.c.bf16 %v5171, %v5139
      %v5766 = vpack.c.bf16 %v5173, %v5141
      %v5767 = vpack.c.bf16 %v5175, %v5143
      %v5768 = vpack.c.bf16 %v5209, %v5177
      %v5769 = vpack.c.bf16 %v5211, %v5179
      %v5770 = vpack.c.bf16 %v5213, %v5181
      %v5771 = vpack.c.bf16 %v5215, %v5183
      %v5772 = vpack.c.bf16 %v5217, %v5185
      %v5773 = vpack.c.bf16 %v5219, %v5187
      %v5774 = vpack.c.bf16 %v5221, %v5189
      %v5775 = vpack.c.bf16 %v5223, %v5191
      %v5776 = vpack.c.bf16 %v5225, %v5193
      %v5777 = vpack.c.bf16 %v5227, %v5195
      %v5778 = vpack.c.bf16 %v5229, %v5197
      %v5779 = vpack.c.bf16 %v5231, %v5199
      %v5780 = vpack.c.bf16 %v5233, %v5201
      %v5781 = vpack.c.bf16 %v5235, %v5203
      %v5782 = vpack.c.bf16 %v5237, %v5205
      %v5783 = vpack.c.bf16 %v5239, %v5207
      %v5784 = vpack.c.bf16 %v5273, %v5241
      %v5785 = vpack.c.bf16 %v5275, %v5243
      %v5786 = vpack.c.bf16 %v5277, %v5245
      %v5787 = vpack.c.bf16 %v5279, %v5247
      %v5788 = vpack.c.bf16 %v5281, %v5249
      %v5789 = vpack.c.bf16 %v5283, %v5251
      %v5790 = vpack.c.bf16 %v5285, %v5253
      %v5791 = vpack.c.bf16 %v5287, %v5255
      %v5792 = vpack.c.bf16 %v5289, %v5257
      %v5793 = vpack.c.bf16 %v5291, %v5259
      %v5794 = vpack.c.bf16 %v5293, %v5261
      %v5795 = vpack.c.bf16 %v5295, %v5263
      %v5796 = vpack.c.bf16 %v5297, %v5265
      %v5797 = vpack.c.bf16 %v5299, %v5267
      %v5798 = vpack.c.bf16 %v5301, %v5269
      %v5799 = vpack.c.bf16 %v5303, %v5271
      %v5800 = vpack.c.bf16 %v5337, %v5305
      %v5801 = vpack.c.bf16 %v5339, %v5307
      %v5802 = vpack.c.bf16 %v5341, %v5309
      %v5803 = vpack.c.bf16 %v5343, %v5311
      %v5804 = vpack.c.bf16 %v5345, %v5313
      %v5805 = vpack.c.bf16 %v5347, %v5315
      %v5806 = vpack.c.bf16 %v5349, %v5317
      %v5807 = vpack.c.bf16 %v5351, %v5319
      %v5808 = vpack.c.bf16 %v5353, %v5321
      %v5809 = vpack.c.bf16 %v5355, %v5323
      %v5810 = vpack.c.bf16 %v5357, %v5325
      %v5811 = vpack.c.bf16 %v5359, %v5327
      %v5812 = vpack.c.bf16 %v5361, %v5329
      %v5813 = vpack.c.bf16 %v5363, %v5331
      %v5814 = vpack.c.bf16 %v5365, %v5333
      %v5815 = vpack.c.bf16 %v5367, %v5335
      %v5816 = vpack.c.bf16 %v5401, %v5369
      %v5817 = vpack.c.bf16 %v5403, %v5371
      %v5818 = vpack.c.bf16 %v5405, %v5373
      %v5819 = vpack.c.bf16 %v5407, %v5375
      %v5820 = vpack.c.bf16 %v5409, %v5377
      %v5821 = vpack.c.bf16 %v5411, %v5379
      %v5822 = vpack.c.bf16 %v5413, %v5381
      %v5823 = vpack.c.bf16 %v5415, %v5383
      %v5824 = vpack.c.bf16 %v5417, %v5385
      %v5825 = vpack.c.bf16 %v5419, %v5387
      %v5826 = vpack.c.bf16 %v5421, %v5389
      %v5827 = vpack.c.bf16 %v5423, %v5391
      %v5828 = vpack.c.bf16 %v5425, %v5393
      %v5829 = vpack.c.bf16 %v5427, %v5395
      %v5830 = vpack.c.bf16 %v5429, %v5397
      %v5831 = vpack.c.bf16 %v5431, %v5399
      %v5832 = vpack.c.bf16 %v5465, %v5433
      %v5833 = vpack.c.bf16 %v5467, %v5435
      %v5834 = vpack.c.bf16 %v5469, %v5437
      %v5835 = vpack.c.bf16 %v5471, %v5439
      %v5836 = vpack.c.bf16 %v5473, %v5441
      %v5837 = vpack.c.bf16 %v5475, %v5443
      %v5838 = vpack.c.bf16 %v5477, %v5445
      %v5839 = vpack.c.bf16 %v5479, %v5447
      %v5840 = vpack.c.bf16 %v5481, %v5449
      %v5841 = vpack.c.bf16 %v5483, %v5451
      %v5842 = vpack.c.bf16 %v5485, %v5453
      %v5843 = vpack.c.bf16 %v5487, %v5455
      %v5844 = vpack.c.bf16 %v5489, %v5457
      %v5845 = vpack.c.bf16 %v5491, %v5459
      %v5846 = vpack.c.bf16 %v5493, %v5461
      %v5847 = vpack.c.bf16 %v5495, %v5463
      %v5848 = vpack.c.bf16 %v5529, %v5497
      %v5849 = vpack.c.bf16 %v5531, %v5499
      %v5850 = vpack.c.bf16 %v5533, %v5501
      %v5851 = vpack.c.bf16 %v5535, %v5503
      %v5852 = vpack.c.bf16 %v5537, %v5505
      %v5853 = vpack.c.bf16 %v5539, %v5507
      %v5854 = vpack.c.bf16 %v5541, %v5509
      %v5855 = vpack.c.bf16 %v5543, %v5511
      %v5856 = vpack.c.bf16 %v5545, %v5513
      %v5857 = vpack.c.bf16 %v5547, %v5515
      %v5858 = vpack.c.bf16 %v5549, %v5517
      %v5859 = vpack.c.bf16 %v5551, %v5519
      %v5860 = vpack.c.bf16 %v5553, %v5521
      %v5861 = vpack.c.bf16 %v5555, %v5523
      %v5862 = vpack.c.bf16 %v5557, %v5525
      %v5863 = vpack.c.bf16 %v5559, %v5527
      %v5864 = vpack.c.bf16 %v5593, %v5561
      %v5865 = vpack.c.bf16 %v5595, %v5563
      %v5866 = vpack.c.bf16 %v5597, %v5565
      %v5867 = vpack.c.bf16 %v5599, %v5567
      %v5868 = vpack.c.bf16 %v5601, %v5569
      %v5869 = vpack.c.bf16 %v5603, %v5571
      %v5870 = vpack.c.bf16 %v5605, %v5573
      %v5871 = vpack.c.bf16 %v5607, %v5575
      %v5872 = vpack.c.bf16 %v5609, %v5577
      %v5873 = vpack.c.bf16 %v5611, %v5579
      %v5874 = vpack.c.bf16 %v5613, %v5581
      %v5875 = vpack.c.bf16 %v5615, %v5583
      %v5876 = vpack.c.bf16 %v5617, %v5585
      %v5877 = vpack.c.bf16 %v5619, %v5587
      %v5878 = vpack.c.bf16 %v5621, %v5589
      %v5879 = vpack.c.bf16 %v5623, %v5591
      %v5880 = vld [vmem:[%s232] sm:$0xff]
      %v5881 = vld [vmem:[%s232 + $0x8] sm:$0xff]
      %v5882 = vld [vmem:[%s232 + $0x10] sm:$0xff]
      %v5883 = vld [vmem:[%s232 + $0x18] sm:$0xff]
      %v5884 = vld [vmem:[%s232 + $0x20] sm:$0xff]
      %v5885 = vld [vmem:[%s232 + $0x28] sm:$0xff]
      %v5886 = vld [vmem:[%s232 + $0x30] sm:$0xff]
      %v5887 = vld [vmem:[%s232 + $0x38] sm:$0xff]
      %v5888 = vld [vmem:[%s232 + $0x40] sm:$0x11]
      %v5889 = vld [vmem:[%s232 + $0x48] sm:$0x11]
      %v5890 = vld [vmem:[%s232 + $0x50] sm:$0x11]
      %v5891 = vld [vmem:[%s232 + $0x58] sm:$0x11]
      %v5892 = vld [vmem:[%s232 + $0x60] sm:$0x11]
      %v5893 = vld [vmem:[%s232 + $0x68] sm:$0x11]
      %v5894 = vld [vmem:[%s232 + $0x70] sm:$0x11]
      %v5895 = vld [vmem:[%s232 + $0x78] sm:$0x11]
      %v5912 = vunpack.c.l.b16 %v5880
      %v5913 = vunpack.c.h.b16 %v5880
      %v5914 = vunpack.c.l.b16 %v5881
      %v5915 = vunpack.c.h.b16 %v5881
      %v5916 = vunpack.c.l.b16 %v5882
      %v5917 = vunpack.c.h.b16 %v5882
      %v5918 = vunpack.c.l.b16 %v5883
      %v5919 = vunpack.c.h.b16 %v5883
      %v5920 = vunpack.c.l.b16 %v5884
      %v5921 = vunpack.c.h.b16 %v5884
      %v5922 = vunpack.c.l.b16 %v5885
      %v5923 = vunpack.c.h.b16 %v5885
      %v5924 = vunpack.c.l.b16 %v5886
      %v5925 = vunpack.c.h.b16 %v5886
      %v5926 = vunpack.c.l.b16 %v5887
      %v5927 = vunpack.c.h.b16 %v5887
      %v5928 = vunpack.c.l.b16 %v5888
      %v5929 = vunpack.c.h.b16 %v5888
      %v5930 = vunpack.c.l.b16 %v5889
      %v5931 = vunpack.c.h.b16 %v5889
      %v5932 = vunpack.c.l.b16 %v5890
      %v5933 = vunpack.c.h.b16 %v5890
      %v5934 = vunpack.c.l.b16 %v5891
      %v5935 = vunpack.c.h.b16 %v5891
      %v5936 = vunpack.c.l.b16 %v5892
      %v5937 = vunpack.c.h.b16 %v5892
      %v5938 = vunpack.c.l.b16 %v5893
      %v5939 = vunpack.c.h.b16 %v5893
      %v5940 = vunpack.c.l.b16 %v5894
      %v5941 = vunpack.c.h.b16 %v5894
      %v5942 = vunpack.c.l.b16 %v5895
      %v5943 = vunpack.c.h.b16 %v5895
      %v5944 = vpack.c.b16 %v5928, %v5912
      %v5945 = vpack.c.b16 %v5929, %v5913
      %v5946 = vpack.c.b16 %v5930, %v5914
      %v5947 = vpack.c.b16 %v5931, %v5915
      %v5948 = vpack.c.b16 %v5932, %v5916
      %v5949 = vpack.c.b16 %v5933, %v5917
      %v5950 = vpack.c.b16 %v5934, %v5918
      %v5951 = vpack.c.b16 %v5935, %v5919
      %v5952 = vpack.c.b16 %v5936, %v5920
      %v5953 = vpack.c.b16 %v5937, %v5921
      %v5954 = vpack.c.b16 %v5938, %v5922
      %v5955 = vpack.c.b16 %v5939, %v5923
      %v5956 = vpack.c.b16 %v5940, %v5924
      %v5957 = vpack.c.b16 %v5941, %v5925
      %v5958 = vpack.c.b16 %v5942, %v5926
      %v5959 = vpack.c.b16 %v5943, %v5927
      %5976 = vmatprep.subr.bf16.mxu0 %v5625
      %5977 = vmatpush1.bf16.xpose.msra.mxu0 %v5624
      %5978 = vmatprep.subr.bf16.mxu0 %v5641
      %5979 = vmatpush1.bf16.xpose.msra.mxu0 %v5640
      %5980 = vmatprep.subr.bf16.mxu0 %v5657
      %5981 = vmatpush1.bf16.xpose.msra.mxu0 %v5656
      %5982 = vmatprep.subr.bf16.mxu0 %v5673
      %5983 = vmatpush1.bf16.xpose.msra.mxu0 %v5672
      %5984 = vmatprep.subr.bf16.mxu0 %v5689
      %5985 = vmatpush1.bf16.xpose.msra.mxu0 %v5688
      %5986 = vmatprep.subr.bf16.mxu0 %v5705
      %5987 = vmatpush1.bf16.xpose.msra.mxu0 %v5704
      %5988 = vmatprep.subr.bf16.mxu0 %v5721
      %5989 = vmatpush1.bf16.xpose.msra.mxu0 %v5720
      %5990 = vmatprep.subr.bf16.mxu0 %v5737
      %5991 = vmatpush1.bf16.xpose.msra.mxu0 %v5736
      %5992 = vmatprep.subr.bf16.mxu0 %v5753
      %5993 = vmatpush1.bf16.xpose.msra.mxu0 %v5752
      %5994 = vmatprep.subr.bf16.mxu0 %v5769
      %5995 = vmatpush1.bf16.xpose.msra.mxu0 %v5768
      %5996 = vmatprep.subr.bf16.mxu0 %v5785
      %5997 = vmatpush1.bf16.xpose.msra.mxu0 %v5784
      %5998 = vmatprep.subr.bf16.mxu0 %v5801
      %5999 = vmatpush1.bf16.xpose.msra.mxu0 %v5800
      %6000 = vmatprep.subr.bf16.mxu0 %v5817
      %6001 = vmatpush1.bf16.xpose.msra.mxu0 %v5816
      %6002 = vmatprep.subr.bf16.mxu0 %v5833
      %6003 = vmatpush1.bf16.xpose.msra.mxu0 %v5832
      %6004 = vmatprep.subr.bf16.mxu0 %v5849
      %6005 = vmatpush1.bf16.xpose.msra.mxu0 %v5848
      %6006 = vmatprep.subr.bf16.mxu0 %v5865
      %6007 = vmatpush1.bf16.xpose.msra.mxu0 %v5864
      %6008 = vmatprep.mubr.bf16.mxu0 %v5945
      %6009 = vmatmul.mubr.bf16.gmra.mrb[0].mxu0 %v5944
      %v6010 = vpop.f32.mrb[0].mxu0
      %v6011 = vadd.f32 0.0, %v6010
      %v6012 = vpop.f32.mrb[0].mxu0
      %v6013 = vadd.f32 0.0, %v6012
      %v6014 = vpop.f32.mrb[0].mxu0
      %v6015 = vadd.f32 0.0, %v6014
      %v6016 = vpop.f32.mrb[0].mxu0
      %v6017 = vadd.f32 0.0, %v6016
      %6018 = vdwg.mxu0
      %6019 = vmatprep.subr.bf16.mxu0 %v5627
      %6020 = vmatpush1.bf16.xpose.msra.mxu0 %v5626
      %6021 = vmatprep.subr.bf16.mxu0 %v5643
      %6022 = vmatpush1.bf16.xpose.msra.mxu0 %v5642
      %6023 = vmatprep.subr.bf16.mxu0 %v5659
      %6024 = vmatpush1.bf16.xpose.msra.mxu0 %v5658
      %6025 = vmatprep.subr.bf16.mxu0 %v5675
      %6026 = vmatpush1.bf16.xpose.msra.mxu0 %v5674
      %6027 = vmatprep.subr.bf16.mxu0 %v5691
      %6028 = vmatpush1.bf16.xpose.msra.mxu0 %v5690
      %6029 = vmatprep.subr.bf16.mxu0 %v5707
      %6030 = vmatpush1.bf16.xpose.msra.mxu0 %v5706
      %6031 = vmatprep.subr.bf16.mxu0 %v5723
      %6032 = vmatpush1.bf16.xpose.msra.mxu0 %v5722
      %6033 = vmatprep.subr.bf16.mxu0 %v5739
      %6034 = vmatpush1.bf16.xpose.msra.mxu0 %v5738
      %6035 = vmatprep.subr.bf16.mxu0 %v5755
      %6036 = vmatpush1.bf16.xpose.msra.mxu0 %v5754
      %6037 = vmatprep.subr.bf16.mxu0 %v5771
      %6038 = vmatpush1.bf16.xpose.msra.mxu0 %v5770
      %6039 = vmatprep.subr.bf16.mxu0 %v5787
      %6040 = vmatpush1.bf16.xpose.msra.mxu0 %v5786
      %6041 = vmatprep.subr.bf16.mxu0 %v5803
      %6042 = vmatpush1.bf16.xpose.msra.mxu0 %v5802
      %6043 = vmatprep.subr.bf16.mxu0 %v5819
      %6044 = vmatpush1.bf16.xpose.msra.mxu0 %v5818
      %6045 = vmatprep.subr.bf16.mxu0 %v5835
      %6046 = vmatpush1.bf16.xpose.msra.mxu0 %v5834
      %6047 = vmatprep.subr.bf16.mxu0 %v5851
      %6048 = vmatpush1.bf16.xpose.msra.mxu0 %v5850
      %6049 = vmatprep.subr.bf16.mxu0 %v5867
      %6050 = vmatpush1.bf16.xpose.msra.mxu0 %v5866
      %6051 = vmatprep.mubr.bf16.mxu0 %v5947
      %6052 = vmatmul.mubr.bf16.gmra.mrb[0].mxu0 %v5946
      %v6053 = vpop.f32.mrb[0].mxu0
      %v6054 = vadd.f32 %v6011, %v6053
      %v6055 = vpop.f32.mrb[0].mxu0
      %v6056 = vadd.f32 %v6013, %v6055
      %v6057 = vpop.f32.mrb[0].mxu0
      %v6058 = vadd.f32 %v6015, %v6057
      %v6059 = vpop.f32.mrb[0].mxu0
      %v6060 = vadd.f32 %v6017, %v6059
      %6061 = vdwg.mxu0
      %6062 = vmatprep.subr.bf16.mxu0 %v5629
      %6063 = vmatpush1.bf16.xpose.msra.mxu0 %v5628
      %6064 = vmatprep.subr.bf16.mxu0 %v5645
      %6065 = vmatpush1.bf16.xpose.msra.mxu0 %v5644
      %6066 = vmatprep.subr.bf16.mxu0 %v5661
      %6067 = vmatpush1.bf16.xpose.msra.mxu0 %v5660
      %6068 = vmatprep.subr.bf16.mxu0 %v5677
      %6069 = vmatpush1.bf16.xpose.msra.mxu0 %v5676
      %6070 = vmatprep.subr.bf16.mxu0 %v5693
      %6071 = vmatpush1.bf16.xpose.msra.mxu0 %v5692
      %6072 = vmatprep.subr.bf16.mxu0 %v5709
      %6073 = vmatpush1.bf16.xpose.msra.mxu0 %v5708
      %6074 = vmatprep.subr.bf16.mxu0 %v5725
      %6075 = vmatpush1.bf16.xpose.msra.mxu0 %v5724
      %6076 = vmatprep.subr.bf16.mxu0 %v5741
      %6077 = vmatpush1.bf16.xpose.msra.mxu0 %v5740
      %6078 = vmatprep.subr.bf16.mxu0 %v5757
      %6079 = vmatpush1.bf16.xpose.msra.mxu0 %v5756
      %6080 = vmatprep.subr.bf16.mxu0 %v5773
      %6081 = vmatpush1.bf16.xpose.msra.mxu0 %v5772
      %6082 = vmatprep.subr.bf16.mxu0 %v5789
      %6083 = vmatpush1.bf16.xpose.msra.mxu0 %v5788
      %6084 = vmatprep.subr.bf16.mxu0 %v5805
      %6085 = vmatpush1.bf16.xpose.msra.mxu0 %v5804
      %6086 = vmatprep.subr.bf16.mxu0 %v5821
      %6087 = vmatpush1.bf16.xpose.msra.mxu0 %v5820
      %6088 = vmatprep.subr.bf16.mxu0 %v5837
      %6089 = vmatpush1.bf16.xpose.msra.mxu0 %v5836
      %6090 = vmatprep.subr.bf16.mxu0 %v5853
      %6091 = vmatpush1.bf16.xpose.msra.mxu0 %v5852
      %6092 = vmatprep.subr.bf16.mxu0 %v5869
      %6093 = vmatpush1.bf16.xpose.msra.mxu0 %v5868
      %6094 = vmatprep.mubr.bf16.mxu0 %v5949
      %6095 = vmatmul.mubr.bf16.gmra.mrb[0].mxu0 %v5948
      %v6096 = vpop.f32.mrb[0].mxu0
      %v6097 = vadd.f32 %v6054, %v6096
      %v6098 = vpop.f32.mrb[0].mxu0
      %v6099 = vadd.f32 %v6056, %v6098
      %v6100 = vpop.f32.mrb[0].mxu0
      %v6101 = vadd.f32 %v6058, %v6100
      %v6102 = vpop.f32.mrb[0].mxu0
      %v6103 = vadd.f32 %v6060, %v6102
      %6104 = vdwg.mxu0
      %6105 = vmatprep.subr.bf16.mxu0 %v5631
      %6106 = vmatpush1.bf16.xpose.msra.mxu0 %v5630
      %6107 = vmatprep.subr.bf16.mxu0 %v5647
      %6108 = vmatpush1.bf16.xpose.msra.mxu0 %v5646
      %6109 = vmatprep.subr.bf16.mxu0 %v5663
      %6110 = vmatpush1.bf16.xpose.msra.mxu0 %v5662
      %6111 = vmatprep.subr.bf16.mxu0 %v5679
      %6112 = vmatpush1.bf16.xpose.msra.mxu0 %v5678
      %6113 = vmatprep.subr.bf16.mxu0 %v5695
      %6114 = vmatpush1.bf16.xpose.msra.mxu0 %v5694
      %6115 = vmatprep.subr.bf16.mxu0 %v5711
      %6116 = vmatpush1.bf16.xpose.msra.mxu0 %v5710
      %6117 = vmatprep.subr.bf16.mxu0 %v5727
      %6118 = vmatpush1.bf16.xpose.msra.mxu0 %v5726
      %6119 = vmatprep.subr.bf16.mxu0 %v5743
      %6120 = vmatpush1.bf16.xpose.msra.mxu0 %v5742
      %6121 = vmatprep.subr.bf16.mxu0 %v5759
      %6122 = vmatpush1.bf16.xpose.msra.mxu0 %v5758
      %6123 = vmatprep.subr.bf16.mxu0 %v5775
      %6124 = vmatpush1.bf16.xpose.msra.mxu0 %v5774
      %6125 = vmatprep.subr.bf16.mxu0 %v5791
      %6126 = vmatpush1.bf16.xpose.msra.mxu0 %v5790
      %6127 = vmatprep.subr.bf16.mxu0 %v5807
      %6128 = vmatpush1.bf16.xpose.msra.mxu0 %v5806
      %6129 = vmatprep.subr.bf16.mxu0 %v5823
      %6130 = vmatpush1.bf16.xpose.msra.mxu0 %v5822
      %6131 = vmatprep.subr.bf16.mxu0 %v5839
      %6132 = vmatpush1.bf16.xpose.msra.mxu0 %v5838
      %6133 = vmatprep.subr.bf16.mxu0 %v5855
      %6134 = vmatpush1.bf16.xpose.msra.mxu0 %v5854
      %6135 = vmatprep.subr.bf16.mxu0 %v5871
      %6136 = vmatpush1.bf16.xpose.msra.mxu0 %v5870
      %6137 = vmatprep.mubr.bf16.mxu0 %v5951
      %6138 = vmatmul.mubr.bf16.gmra.mrb[0].mxu0 %v5950
      %v6139 = vpop.f32.mrb[0].mxu0
      %v6140 = vadd.f32 %v6097, %v6139
      %v6141 = vpop.f32.mrb[0].mxu0
      %v6142 = vadd.f32 %v6099, %v6141
      %v6143 = vpop.f32.mrb[0].mxu0
      %v6144 = vadd.f32 %v6101, %v6143
      %v6145 = vpop.f32.mrb[0].mxu0
      %v6146 = vadd.f32 %v6103, %v6145
      %6147 = vdwg.mxu0
      %6148 = vmatprep.subr.bf16.mxu0 %v5633
      %6149 = vmatpush1.bf16.xpose.msra.mxu0 %v5632
      %6150 = vmatprep.subr.bf16.mxu0 %v5649
      %6151 = vmatpush1.bf16.xpose.msra.mxu0 %v5648
      %6152 = vmatprep.subr.bf16.mxu0 %v5665
      %6153 = vmatpush1.bf16.xpose.msra.mxu0 %v5664
      %6154 = vmatprep.subr.bf16.mxu0 %v5681
      %6155 = vmatpush1.bf16.xpose.msra.mxu0 %v5680
      %6156 = vmatprep.subr.bf16.mxu0 %v5697
      %6157 = vmatpush1.bf16.xpose.msra.mxu0 %v5696
      %6158 = vmatprep.subr.bf16.mxu0 %v5713
      %6159 = vmatpush1.bf16.xpose.msra.mxu0 %v5712
      %6160 = vmatprep.subr.bf16.mxu0 %v5729
      %6161 = vmatpush1.bf16.xpose.msra.mxu0 %v5728
      %6162 = vmatprep.subr.bf16.mxu0 %v5745
      %6163 = vmatpush1.bf16.xpose.msra.mxu0 %v5744
      %6164 = vmatprep.subr.bf16.mxu0 %v5761
      %6165 = vmatpush1.bf16.xpose.msra.mxu0 %v5760
      %6166 = vmatprep.subr.bf16.mxu0 %v5777
      %6167 = vmatpush1.bf16.xpose.msra.mxu0 %v5776
      %6168 = vmatprep.subr.bf16.mxu0 %v5793
      %6169 = vmatpush1.bf16.xpose.msra.mxu0 %v5792
      %6170 = vmatprep.subr.bf16.mxu0 %v5809
      %6171 = vmatpush1.bf16.xpose.msra.mxu0 %v5808
      %6172 = vmatprep.subr.bf16.mxu0 %v5825
      %6173 = vmatpush1.bf16.xpose.msra.mxu0 %v5824
      %6174 = vmatprep.subr.bf16.mxu0 %v5841
      %6175 = vmatpush1.bf16.xpose.msra.mxu0 %v5840
      %6176 = vmatprep.subr.bf16.mxu0 %v5857
      %6177 = vmatpush1.bf16.xpose.msra.mxu0 %v5856
      %6178 = vmatprep.subr.bf16.mxu0 %v5873
      %6179 = vmatpush1.bf16.xpose.msra.mxu0 %v5872
      %6180 = vmatprep.mubr.bf16.mxu0 %v5953
      %6181 = vmatmul.mubr.bf16.gmra.mrb[0].mxu0 %v5952
      %v6182 = vpop.f32.mrb[0].mxu0
      %v6183 = vadd.f32 %v6140, %v6182
      %v6184 = vpop.f32.mrb[0].mxu0
      %v6185 = vadd.f32 %v6142, %v6184
      %v6186 = vpop.f32.mrb[0].mxu0
      %v6187 = vadd.f32 %v6144, %v6186
      %v6188 = vpop.f32.mrb[0].mxu0
      %v6189 = vadd.f32 %v6146, %v6188
      %6190 = vdwg.mxu0
      %6191 = vmatprep.subr.bf16.mxu0 %v5635
      %6192 = vmatpush1.bf16.xpose.msra.mxu0 %v5634
      %6193 = vmatprep.subr.bf16.mxu0 %v5651
      %6194 = vmatpush1.bf16.xpose.msra.mxu0 %v5650
      %6195 = vmatprep.subr.bf16.mxu0 %v5667
      %6196 = vmatpush1.bf16.xpose.msra.mxu0 %v5666
      %6197 = vmatprep.subr.bf16.mxu0 %v5683
      %6198 = vmatpush1.bf16.xpose.msra.mxu0 %v5682
      %6199 = vmatprep.subr.bf16.mxu0 %v5699
      %6200 = vmatpush1.bf16.xpose.msra.mxu0 %v5698
      %6201 = vmatprep.subr.bf16.mxu0 %v5715
      %6202 = vmatpush1.bf16.xpose.msra.mxu0 %v5714
      %6203 = vmatprep.subr.bf16.mxu0 %v5731
      %6204 = vmatpush1.bf16.xpose.msra.mxu0 %v5730
      %6205 = vmatprep.subr.bf16.mxu0 %v5747
      %6206 = vmatpush1.bf16.xpose.msra.mxu0 %v5746
      %6207 = vmatprep.subr.bf16.mxu0 %v5763
      %6208 = vmatpush1.bf16.xpose.msra.mxu0 %v5762
      %6209 = vmatprep.subr.bf16.mxu0 %v5779
      %6210 = vmatpush1.bf16.xpose.msra.mxu0 %v5778
      %6211 = vmatprep.subr.bf16.mxu0 %v5795
      %6212 = vmatpush1.bf16.xpose.msra.mxu0 %v5794
      %6213 = vmatprep.subr.bf16.mxu0 %v5811
      %6214 = vmatpush1.bf16.xpose.msra.mxu0 %v5810
      %6215 = vmatprep.subr.bf16.mxu0 %v5827
      %6216 = vmatpush1.bf16.xpose.msra.mxu0 %v5826
      %6217 = vmatprep.subr.bf16.mxu0 %v5843
      %6218 = vmatpush1.bf16.xpose.msra.mxu0 %v5842
      %6219 = vmatprep.subr.bf16.mxu0 %v5859
      %6220 = vmatpush1.bf16.xpose.msra.mxu0 %v5858
      %6221 = vmatprep.subr.bf16.mxu0 %v5875
      %6222 = vmatpush1.bf16.xpose.msra.mxu0 %v5874
      %6223 = vmatprep.mubr.bf16.mxu0 %v5955
      %6224 = vmatmul.mubr.bf16.gmra.mrb[0].mxu0 %v5954
      %v6225 = vpop.f32.mrb[0].mxu0
      %v6226 = vadd.f32 %v6183, %v6225
      %v6227 = vpop.f32.mrb[0].mxu0
      %v6228 = vadd.f32 %v6185, %v6227
      %v6229 = vpop.f32.mrb[0].mxu0
      %v6230 = vadd.f32 %v6187, %v6229
      %v6231 = vpop.f32.mrb[0].mxu0
      %v6232 = vadd.f32 %v6189, %v6231
      %6233 = vdwg.mxu0
      %6234 = vmatprep.subr.bf16.mxu0 %v5637
      %6235 = vmatpush1.bf16.xpose.msra.mxu0 %v5636
      %6236 = vmatprep.subr.bf16.mxu0 %v5653
      %6237 = vmatpush1.bf16.xpose.msra.mxu0 %v5652
      %6238 = vmatprep.subr.bf16.mxu0 %v5669
      %6239 = vmatpush1.bf16.xpose.msra.mxu0 %v5668
      %6240 = vmatprep.subr.bf16.mxu0 %v5685
      %6241 = vmatpush1.bf16.xpose.msra.mxu0 %v5684
      %6242 = vmatprep.subr.bf16.mxu0 %v5701
      %6243 = vmatpush1.bf16.xpose.msra.mxu0 %v5700
      %6244 = vmatprep.subr.bf16.mxu0 %v5717
      %6245 = vmatpush1.bf16.xpose.msra.mxu0 %v5716
      %6246 = vmatprep.subr.bf16.mxu0 %v5733
      %6247 = vmatpush1.bf16.xpose.msra.mxu0 %v5732
      %6248 = vmatprep.subr.bf16.mxu0 %v5749
      %6249 = vmatpush1.bf16.xpose.msra.mxu0 %v5748
      %6250 = vmatprep.subr.bf16.mxu0 %v5765
      %6251 = vmatpush1.bf16.xpose.msra.mxu0 %v5764
      %6252 = vmatprep.subr.bf16.mxu0 %v5781
      %6253 = vmatpush1.bf16.xpose.msra.mxu0 %v5780
      %6254 = vmatprep.subr.bf16.mxu0 %v5797
      %6255 = vmatpush1.bf16.xpose.msra.mxu0 %v5796
      %6256 = vmatprep.subr.bf16.mxu0 %v5813
      %6257 = vmatpush1.bf16.xpose.msra.mxu0 %v5812
      %6258 = vmatprep.subr.bf16.mxu0 %v5829
      %6259 = vmatpush1.bf16.xpose.msra.mxu0 %v5828
      %6260 = vmatprep.subr.bf16.mxu0 %v5845
      %6261 = vmatpush1.bf16.xpose.msra.mxu0 %v5844
      %6262 = vmatprep.subr.bf16.mxu0 %v5861
      %6263 = vmatpush1.bf16.xpose.msra.mxu0 %v5860
      %6264 = vmatprep.subr.bf16.mxu0 %v5877
      %6265 = vmatpush1.bf16.xpose.msra.mxu0 %v5876
      %6266 = vmatprep.mubr.bf16.mxu0 %v5957
      %6267 = vmatmul.mubr.bf16.gmra.mrb[0].mxu0 %v5956
      %v6268 = vpop.f32.mrb[0].mxu0
      %v6269 = vadd.f32 %v6226, %v6268
      %v6270 = vpop.f32.mrb[0].mxu0
      %v6271 = vadd.f32 %v6228, %v6270
      %v6272 = vpop.f32.mrb[0].mxu0
      %v6273 = vadd.f32 %v6230, %v6272
      %v6274 = vpop.f32.mrb[0].mxu0
      %v6275 = vadd.f32 %v6232, %v6274
      %6276 = vdwg.mxu0
      %6277 = vmatprep.subr.bf16.mxu0 %v5639
      %6278 = vmatpush1.bf16.xpose.msra.mxu0 %v5638
      %6279 = vmatprep.subr.bf16.mxu0 %v5655
      %6280 = vmatpush1.bf16.xpose.msra.mxu0 %v5654
      %6281 = vmatprep.subr.bf16.mxu0 %v5671
      %6282 = vmatpush1.bf16.xpose.msra.mxu0 %v5670
      %6283 = vmatprep.subr.bf16.mxu0 %v5687
      %6284 = vmatpush1.bf16.xpose.msra.mxu0 %v5686
      %6285 = vmatprep.subr.bf16.mxu0 %v5703
      %6286 = vmatpush1.bf16.xpose.msra.mxu0 %v5702
      %6287 = vmatprep.subr.bf16.mxu0 %v5719
      %6288 = vmatpush1.bf16.xpose.msra.mxu0 %v5718
      %6289 = vmatprep.subr.bf16.mxu0 %v5735
      %6290 = vmatpush1.bf16.xpose.msra.mxu0 %v5734
      %6291 = vmatprep.subr.bf16.mxu0 %v5751
      %6292 = vmatpush1.bf16.xpose.msra.mxu0 %v5750
      %6293 = vmatprep.subr.bf16.mxu0 %v5767
      %6294 = vmatpush1.bf16.xpose.msra.mxu0 %v5766
      %6295 = vmatprep.subr.bf16.mxu0 %v5783
      %6296 = vmatpush1.bf16.xpose.msra.mxu0 %v5782
      %6297 = vmatprep.subr.bf16.mxu0 %v5799
      %6298 = vmatpush1.bf16.xpose.msra.mxu0 %v5798
      %6299 = vmatprep.subr.bf16.mxu0 %v5815
      %6300 = vmatpush1.bf16.xpose.msra.mxu0 %v5814
      %6301 = vmatprep.subr.bf16.mxu0 %v5831
      %6302 = vmatpush1.bf16.xpose.msra.mxu0 %v5830
      %6303 = vmatprep.subr.bf16.mxu0 %v5847
      %6304 = vmatpush1.bf16.xpose.msra.mxu0 %v5846
      %6305 = vmatprep.subr.bf16.mxu0 %v5863
      %6306 = vmatpush1.bf16.xpose.msra.mxu0 %v5862
      %6307 = vmatprep.subr.bf16.mxu0 %v5879
      %6308 = vmatpush1.bf16.xpose.msra.mxu0 %v5878
      %6309 = vmatprep.mubr.bf16.mxu0 %v5959
      %6310 = vmatmul.mubr.bf16.gmra.mrb[0].mxu0 %v5958
      %v6311 = vpop.f32.mrb[0].mxu0
      %v6312 = vadd.f32 %v6269, %v6311
      %v6313 = vpop.f32.mrb[0].mxu0
      %v6314 = vadd.f32 %v6271, %v6313
      %v6315 = vpop.f32.mrb[0].mxu0
      %v6316 = vadd.f32 %v6273, %v6315
      %v6317 = vpop.f32.mrb[0].mxu0
      %v6318 = vadd.f32 %v6275, %v6317
      %6319 = vdwg.mxu0
      %v6320 = vrcp.pop %v6316
      %v6321 = vrcp.pop %v6318
      %v6322 = vlaneseq
      %v6323 = vshrl.u32 %v6322, 7
      %v6324 = vsub.s32 0, %v6323
      %v6325 = vrot.slane %v6320, %v6324
      %v6326 = vlaneseq
      %v6327 = vshrl.u32 %v6326, 7
      %v6328 = vsub.s32 0, %v6327
      %v6329 = vrot.slane %v6321, %v6328
      %v6330 = vmul.f32 %v6312, %v6325
      %v6331 = vmul.f32 %v6314, %v6329
      %6332 = vst [vmem:[%s237] sm:$0xff] %v6330
      %6333 = vst [vmem:[%s237 + $0x8] sm:$0xff] %v6331
      %p6334 = scmp.lt.s32.totalorder %s15, 7
      %s6335 = scalar_select %p6334, %s15, 7
      %s6336 = smul.addr %s6335, 2
      %s6337 = smul.addr %s6336, 8
      %s6338 = scalar_lea.vmem %s4, %s6337
      // Predicated region
      $region37: #{kpa_forward.1} parent=35 // pred_check
        %p6339 = pneg %p132
      $region38: #{kpa_forward.1} parent=35 // pred_check_branch
        %6341 = sbr.rel (%p6339) target = $region40
      $region39: #{kpa_forward.1} parent=35 // pred_region
        _
      $region40: #{kpa_forward.1} parent=35 // pred_fallthru
        _
    $region36: #{kpa_forward.1} parent=5 // pred_fallthru
      _
    %p6342 = scmp.le.s32.totalorder 2, %s10
    // Predicated region
    $region41: #{kpa_forward.1} parent=5 // pred_check
      %p6343 = pneg %p6342
    $region42: #{kpa_forward.1} parent=5 // pred_check_branch
      %6345 = sbr.rel (%p6343) target = $region44
    $region43: #{kpa_forward.1} parent=5 // pred_region
      %s6346 = ssub.s32 %s10, 2
      // Predicated region
      $region45: #{kpa_forward.1} parent=43 // pred_check
        %p6347 = pneg %p138
      $region46: #{kpa_forward.1} parent=43 // pred_check_branch
        %6349 = sbr.rel (%p6347) target = $region48
      $region47: #{kpa_forward.1} parent=43 // pred_region
        %p6350 = scmp.lt.s32.totalorder %s16, 7
        %s6351 = scalar_select %p6350, %s16, 7
        %s6352 = smul.addr %s6351, 2
        %s6353 = smul.addr %s6352, 8
        %s6354 = scalar_lea.vmem %s4, %s6353
      $region48: #{kpa_forward.1} parent=43 // pred_fallthru
        _
    $region44: #{kpa_forward.1} parent=5 // pred_fallthru
      _
  $region6: #{kpa_forward.1} parent=0 // loop_footer
    %s14 = sadd.s32 1, %s10
  $region7: #{kpa_forward.1} parent=0 // loop_footer_branch
    %9 = sbr.rel target = $region3
  $region8: #{kpa_forward.1} parent=0 // loop_exit
    _

</llo_original>
